<compile_context>
chip_gen: v7x
topology: tpu7x:2x2x1
jax: 0.10.0
libtpu: 0.0.40
codegen_flags: <defaults>
</compile_context>

<pallas_src>
import functools

import jax
import jax.numpy as jnp
from jax.experimental import pallas as pl
from jax.experimental.pallas import tpu as pltpu


# ---------------------------------------------------------------------------
# Kernel
# ---------------------------------------------------------------------------
def _enc_dec_attn_kernel(dec_ref, enc_ref,
                         wq_ref, bq_ref,
                         wkv_ref, bkv_ref,
                         gamma_ref, beta_ref,
                         out_ref,
                         *, num_head, head_dim, block_batch, seq, features,
                         eps, matmul_dtype, exact_softmax_div):
    """One grid step == one block of `block_batch` batch elements."""
    rows = block_batch * seq
    dec = dec_ref[...].reshape(rows, features)            # (R, D) f32
    enc = enc_ref[...].reshape(rows, features)

    dec_m = dec.astype(matmul_dtype)
    enc_m = enc.astype(matmul_dtype)

    # Fused projections: (R, D) x (D, D) for Q and (R, D) x (D, 2D) for K|V,
    # f32 accumulation on the MXU, biases added in f32.
    q = jnp.dot(dec_m, wq_ref[...],
                preferred_element_type=jnp.float32) + bq_ref[...]
    kv = jnp.dot(enc_m, wkv_ref[...],
                 preferred_element_type=jnp.float32) + bkv_ref[...]

    # Fold the 1/sqrt(head_dim) softmax scale into Q once (O(rows*D)).
    q = q * (float(head_dim) ** -0.5)

    q3 = q.reshape(block_batch, seq, features).astype(matmul_dtype)
    kv3 = kv.reshape(block_batch, seq, 2 * features).astype(matmul_dtype)

    # Per-head attention, batched over the TB batch elements of this block.
    # Head outputs stay in registers and are joined with ONE concatenate: no
    # VMEM scratch, no per-head masked partial stores.
    head_outs = []
    for h in range(num_head):
        lo = h * head_dim
        qh = q3[:, :, lo:lo + head_dim]                               # (TB,S,dm)
        kh = kv3[:, :, lo:lo + head_dim]                              # (TB,S,dm)
        vh = kv3[:, :, features + lo:features + lo + head_dim]        # (TB,S,dm)

        s = jnp.einsum("bqd,bkd->bqk", qh, kh,
                       preferred_element_type=jnp.float32)            # (TB,S,S)
        # Numerically-stable softmax over the last axis (matches F.softmax);
        # all softmax math stays f32 (v5e has no bf16 VPU/EUP).
        s = s - jnp.max(s, axis=-1, keepdims=True)
        p = jnp.exp(s)
        denom = jnp.sum(p, axis=-1, keepdims=True)
        if exact_softmax_div:
            p = p / denom                                  # exact (f32 path)
        else:
            p = p * pl.reciprocal(denom, approx=True)      # EUP slot (bf16 path)
        av = jnp.einsum("bqk,bkd->bqd", p.astype(matmul_dtype), vh,
                        preferred_element_type=jnp.float32)           # (TB,S,dm)
        head_outs.append(av)

    attn = jnp.concatenate(head_outs, axis=-1).reshape(rows, features)

    # Residual + LayerNorm over the feature dim (f32); reuse centered values.
    res = attn + dec
    mean = jnp.mean(res, axis=-1, keepdims=True)
    centered = res - mean
    var = jnp.mean(centered * centered, axis=-1, keepdims=True)
    out = centered * jax.lax.rsqrt(var + eps)
    out = out * gamma_ref[...] + beta_ref[...]

    # Single full-width write of the block.
    out_ref[...] = out.reshape(block_batch, seq, features).astype(out_ref.dtype)


# ---------------------------------------------------------------------------
# Hardware-aware sizing helpers
# ---------------------------------------------------------------------------
def _vmem_budget_bytes():
    """Usable VMEM per TensorCore, minus headroom for Mosaic internal scratch."""
    cap = None
    try:
        cap = int(pltpu.get_tpu_info().vmem_capacity_bytes)
    except Exception:
        cap = None
    if not cap or cap <= 0:
        cap = 64 << 20                      # conservative: v7x per-core VMEM
    return max(16 << 20, cap - (8 << 20))   # leave headroom for compiler scratch


def _tensorcores_per_device():
    """Multi-TC ('megacore') parts want >=2 parallel grid steps; single-TC don't."""
    try:
        kind = jax.devices()[0].device_kind.lower()
    except Exception:
        return 1
    if "lite" in kind or "v5e" in kind or "v6e" in kind:
        return 1                            # v5e / v6e: one TensorCore per chip
    for marker in ("v4", "v5p", "v7", "7x"):
        if marker in kind:
            return 2                        # megacore / dual-TC parts
    return 1


def _estimate_vmem_bytes(tb, seq, features, num_head, mm_itemsize,
                         single_buffer_weights=True):
    """Per-grid-step VMEM footprint, incl. score intermediates & bf16 copies."""
    rows = tb * seq
    act = rows * features * 4                      # one f32 activation block
    pipelined = 3 * 2 * act                        # dec / enc / out, double-buffered
    wbuf = 1 if single_buffer_weights else 2
    weights = wbuf * ((features * features + features * 2 * features) * mm_itemsize
                      + 5 * features * 4)          # biases + LN gamma/beta (f32)
    scores = 2 * 2 * tb * seq * seq * 4            # s & p (f32), ~2 heads live
    interm = (3 * act                              # q + kv in f32
              + 3 * rows * features * mm_itemsize  # q3 / kv3 matmul-dtype copies
              + 4 * act                            # concat result, residual, LN temps
              + scores)
    return pipelined + weights + interm


def _choose_block_batch(batch, seq, features, num_head, mm_itemsize,
                        vmem_budget, multi_tc):
    """How many batch elements to fuse per grid step (MXU-sized row blocks)."""
    target_rows = 512 if vmem_budget >= (96 << 20) else 256
    divisors = [d for d in range(1, batch + 1) if batch % d == 0]

    def fits(d):
        return (d * seq <= max(target_rows, seq)
                and _estimate_vmem_bytes(d, seq, features, num_head,
                                         mm_itemsize) <= 0.8 * vmem_budget)

    cands = [d for d in divisors if fits(d)]
    tb = max(cands) if cands else 1
    # Only multi-TensorCore parts (v7x / megacore) benefit from >= 2 grid
    # steps; on single-TC v5e/v6e the grid is a serial loop, so keep tb large.
    if multi_tc and batch // tb < 2:
        cands2 = [d for d in divisors if batch // d >= 2 and fits(d)]
        if cands2:
            tb = max(cands2)
    return tb


# ---------------------------------------------------------------------------
# Wrapper
# ---------------------------------------------------------------------------
def encoder_decoder_attention(encoder_output, decoder_input, params, *,
                              num_head, matmul_dtype=jnp.bfloat16,
                              block_batch=None):
    """encoder_output, decoder_input: (B, S, D) float32."""
    B, S, D = decoder_input.shape
    assert encoder_output.shape == (B, S, D)
    assert D % num_head == 0
    head_dim = D // num_head               # == PyTorch's self.d_model

    wq_t, bq, wk_t, bk, wv_t, bv, gamma, beta = params

    # Fuse K|V projection weights into one (D, 2D) matmul; cast the big weights
    # to the matmul dtype once, outside the kernel (halves weight DMA traffic).
    wq_m = wq_t.astype(matmul_dtype)
    wkv_m = jnp.concatenate([wk_t, wv_t], axis=1).astype(matmul_dtype)
    bkv = jnp.concatenate([bk, bv], axis=1)

    mm_itemsize = jnp.dtype(matmul_dtype).itemsize
    budget = _vmem_budget_bytes()
    multi_tc = _tensorcores_per_device() >= 2
    tb = block_batch if block_batch is not None else _choose_block_batch(
        B, S, D, num_head, mm_itemsize, budget, multi_tc)
    assert B % tb == 0

    est = _estimate_vmem_bytes(tb, S, D, num_head, mm_itemsize)
    vmem_limit = int(min(budget, max(32 << 20, 2 * est)))

    kernel = functools.partial(
        _enc_dec_attn_kernel,
        num_head=num_head, head_dim=head_dim, block_batch=tb, seq=S,
        features=D, eps=1e-5, matmul_dtype=matmul_dtype,
        exact_softmax_div=bool(jnp.dtype(matmul_dtype) == jnp.dtype(jnp.float32)))

    def _build(single_buffer_weights):
        seq_spec = pl.BlockSpec((tb, S, D), lambda b: (b, 0, 0))
        if single_buffer_weights:
            # Constant-index blocks are fetched once; single-buffer them so
            # they do not pay the default 2x VMEM pipeline residency.
            def const_spec(shape):
                return pl.BlockSpec(shape, lambda b: (0, 0),
                                    pipeline_mode=pl.Buffered(1))
        else:
            def const_spec(shape):
                return pl.BlockSpec(shape, lambda b: (0, 0))

        return pl.pallas_call(
            kernel,
            out_shape=jax.ShapeDtypeStruct((B, S, D), decoder_input.dtype),
            grid_spec=pltpu.PrefetchScalarGridSpec(
                num_scalar_prefetch=0,
                grid=(B // tb,),
                in_specs=[seq_spec, seq_spec,
                          const_spec((D, D)), const_spec((1, D)),
                          const_spec((D, 2 * D)), const_spec((1, 2 * D)),
                          const_spec((1, D)), const_spec((1, D))],
                out_specs=seq_spec),
            compiler_params=pltpu.CompilerParams(
                dimension_semantics=("parallel",),
                vmem_limit_bytes=vmem_limit),
        )

    args = (decoder_input, encoder_output, wq_m, bq, wkv_m, bkv, gamma, beta)
    try:
        return _build(True)(*args)
    except Exception:
        # This Pallas build rejects 1-deep pipelining on constant blocks;
        # fall back to the default 2-deep pipeline (extra weight VMEM only).
        return _build(False)(*args)


# ---------------------------------------------------------------------------
# Params / reference / test harness
# ---------------------------------------------------------------------------
def init_params(key, in_channels):
    """Deterministic parameter init (shapes match the PyTorch module)."""
    D = in_channels
    ks = jax.random.split(key, 6)
    scale = 1.0 / jnp.sqrt(jnp.float32(D))
    # nn.Linear weight is (out, in); we store the transpose (in, out).
    wq_t = jax.random.uniform(ks[0], (D, D), jnp.float32, -scale, scale)
    wk_t = jax.random.uniform(ks[1], (D, D), jnp.float32, -scale, scale)
    wv_t = jax.random.uniform(ks[2], (D, D), jnp.float32, -scale, scale)
    bq = jax.random.uniform(ks[3], (1, D), jnp.float32, -scale, scale)
    bk = jax.random.uniform(ks[4], (1, D), jnp.float32, -scale, scale)
    bv = jax.random.uniform(ks[5], (1, D), jnp.float32, -scale, scale)
    gamma = jnp.ones((1, D), jnp.float32)   # LayerNorm weight
    beta = jnp.zeros((1, D), jnp.float32)   # LayerNorm bias
    return (wq_t, bq, wk_t, bk, wv_t, bv, gamma, beta)


def reference(encoder_output, decoder_input, params, *, num_head):
    """Pure-JAX reference mirroring the PyTorch forward (sanity check)."""
    wq_t, bq, wk_t, bk, wv_t, bv, gamma, beta = params
    B, S, D = decoder_input.shape
    dm = D // num_head
    Q = decoder_input @ wq_t + bq[0]
    K = encoder_output @ wk_t + bk[0]
    V = encoder_output @ wv_t + bv[0]
    Q = Q.reshape(B, S, num_head, dm).transpose(0, 2, 1, 3)
    K = K.reshape(B, S, num_head, dm).transpose(0, 2, 1, 3)
    V = V.reshape(B, S, num_head, dm).transpose(0, 2, 1, 3)
    scores = jnp.einsum("bhqd,bhkd->bhqk", Q, K) / jnp.sqrt(jnp.float32(dm))
    p = jax.nn.softmax(scores, axis=-1)
    av = jnp.einsum("bhqk,bhkd->bhqd", p, V)
    attn = av.transpose(0, 2, 1, 3).reshape(B, S, D)
    res = attn + decoder_input
    mean = jnp.mean(res, axis=-1, keepdims=True)
    var = jnp.mean((res - mean) ** 2, axis=-1, keepdims=True)
    return (res - mean) / jnp.sqrt(var + 1e-5) * gamma[0] + beta[0]


if __name__ == "__main__":
    B, S, D = 2, 8, 32
    num_head = 4

    key = jax.random.PRNGKey(0)
    k_enc, k_dec, k_params = jax.random.split(key, 3)
    encoder_output = jax.random.normal(k_enc, (B, S, D), jnp.float32)
    decoder_input = jax.random.normal(k_dec, (B, S, D), jnp.float32)
    params = init_params(k_params, D)

    ref = reference(encoder_output, decoder_input, params, num_head=num_head)

    # f32 matmul path (exact softmax divide): tight check vs the reference.
    out_f32 = encoder_decoder_attention(
        encoder_output, decoder_input, params,
        num_head=num_head, matmul_dtype=jnp.float32)
    out_f32 = jax.block_until_ready(out_f32)
    assert jnp.allclose(out_f32, ref, atol=5e-3, rtol=5e-3), "f32 kernel mismatch"

    # bf16 matmul path (default fast path on v6e/v7x): looser tolerance,
    # f32 accumulation + f32 softmax/LayerNorm bound the error.
    out_bf16 = encoder_decoder_attention(
        encoder_output, decoder_input, params, num_head=num_head)
    out_bf16 = jax.block_until_ready(out_bf16)
    assert jnp.allclose(out_bf16, ref, atol=3e-2, rtol=3e-2), "bf16 kernel mismatch"

    print("KERNEL_OK")
</pallas_src>

<mosaic_0001>
module attributes {stable_mosaic.version = 11 : i64} {
  func.func @_enc_dec_attn_kernel(%arg0: i32, %arg1: memref<2x8x32xf32, #tpu.memory_space<vmem>>, %arg2: memref<2x8x32xf32, #tpu.memory_space<vmem>>, %arg3: memref<32x32xf32, #tpu.memory_space<vmem>>, %arg4: memref<1x32xf32, #tpu.memory_space<vmem>>, %arg5: memref<32x64xf32, #tpu.memory_space<vmem>>, %arg6: memref<1x64xf32, #tpu.memory_space<vmem>>, %arg7: memref<1x32xf32, #tpu.memory_space<vmem>>, %arg8: memref<1x32xf32, #tpu.memory_space<vmem>>, %arg9: memref<2x8x32xf32, #tpu.memory_space<vmem>>) attributes {dimension_semantics = [#tpu.dimension_semantics<parallel>], iteration_bounds = array<i64: 1>, scalar_prefetch = 0 : i64, scratch_operands = 0 : i64, tpu.core_type = #tpu.core_type<tc>, window_params = [{transform_indices = @transform_0, window_bounds = array<i64: 2, 8, 32>}, {transform_indices = @transform_1, window_bounds = array<i64: 2, 8, 32>}, {pipeline_mode = #tpu.pipeline_mode<synchronous>, transform_indices = @transform_2, window_bounds = array<i64: 32, 32>}, {pipeline_mode = #tpu.pipeline_mode<synchronous>, transform_indices = @transform_3, window_bounds = array<i64: 1, 32>}, {pipeline_mode = #tpu.pipeline_mode<synchronous>, transform_indices = @transform_4, window_bounds = array<i64: 32, 64>}, {pipeline_mode = #tpu.pipeline_mode<synchronous>, transform_indices = @transform_5, window_bounds = array<i64: 1, 64>}, {pipeline_mode = #tpu.pipeline_mode<synchronous>, transform_indices = @transform_6, window_bounds = array<i64: 1, 32>}, {pipeline_mode = #tpu.pipeline_mode<synchronous>, transform_indices = @transform_7, window_bounds = array<i64: 1, 32>}, {transform_indices = @transform_8, window_bounds = array<i64: 2, 8, 32>}]} {
    %c0 = arith.constant 0 : index
    %c0_0 = arith.constant 0 : index
    %c0_1 = arith.constant 0 : index
    %0 = vector.load %arg1[%c0, %c0_0, %c0_1] : memref<2x8x32xf32, #tpu.memory_space<vmem>>, vector<2x8x32xf32>
    %1 = vector.shape_cast %0 : vector<2x8x32xf32> to vector<16x32xf32>
    %c0_2 = arith.constant 0 : index
    %c0_3 = arith.constant 0 : index
    %c0_4 = arith.constant 0 : index
    %2 = vector.load %arg2[%c0_2, %c0_3, %c0_4] : memref<2x8x32xf32, #tpu.memory_space<vmem>>, vector<2x8x32xf32>
    %3 = vector.shape_cast %2 : vector<2x8x32xf32> to vector<16x32xf32>
    %c0_5 = arith.constant 0 : index
    %c0_6 = arith.constant 0 : index
    %4 = vector.load %arg3[%c0_5, %c0_6] : memref<32x32xf32, #tpu.memory_space<vmem>>, vector<32x32xf32>
    %cst = arith.constant dense<0.000000e+00> : vector<16x32xf32>
    %5 = tpu.matmul %1, %4, %cst {dimension_numbers = #tpu.dot_dimension_numbers<[1], [0], [0], [1], [0, 0, 1, 1], [], []>} : vector<16x32xf32>, vector<32x32xf32>, vector<16x32xf32> -> vector<16x32xf32>
    %c0_7 = arith.constant 0 : index
    %c0_8 = arith.constant 0 : index
    %6 = vector.load %arg4[%c0_7, %c0_8] : memref<1x32xf32, #tpu.memory_space<vmem>>, vector<1x32xf32>
    %7 = vector.broadcast %6 : vector<1x32xf32> to vector<16x32xf32>
    %8 = arith.addf %5, %7 : vector<16x32xf32>
    %c0_9 = arith.constant 0 : index
    %c0_10 = arith.constant 0 : index
    %9 = vector.load %arg5[%c0_9, %c0_10] : memref<32x64xf32, #tpu.memory_space<vmem>>, vector<32x64xf32>
    %cst_11 = arith.constant dense<0.000000e+00> : vector<16x64xf32>
    %10 = tpu.matmul %3, %9, %cst_11 {dimension_numbers = #tpu.dot_dimension_numbers<[1], [0], [0], [1], [0, 0, 1, 1], [], []>} : vector<16x32xf32>, vector<32x64xf32>, vector<16x64xf32> -> vector<16x64xf32>
    %c0_12 = arith.constant 0 : index
    %c0_13 = arith.constant 0 : index
    %11 = vector.load %arg6[%c0_12, %c0_13] : memref<1x64xf32, #tpu.memory_space<vmem>>, vector<1x64xf32>
    %12 = vector.broadcast %11 : vector<1x64xf32> to vector<16x64xf32>
    %13 = arith.addf %10, %12 : vector<16x64xf32>
    %cst_14 = arith.constant 0.353553385 : f32
    %14 = vector.broadcast %cst_14 : f32 to vector<16x32xf32>
    %15 = arith.mulf %8, %14 : vector<16x32xf32>
    %16 = vector.shape_cast %15 : vector<16x32xf32> to vector<2x8x32xf32>
    %17 = vector.shape_cast %13 : vector<16x64xf32> to vector<2x8x64xf32>
    %18 = vector.extract_strided_slice %16 {offsets = [0, 0, 0], sizes = [2, 8, 8], strides = [1, 1, 1]} : vector<2x8x32xf32> to vector<2x8x8xf32>
    %19 = vector.extract_strided_slice %17 {offsets = [0, 0, 0], sizes = [2, 8, 8], strides = [1, 1, 1]} : vector<2x8x64xf32> to vector<2x8x8xf32>
    %20 = vector.extract_strided_slice %17 {offsets = [0, 0, 32], sizes = [2, 8, 8], strides = [1, 1, 1]} : vector<2x8x64xf32> to vector<2x8x8xf32>
    "tpu.trace_start"() <{level = 10 : i32, message = "bqd,bkd->bqk"}> : () -> ()
    %cst_15 = arith.constant dense<0.000000e+00> : vector<2x8x8xf32>
    %21 = tpu.matmul %18, %19, %cst_15 {dimension_numbers = #tpu.dot_dimension_numbers<[2], [2], [1], [1], [0, 0, 0, 1, 1, 1], [0], [0]>} : vector<2x8x8xf32>, vector<2x8x8xf32>, vector<2x8x8xf32> -> vector<2x8x8xf32>
    "tpu.trace_stop"() : () -> ()
    %cst_16 = arith.constant dense<0xFF800000> : vector<2x8xf32>
    %22 = vector.multi_reduction <maximumf>, %21, %cst_16 [2] : vector<2x8x8xf32> to vector<2x8xf32>
    %23 = vector.shape_cast %22 : vector<2x8xf32> to vector<2x8x1xf32>
    %24 = vector.broadcast %23 : vector<2x8x1xf32> to vector<2x8x8xf32>
    %25 = arith.subf %21, %24 : vector<2x8x8xf32>
    %26 = math.exp %25 : vector<2x8x8xf32>
    %cst_17 = arith.constant dense<0.000000e+00> : vector<2x8xf32>
    %27 = vector.multi_reduction <add>, %26, %cst_17 [2] : vector<2x8x8xf32> to vector<2x8xf32>
    %28 = vector.shape_cast %27 : vector<2x8xf32> to vector<2x8x1xf32>
    %29 = vector.broadcast %28 : vector<2x8x1xf32> to vector<2x8x8xf32>
    %30 = arith.divf %26, %29 : vector<2x8x8xf32>
    "tpu.trace_start"() <{level = 10 : i32, message = "bqk,bkd->bqd"}> : () -> ()
    %cst_18 = arith.constant dense<0.000000e+00> : vector<2x8x8xf32>
    %31 = tpu.matmul %30, %20, %cst_18 {dimension_numbers = #tpu.dot_dimension_numbers<[2], [1], [1], [2], [0, 0, 0, 1, 1, 2], [0], [0]>} : vector<2x8x8xf32>, vector<2x8x8xf32>, vector<2x8x8xf32> -> vector<2x8x8xf32>
    "tpu.trace_stop"() : () -> ()
    %32 = vector.extract_strided_slice %16 {offsets = [0, 0, 8], sizes = [2, 8, 8], strides = [1, 1, 1]} : vector<2x8x32xf32> to vector<2x8x8xf32>
    %33 = vector.extract_strided_slice %17 {offsets = [0, 0, 8], sizes = [2, 8, 8], strides = [1, 1, 1]} : vector<2x8x64xf32> to vector<2x8x8xf32>
    %34 = vector.extract_strided_slice %17 {offsets = [0, 0, 40], sizes = [2, 8, 8], strides = [1, 1, 1]} : vector<2x8x64xf32> to vector<2x8x8xf32>
    "tpu.trace_start"() <{level = 10 : i32, message = "bqd,bkd->bqk"}> : () -> ()
    %cst_19 = arith.constant dense<0.000000e+00> : vector<2x8x8xf32>
    %35 = tpu.matmul %32, %33, %cst_19 {dimension_numbers = #tpu.dot_dimension_numbers<[2], [2], [1], [1], [0, 0, 0, 1, 1, 1], [0], [0]>} : vector<2x8x8xf32>, vector<2x8x8xf32>, vector<2x8x8xf32> -> vector<2x8x8xf32>
    "tpu.trace_stop"() : () -> ()
    %cst_20 = arith.constant dense<0xFF800000> : vector<2x8xf32>
    %36 = vector.multi_reduction <maximumf>, %35, %cst_20 [2] : vector<2x8x8xf32> to vector<2x8xf32>
    %37 = vector.shape_cast %36 : vector<2x8xf32> to vector<2x8x1xf32>
    %38 = vector.broadcast %37 : vector<2x8x1xf32> to vector<2x8x8xf32>
    %39 = arith.subf %35, %38 : vector<2x8x8xf32>
    %40 = math.exp %39 : vector<2x8x8xf32>
    %cst_21 = arith.constant dense<0.000000e+00> : vector<2x8xf32>
    %41 = vector.multi_reduction <add>, %40, %cst_21 [2] : vector<2x8x8xf32> to vector<2x8xf32>
    %42 = vector.shape_cast %41 : vector<2x8xf32> to vector<2x8x1xf32>
    %43 = vector.broadcast %42 : vector<2x8x1xf32> to vector<2x8x8xf32>
    %44 = arith.divf %40, %43 : vector<2x8x8xf32>
    "tpu.trace_start"() <{level = 10 : i32, message = "bqk,bkd->bqd"}> : () -> ()
    %cst_22 = arith.constant dense<0.000000e+00> : vector<2x8x8xf32>
    %45 = tpu.matmul %44, %34, %cst_22 {dimension_numbers = #tpu.dot_dimension_numbers<[2], [1], [1], [2], [0, 0, 0, 1, 1, 2], [0], [0]>} : vector<2x8x8xf32>, vector<2x8x8xf32>, vector<2x8x8xf32> -> vector<2x8x8xf32>
    "tpu.trace_stop"() : () -> ()
    %46 = vector.extract_strided_slice %16 {offsets = [0, 0, 16], sizes = [2, 8, 8], strides = [1, 1, 1]} : vector<2x8x32xf32> to vector<2x8x8xf32>
    %47 = vector.extract_strided_slice %17 {offsets = [0, 0, 16], sizes = [2, 8, 8], strides = [1, 1, 1]} : vector<2x8x64xf32> to vector<2x8x8xf32>
    %48 = vector.extract_strided_slice %17 {offsets = [0, 0, 48], sizes = [2, 8, 8], strides = [1, 1, 1]} : vector<2x8x64xf32> to vector<2x8x8xf32>
    "tpu.trace_start"() <{level = 10 : i32, message = "bqd,bkd->bqk"}> : () -> ()
    %cst_23 = arith.constant dense<0.000000e+00> : vector<2x8x8xf32>
    %49 = tpu.matmul %46, %47, %cst_23 {dimension_numbers = #tpu.dot_dimension_numbers<[2], [2], [1], [1], [0, 0, 0, 1, 1, 1], [0], [0]>} : vector<2x8x8xf32>, vector<2x8x8xf32>, vector<2x8x8xf32> -> vector<2x8x8xf32>
    "tpu.trace_stop"() : () -> ()
    %cst_24 = arith.constant dense<0xFF800000> : vector<2x8xf32>
    %50 = vector.multi_reduction <maximumf>, %49, %cst_24 [2] : vector<2x8x8xf32> to vector<2x8xf32>
    %51 = vector.shape_cast %50 : vector<2x8xf32> to vector<2x8x1xf32>
    %52 = vector.broadcast %51 : vector<2x8x1xf32> to vector<2x8x8xf32>
    %53 = arith.subf %49, %52 : vector<2x8x8xf32>
    %54 = math.exp %53 : vector<2x8x8xf32>
    %cst_25 = arith.constant dense<0.000000e+00> : vector<2x8xf32>
    %55 = vector.multi_reduction <add>, %54, %cst_25 [2] : vector<2x8x8xf32> to vector<2x8xf32>
    %56 = vector.shape_cast %55 : vector<2x8xf32> to vector<2x8x1xf32>
    %57 = vector.broadcast %56 : vector<2x8x1xf32> to vector<2x8x8xf32>
    %58 = arith.divf %54, %57 : vector<2x8x8xf32>
    "tpu.trace_start"() <{level = 10 : i32, message = "bqk,bkd->bqd"}> : () -> ()
    %cst_26 = arith.constant dense<0.000000e+00> : vector<2x8x8xf32>
    %59 = tpu.matmul %58, %48, %cst_26 {dimension_numbers = #tpu.dot_dimension_numbers<[2], [1], [1], [2], [0, 0, 0, 1, 1, 2], [0], [0]>} : vector<2x8x8xf32>, vector<2x8x8xf32>, vector<2x8x8xf32> -> vector<2x8x8xf32>
    "tpu.trace_stop"() : () -> ()
    %60 = vector.extract_strided_slice %16 {offsets = [0, 0, 24], sizes = [2, 8, 8], strides = [1, 1, 1]} : vector<2x8x32xf32> to vector<2x8x8xf32>
    %61 = vector.extract_strided_slice %17 {offsets = [0, 0, 24], sizes = [2, 8, 8], strides = [1, 1, 1]} : vector<2x8x64xf32> to vector<2x8x8xf32>
    %62 = vector.extract_strided_slice %17 {offsets = [0, 0, 56], sizes = [2, 8, 8], strides = [1, 1, 1]} : vector<2x8x64xf32> to vector<2x8x8xf32>
    "tpu.trace_start"() <{level = 10 : i32, message = "bqd,bkd->bqk"}> : () -> ()
    %cst_27 = arith.constant dense<0.000000e+00> : vector<2x8x8xf32>
    %63 = tpu.matmul %60, %61, %cst_27 {dimension_numbers = #tpu.dot_dimension_numbers<[2], [2], [1], [1], [0, 0, 0, 1, 1, 1], [0], [0]>} : vector<2x8x8xf32>, vector<2x8x8xf32>, vector<2x8x8xf32> -> vector<2x8x8xf32>
    "tpu.trace_stop"() : () -> ()
    %cst_28 = arith.constant dense<0xFF800000> : vector<2x8xf32>
    %64 = vector.multi_reduction <maximumf>, %63, %cst_28 [2] : vector<2x8x8xf32> to vector<2x8xf32>
    %65 = vector.shape_cast %64 : vector<2x8xf32> to vector<2x8x1xf32>
    %66 = vector.broadcast %65 : vector<2x8x1xf32> to vector<2x8x8xf32>
    %67 = arith.subf %63, %66 : vector<2x8x8xf32>
    %68 = math.exp %67 : vector<2x8x8xf32>
    %cst_29 = arith.constant dense<0.000000e+00> : vector<2x8xf32>
    %69 = vector.multi_reduction <add>, %68, %cst_29 [2] : vector<2x8x8xf32> to vector<2x8xf32>
    %70 = vector.shape_cast %69 : vector<2x8xf32> to vector<2x8x1xf32>
    %71 = vector.broadcast %70 : vector<2x8x1xf32> to vector<2x8x8xf32>
    %72 = arith.divf %68, %71 : vector<2x8x8xf32>
    "tpu.trace_start"() <{level = 10 : i32, message = "bqk,bkd->bqd"}> : () -> ()
    %cst_30 = arith.constant dense<0.000000e+00> : vector<2x8x8xf32>
    %73 = tpu.matmul %72, %62, %cst_30 {dimension_numbers = #tpu.dot_dimension_numbers<[2], [1], [1], [2], [0, 0, 0, 1, 1, 2], [0], [0]>} : vector<2x8x8xf32>, vector<2x8x8xf32>, vector<2x8x8xf32> -> vector<2x8x8xf32>
    "tpu.trace_stop"() : () -> ()
    %74 = tpu.concatenate %31, %45, %59, %73 in 2 : vector<2x8x8xf32>, vector<2x8x8xf32>, vector<2x8x8xf32>, vector<2x8x8xf32> -> vector<2x8x32xf32>
    %75 = vector.shape_cast %74 : vector<2x8x32xf32> to vector<16x32xf32>
    %76 = arith.addf %75, %1 : vector<16x32xf32>
    %cst_31 = arith.constant dense<0.000000e+00> : vector<16xf32>
    %77 = vector.multi_reduction <add>, %76, %cst_31 [1] : vector<16x32xf32> to vector<16xf32>
    %78 = vector.shape_cast %77 : vector<16xf32> to vector<16x1xf32>
    %cst_32 = arith.constant 3.200000e+01 : f32
    %79 = vector.broadcast %cst_32 : f32 to vector<16x1xf32>
    %80 = arith.divf %78, %79 : vector<16x1xf32>
    %81 = vector.broadcast %80 : vector<16x1xf32> to vector<16x32xf32>
    %82 = arith.subf %76, %81 : vector<16x32xf32>
    %83 = arith.mulf %82, %82 : vector<16x32xf32>
    %cst_33 = arith.constant dense<0.000000e+00> : vector<16xf32>
    %84 = vector.multi_reduction <add>, %83, %cst_33 [1] : vector<16x32xf32> to vector<16xf32>
    %85 = vector.shape_cast %84 : vector<16xf32> to vector<16x1xf32>
    %cst_34 = arith.constant 3.200000e+01 : f32
    %86 = vector.broadcast %cst_34 : f32 to vector<16x1xf32>
    %87 = arith.divf %85, %86 : vector<16x1xf32>
    %cst_35 = arith.constant 9.99999974E-6 : f32
    %88 = vector.broadcast %cst_35 : f32 to vector<16x1xf32>
    %89 = arith.addf %87, %88 : vector<16x1xf32>
    %90 = math.rsqrt %89 : vector<16x1xf32>
    %91 = vector.broadcast %90 : vector<16x1xf32> to vector<16x32xf32>
    %92 = arith.mulf %82, %91 : vector<16x32xf32>
    %c0_36 = arith.constant 0 : index
    %c0_37 = arith.constant 0 : index
    %93 = vector.load %arg7[%c0_36, %c0_37] : memref<1x32xf32, #tpu.memory_space<vmem>>, vector<1x32xf32>
    %94 = vector.broadcast %93 : vector<1x32xf32> to vector<16x32xf32>
    %95 = arith.mulf %92, %94 : vector<16x32xf32>
    %c0_38 = arith.constant 0 : index
    %c0_39 = arith.constant 0 : index
    %96 = vector.load %arg8[%c0_38, %c0_39] : memref<1x32xf32, #tpu.memory_space<vmem>>, vector<1x32xf32>
    %97 = vector.broadcast %96 : vector<1x32xf32> to vector<16x32xf32>
    %98 = arith.addf %95, %97 : vector<16x32xf32>
    %99 = vector.shape_cast %98 : vector<16x32xf32> to vector<2x8x32xf32>
    %c0_40 = arith.constant 0 : index
    %c0_41 = arith.constant 0 : index
    %c0_42 = arith.constant 0 : index
    %100 = vector.load %arg9[%c0_40, %c0_41, %c0_42] : memref<2x8x32xf32, #tpu.memory_space<vmem>>, vector<2x8x32xf32>
    tpu.vector_store %arg9[%c0_40, %c0_41, %c0_42], %99 {strides = array<i32>} : memref<2x8x32xf32, #tpu.memory_space<vmem>>, vector<2x8x32xf32>,
    return
  }
  func.func @transform_0(%arg0: i32) -> (i32, i32, i32) {
    %c0_i32 = arith.constant 0 : i32
    %c0_i32_0 = arith.constant 0 : i32
    %c0_i32_1 = arith.constant 0 : i32
    return %arg0, %c0_i32, %c0_i32_0 : i32, i32, i32
  }
  func.func @transform_1(%arg0: i32) -> (i32, i32, i32) {
    %c0_i32 = arith.constant 0 : i32
    %c0_i32_0 = arith.constant 0 : i32
    %c0_i32_1 = arith.constant 0 : i32
    return %arg0, %c0_i32, %c0_i32_0 : i32, i32, i32
  }
  func.func @transform_2(%arg0: i32) -> (i32, i32) {
    %c0_i32 = arith.constant 0 : i32
    %c0_i32_0 = arith.constant 0 : i32
    %c0_i32_1 = arith.constant 0 : i32
    return %c0_i32, %c0_i32_0 : i32, i32
  }
  func.func @transform_3(%arg0: i32) -> (i32, i32) {
    %c0_i32 = arith.constant 0 : i32
    %c0_i32_0 = arith.constant 0 : i32
    %c0_i32_1 = arith.constant 0 : i32
    return %c0_i32, %c0_i32_0 : i32, i32
  }
  func.func @transform_4(%arg0: i32) -> (i32, i32) {
    %c0_i32 = arith.constant 0 : i32
    %c0_i32_0 = arith.constant 0 : i32
    %c0_i32_1 = arith.constant 0 : i32
    return %c0_i32, %c0_i32_0 : i32, i32
  }
  func.func @transform_5(%arg0: i32) -> (i32, i32) {
    %c0_i32 = arith.constant 0 : i32
    %c0_i32_0 = arith.constant 0 : i32
    %c0_i32_1 = arith.constant 0 : i32
    return %c0_i32, %c0_i32_0 : i32, i32
  }
  func.func @transform_6(%arg0: i32) -> (i32, i32) {
    %c0_i32 = arith.constant 0 : i32
    %c0_i32_0 = arith.constant 0 : i32
    %c0_i32_1 = arith.constant 0 : i32
    return %c0_i32, %c0_i32_0 : i32, i32
  }
  func.func @transform_7(%arg0: i32) -> (i32, i32) {
    %c0_i32 = arith.constant 0 : i32
    %c0_i32_0 = arith.constant 0 : i32
    %c0_i32_1 = arith.constant 0 : i32
    return %c0_i32, %c0_i32_0 : i32, i32
  }
  func.func @transform_8(%arg0: i32) -> (i32, i32, i32) {
    %c0_i32 = arith.constant 0 : i32
    %c0_i32_0 = arith.constant 0 : i32
    %c0_i32_1 = arith.constant 0 : i32
    return %arg0, %c0_i32, %c0_i32_0 : i32, i32, i32
  }
}

module attributes {stable_mosaic.version = 11 : i64} {
  func.func @_enc_dec_attn_kernel(%arg0: i32, %arg1: memref<2x8x32xf32, #tpu.memory_space<vmem>>, %arg2: memref<2x8x32xf32, #tpu.memory_space<vmem>>, %arg3: memref<32x32xf32, #tpu.memory_space<vmem>>, %arg4: memref<1x32xf32, #tpu.memory_space<vmem>>, %arg5: memref<32x64xf32, #tpu.memory_space<vmem>>, %arg6: memref<1x64xf32, #tpu.memory_space<vmem>>, %arg7: memref<1x32xf32, #tpu.memory_space<vmem>>, %arg8: memref<1x32xf32, #tpu.memory_space<vmem>>, %arg9: memref<2x8x32xf32, #tpu.memory_space<vmem>>) attributes {dimension_semantics = [#tpu.dimension_semantics<parallel>], iteration_bounds = array<i64: 1>, scalar_prefetch = 0 : i64, scratch_operands = 0 : i64, tpu.core_type = #tpu.core_type<tc>, window_params = [{transform_indices = @transform_0, window_bounds = array<i64: 2, 8, 32>}, {transform_indices = @transform_1, window_bounds = array<i64: 2, 8, 32>}, {pipeline_mode = #tpu.pipeline_mode<synchronous>, transform_indices = @transform_2, window_bounds = array<i64: 32, 32>}, {pipeline_mode = #tpu.pipeline_mode<synchronous>, transform_indices = @transform_3, window_bounds = array<i64: 1, 32>}, {pipeline_mode = #tpu.pipeline_mode<synchronous>, transform_indices = @transform_4, window_bounds = array<i64: 32, 64>}, {pipeline_mode = #tpu.pipeline_mode<synchronous>, transform_indices = @transform_5, window_bounds = array<i64: 1, 64>}, {pipeline_mode = #tpu.pipeline_mode<synchronous>, transform_indices = @transform_6, window_bounds = array<i64: 1, 32>}, {pipeline_mode = #tpu.pipeline_mode<synchronous>, transform_indices = @transform_7, window_bounds = array<i64: 1, 32>}, {transform_indices = @transform_8, window_bounds = array<i64: 2, 8, 32>}]} {
    %c0 = arith.constant 0 : index
    %c0_0 = arith.constant 0 : index
    %c0_1 = arith.constant 0 : index
    %0 = vector.load %arg1[%c0, %c0_0, %c0_1] : memref<2x8x32xf32, #tpu.memory_space<vmem>>, vector<2x8x32xf32>
    %1 = vector.shape_cast %0 : vector<2x8x32xf32> to vector<16x32xf32>
    %c0_2 = arith.constant 0 : index
    %c0_3 = arith.constant 0 : index
    %c0_4 = arith.constant 0 : index
    %2 = vector.load %arg2[%c0_2, %c0_3, %c0_4] : memref<2x8x32xf32, #tpu.memory_space<vmem>>, vector<2x8x32xf32>
    %3 = vector.shape_cast %2 : vector<2x8x32xf32> to vector<16x32xf32>
    %c0_5 = arith.constant 0 : index
    %c0_6 = arith.constant 0 : index
    %4 = vector.load %arg3[%c0_5, %c0_6] : memref<32x32xf32, #tpu.memory_space<vmem>>, vector<32x32xf32>
    %cst = arith.constant dense<0.000000e+00> : vector<16x32xf32>
    %5 = tpu.matmul %1, %4, %cst {dimension_numbers = #tpu.dot_dimension_numbers<[1], [0], [0], [1], [0, 0, 1, 1], [], []>} : vector<16x32xf32>, vector<32x32xf32>, vector<16x32xf32> -> vector<16x32xf32>
    %c0_7 = arith.constant 0 : index
    %c0_8 = arith.constant 0 : index
    %6 = vector.load %arg4[%c0_7, %c0_8] : memref<1x32xf32, #tpu.memory_space<vmem>>, vector<1x32xf32>
    %7 = vector.broadcast %6 : vector<1x32xf32> to vector<16x32xf32>
    %8 = arith.addf %5, %7 : vector<16x32xf32>
    %c0_9 = arith.constant 0 : index
    %c0_10 = arith.constant 0 : index
    %9 = vector.load %arg5[%c0_9, %c0_10] : memref<32x64xf32, #tpu.memory_space<vmem>>, vector<32x64xf32>
    %cst_11 = arith.constant dense<0.000000e+00> : vector<16x64xf32>
    %10 = tpu.matmul %3, %9, %cst_11 {dimension_numbers = #tpu.dot_dimension_numbers<[1], [0], [0], [1], [0, 0, 1, 1], [], []>} : vector<16x32xf32>, vector<32x64xf32>, vector<16x64xf32> -> vector<16x64xf32>
    %c0_12 = arith.constant 0 : index
    %c0_13 = arith.constant 0 : index
    %11 = vector.load %arg6[%c0_12, %c0_13] : memref<1x64xf32, #tpu.memory_space<vmem>>, vector<1x64xf32>
    %12 = vector.broadcast %11 : vector<1x64xf32> to vector<16x64xf32>
    %13 = arith.addf %10, %12 : vector<16x64xf32>
    %cst_14 = arith.constant 0.353553385 : f32
    %14 = vector.broadcast %cst_14 : f32 to vector<16x32xf32>
    %15 = arith.mulf %8, %14 : vector<16x32xf32>
    %16 = vector.shape_cast %15 : vector<16x32xf32> to vector<2x8x32xf32>
    %17 = vector.shape_cast %13 : vector<16x64xf32> to vector<2x8x64xf32>
    %18 = vector.extract_strided_slice %16 {offsets = [0, 0, 0], sizes = [2, 8, 8], strides = [1, 1, 1]} : vector<2x8x32xf32> to vector<2x8x8xf32>
    %19 = vector.extract_strided_slice %17 {offsets = [0, 0, 0], sizes = [2, 8, 8], strides = [1, 1, 1]} : vector<2x8x64xf32> to vector<2x8x8xf32>
    %20 = vector.extract_strided_slice %17 {offsets = [0, 0, 32], sizes = [2, 8, 8], strides = [1, 1, 1]} : vector<2x8x64xf32> to vector<2x8x8xf32>
    "tpu.trace_start"() <{level = 10 : i32, message = "bqd,bkd->bqk"}> : () -> ()
    %cst_15 = arith.constant dense<0.000000e+00> : vector<2x8x8xf32>
    %21 = tpu.matmul %18, %19, %cst_15 {dimension_numbers = #tpu.dot_dimension_numbers<[2], [2], [1], [1], [0, 0, 0, 1, 1, 1], [0], [0]>} : vector<2x8x8xf32>, vector<2x8x8xf32>, vector<2x8x8xf32> -> vector<2x8x8xf32>
    "tpu.trace_stop"() : () -> ()
    %cst_16 = arith.constant dense<0xFF800000> : vector<2x8xf32>
    %22 = vector.multi_reduction <maximumf>, %21, %cst_16 [2] : vector<2x8x8xf32> to vector<2x8xf32>
    %23 = vector.shape_cast %22 : vector<2x8xf32> to vector<2x8x1xf32>
    %24 = vector.broadcast %23 : vector<2x8x1xf32> to vector<2x8x8xf32>
    %25 = arith.subf %21, %24 : vector<2x8x8xf32>
    %26 = math.exp %25 : vector<2x8x8xf32>
    %cst_17 = arith.constant dense<0.000000e+00> : vector<2x8xf32>
    %27 = vector.multi_reduction <add>, %26, %cst_17 [2] : vector<2x8x8xf32> to vector<2x8xf32>
    %28 = vector.shape_cast %27 : vector<2x8xf32> to vector<2x8x1xf32>
    %29 = vector.broadcast %28 : vector<2x8x1xf32> to vector<2x8x8xf32>
    %30 = arith.divf %26, %29 : vector<2x8x8xf32>
    "tpu.trace_start"() <{level = 10 : i32, message = "bqk,bkd->bqd"}> : () -> ()
    %cst_18 = arith.constant dense<0.000000e+00> : vector<2x8x8xf32>
    %31 = tpu.matmul %30, %20, %cst_18 {dimension_numbers = #tpu.dot_dimension_numbers<[2], [1], [1], [2], [0, 0, 0, 1, 1, 2], [0], [0]>} : vector<2x8x8xf32>, vector<2x8x8xf32>, vector<2x8x8xf32> -> vector<2x8x8xf32>
    "tpu.trace_stop"() : () -> ()
    %32 = vector.extract_strided_slice %16 {offsets = [0, 0, 8], sizes = [2, 8, 8], strides = [1, 1, 1]} : vector<2x8x32xf32> to vector<2x8x8xf32>
    %33 = vector.extract_strided_slice %17 {offsets = [0, 0, 8], sizes = [2, 8, 8], strides = [1, 1, 1]} : vector<2x8x64xf32> to vector<2x8x8xf32>
    %34 = vector.extract_strided_slice %17 {offsets = [0, 0, 40], sizes = [2, 8, 8], strides = [1, 1, 1]} : vector<2x8x64xf32> to vector<2x8x8xf32>
    "tpu.trace_start"() <{level = 10 : i32, message = "bqd,bkd->bqk"}> : () -> ()
    %cst_19 = arith.constant dense<0.000000e+00> : vector<2x8x8xf32>
    %35 = tpu.matmul %32, %33, %cst_19 {dimension_numbers = #tpu.dot_dimension_numbers<[2], [2], [1], [1], [0, 0, 0, 1, 1, 1], [0], [0]>} : vector<2x8x8xf32>, vector<2x8x8xf32>, vector<2x8x8xf32> -> vector<2x8x8xf32>
    "tpu.trace_stop"() : () -> ()
    %cst_20 = arith.constant dense<0xFF800000> : vector<2x8xf32>
    %36 = vector.multi_reduction <maximumf>, %35, %cst_20 [2] : vector<2x8x8xf32> to vector<2x8xf32>
    %37 = vector.shape_cast %36 : vector<2x8xf32> to vector<2x8x1xf32>
    %38 = vector.broadcast %37 : vector<2x8x1xf32> to vector<2x8x8xf32>
    %39 = arith.subf %35, %38 : vector<2x8x8xf32>
    %40 = math.exp %39 : vector<2x8x8xf32>
    %cst_21 = arith.constant dense<0.000000e+00> : vector<2x8xf32>
    %41 = vector.multi_reduction <add>, %40, %cst_21 [2] : vector<2x8x8xf32> to vector<2x8xf32>
    %42 = vector.shape_cast %41 : vector<2x8xf32> to vector<2x8x1xf32>
    %43 = vector.broadcast %42 : vector<2x8x1xf32> to vector<2x8x8xf32>
    %44 = arith.divf %40, %43 : vector<2x8x8xf32>
    "tpu.trace_start"() <{level = 10 : i32, message = "bqk,bkd->bqd"}> : () -> ()
    %cst_22 = arith.constant dense<0.000000e+00> : vector<2x8x8xf32>
    %45 = tpu.matmul %44, %34, %cst_22 {dimension_numbers = #tpu.dot_dimension_numbers<[2], [1], [1], [2], [0, 0, 0, 1, 1, 2], [0], [0]>} : vector<2x8x8xf32>, vector<2x8x8xf32>, vector<2x8x8xf32> -> vector<2x8x8xf32>
    "tpu.trace_stop"() : () -> ()
    %46 = vector.extract_strided_slice %16 {offsets = [0, 0, 16], sizes = [2, 8, 8], strides = [1, 1, 1]} : vector<2x8x32xf32> to vector<2x8x8xf32>
    %47 = vector.extract_strided_slice %17 {offsets = [0, 0, 16], sizes = [2, 8, 8], strides = [1, 1, 1]} : vector<2x8x64xf32> to vector<2x8x8xf32>
    %48 = vector.extract_strided_slice %17 {offsets = [0, 0, 48], sizes = [2, 8, 8], strides = [1, 1, 1]} : vector<2x8x64xf32> to vector<2x8x8xf32>
    "tpu.trace_start"() <{level = 10 : i32, message = "bqd,bkd->bqk"}> : () -> ()
    %cst_23 = arith.constant dense<0.000000e+00> : vector<2x8x8xf32>
    %49 = tpu.matmul %46, %47, %cst_23 {dimension_numbers = #tpu.dot_dimension_numbers<[2], [2], [1], [1], [0, 0, 0, 1, 1, 1], [0], [0]>} : vector<2x8x8xf32>, vector<2x8x8xf32>, vector<2x8x8xf32> -> vector<2x8x8xf32>
    "tpu.trace_stop"() : () -> ()
    %cst_24 = arith.constant dense<0xFF800000> : vector<2x8xf32>
    %50 = vector.multi_reduction <maximumf>, %49, %cst_24 [2] : vector<2x8x8xf32> to vector<2x8xf32>
    %51 = vector.shape_cast %50 : vector<2x8xf32> to vector<2x8x1xf32>
    %52 = vector.broadcast %51 : vector<2x8x1xf32> to vector<2x8x8xf32>
    %53 = arith.subf %49, %52 : vector<2x8x8xf32>
    %54 = math.exp %53 : vector<2x8x8xf32>
    %cst_25 = arith.constant dense<0.000000e+00> : vector<2x8xf32>
    %55 = vector.multi_reduction <add>, %54, %cst_25 [2] : vector<2x8x8xf32> to vector<2x8xf32>
    %56 = vector.shape_cast %55 : vector<2x8xf32> to vector<2x8x1xf32>
    %57 = vector.broadcast %56 : vector<2x8x1xf32> to vector<2x8x8xf32>
    %58 = arith.divf %54, %57 : vector<2x8x8xf32>
    "tpu.trace_start"() <{level = 10 : i32, message = "bqk,bkd->bqd"}> : () -> ()
    %cst_26 = arith.constant dense<0.000000e+00> : vector<2x8x8xf32>
    %59 = tpu.matmul %58, %48, %cst_26 {dimension_numbers = #tpu.dot_dimension_numbers<[2], [1], [1], [2], [0, 0, 0, 1, 1, 2], [0], [0]>} : vector<2x8x8xf32>, vector<2x8x8xf32>, vector<2x8x8xf32> -> vector<2x8x8xf32>
    "tpu.trace_stop"() : () -> ()
    %60 = vector.extract_strided_slice %16 {offsets = [0, 0, 24], sizes = [2, 8, 8], strides = [1, 1, 1]} : vector<2x8x32xf32> to vector<2x8x8xf32>
    %61 = vector.extract_strided_slice %17 {offsets = [0, 0, 24], sizes = [2, 8, 8], strides = [1, 1, 1]} : vector<2x8x64xf32> to vector<2x8x8xf32>
    %62 = vector.extract_strided_slice %17 {offsets = [0, 0, 56], sizes = [2, 8, 8], strides = [1, 1, 1]} : vector<2x8x64xf32> to vector<2x8x8xf32>
    "tpu.trace_start"() <{level = 10 : i32, message = "bqd,bkd->bqk"}> : () -> ()
    %cst_27 = arith.constant dense<0.000000e+00> : vector<2x8x8xf32>
    %63 = tpu.matmul %60, %61, %cst_27 {dimension_numbers = #tpu.dot_dimension_numbers<[2], [2], [1], [1], [0, 0, 0, 1, 1, 1], [0], [0]>} : vector<2x8x8xf32>, vector<2x8x8xf32>, vector<2x8x8xf32> -> vector<2x8x8xf32>
    "tpu.trace_stop"() : () -> ()
    %cst_28 = arith.constant dense<0xFF800000> : vector<2x8xf32>
    %64 = vector.multi_reduction <maximumf>, %63, %cst_28 [2] : vector<2x8x8xf32> to vector<2x8xf32>
    %65 = vector.shape_cast %64 : vector<2x8xf32> to vector<2x8x1xf32>
    %66 = vector.broadcast %65 : vector<2x8x1xf32> to vector<2x8x8xf32>
    %67 = arith.subf %63, %66 : vector<2x8x8xf32>
    %68 = math.exp %67 : vector<2x8x8xf32>
    %cst_29 = arith.constant dense<0.000000e+00> : vector<2x8xf32>
    %69 = vector.multi_reduction <add>, %68, %cst_29 [2] : vector<2x8x8xf32> to vector<2x8xf32>
    %70 = vector.shape_cast %69 : vector<2x8xf32> to vector<2x8x1xf32>
    %71 = vector.broadcast %70 : vector<2x8x1xf32> to vector<2x8x8xf32>
    %72 = arith.divf %68, %71 : vector<2x8x8xf32>
    "tpu.trace_start"() <{level = 10 : i32, message = "bqk,bkd->bqd"}> : () -> ()
    %cst_30 = arith.constant dense<0.000000e+00> : vector<2x8x8xf32>
    %73 = tpu.matmul %72, %62, %cst_30 {dimension_numbers = #tpu.dot_dimension_numbers<[2], [1], [1], [2], [0, 0, 0, 1, 1, 2], [0], [0]>} : vector<2x8x8xf32>, vector<2x8x8xf32>, vector<2x8x8xf32> -> vector<2x8x8xf32>
    "tpu.trace_stop"() : () -> ()
    %74 = tpu.concatenate %31, %45, %59, %73 in 2 : vector<2x8x8xf32>, vector<2x8x8xf32>, vector<2x8x8xf32>, vector<2x8x8xf32> -> vector<2x8x32xf32>
    %75 = vector.shape_cast %74 : vector<2x8x32xf32> to vector<16x32xf32>
    %76 = arith.addf %75, %1 : vector<16x32xf32>
    %cst_31 = arith.constant dense<0.000000e+00> : vector<16xf32>
    %77 = vector.multi_reduction <add>, %76, %cst_31 [1] : vector<16x32xf32> to vector<16xf32>
    %78 = vector.shape_cast %77 : vector<16xf32> to vector<16x1xf32>
    %cst_32 = arith.constant 3.200000e+01 : f32
    %79 = vector.broadcast %cst_32 : f32 to vector<16x1xf32>
    %80 = arith.divf %78, %79 : vector<16x1xf32>
    %81 = vector.broadcast %80 : vector<16x1xf32> to vector<16x32xf32>
    %82 = arith.subf %76, %81 : vector<16x32xf32>
    %83 = arith.mulf %82, %82 : vector<16x32xf32>
    %cst_33 = arith.constant dense<0.000000e+00> : vector<16xf32>
    %84 = vector.multi_reduction <add>, %83, %cst_33 [1] : vector<16x32xf32> to vector<16xf32>
    %85 = vector.shape_cast %84 : vector<16xf32> to vector<16x1xf32>
    %cst_34 = arith.constant 3.200000e+01 : f32
    %86 = vector.broadcast %cst_34 : f32 to vector<16x1xf32>
    %87 = arith.divf %85, %86 : vector<16x1xf32>
    %cst_35 = arith.constant 9.99999974E-6 : f32
    %88 = vector.broadcast %cst_35 : f32 to vector<16x1xf32>
    %89 = arith.addf %87, %88 : vector<16x1xf32>
    %90 = math.rsqrt %89 : vector<16x1xf32>
    %91 = vector.broadcast %90 : vector<16x1xf32> to vector<16x32xf32>
    %92 = arith.mulf %82, %91 : vector<16x32xf32>
    %c0_36 = arith.constant 0 : index
    %c0_37 = arith.constant 0 : index
    %93 = vector.load %arg7[%c0_36, %c0_37] : memref<1x32xf32, #tpu.memory_space<vmem>>, vector<1x32xf32>
    %94 = vector.broadcast %93 : vector<1x32xf32> to vector<16x32xf32>
    %95 = arith.mulf %92, %94 : vector<16x32xf32>
    %c0_38 = arith.constant 0 : index
    %c0_39 = arith.constant 0 : index
    %96 = vector.load %arg8[%c0_38, %c0_39] : memref<1x32xf32, #tpu.memory_space<vmem>>, vector<1x32xf32>
    %97 = vector.broadcast %96 : vector<1x32xf32> to vector<16x32xf32>
    %98 = arith.addf %95, %97 : vector<16x32xf32>
    %99 = vector.shape_cast %98 : vector<16x32xf32> to vector<2x8x32xf32>
    %c0_40 = arith.constant 0 : index
    %c0_41 = arith.constant 0 : index
    %c0_42 = arith.constant 0 : index
    %100 = vector.load %arg9[%c0_40, %c0_41, %c0_42] : memref<2x8x32xf32, #tpu.memory_space<vmem>>, vector<2x8x32xf32>
    tpu.vector_store %arg9[%c0_40, %c0_41, %c0_42], %99 {strides = array<i32>} : memref<2x8x32xf32, #tpu.memory_space<vmem>>, vector<2x8x32xf32>,
    return
  }
  func.func @transform_0(%arg0: i32) -> (i32, i32, i32) {
    %c0_i32 = arith.constant 0 : i32
    %c0_i32_0 = arith.constant 0 : i32
    %c0_i32_1 = arith.constant 0 : i32
    return %arg0, %c0_i32, %c0_i32_0 : i32, i32, i32
  }
  func.func @transform_1(%arg0: i32) -> (i32, i32, i32) {
    %c0_i32 = arith.constant 0 : i32
    %c0_i32_0 = arith.constant 0 : i32
    %c0_i32_1 = arith.constant 0 : i32
    return %arg0, %c0_i32, %c0_i32_0 : i32, i32, i32
  }
  func.func @transform_2(%arg0: i32) -> (i32, i32) {
    %c0_i32 = arith.constant 0 : i32
    %c0_i32_0 = arith.constant 0 : i32
    %c0_i32_1 = arith.constant 0 : i32
    return %c0_i32, %c0_i32_0 : i32, i32
  }
  func.func @transform_3(%arg0: i32) -> (i32, i32) {
    %c0_i32 = arith.constant 0 : i32
    %c0_i32_0 = arith.constant 0 : i32
    %c0_i32_1 = arith.constant 0 : i32
    return %c0_i32, %c0_i32_0 : i32, i32
  }
  func.func @transform_4(%arg0: i32) -> (i32, i32) {
    %c0_i32 = arith.constant 0 : i32
    %c0_i32_0 = arith.constant 0 : i32
    %c0_i32_1 = arith.constant 0 : i32
    return %c0_i32, %c0_i32_0 : i32, i32
  }
  func.func @transform_5(%arg0: i32) -> (i32, i32) {
    %c0_i32 = arith.constant 0 : i32
    %c0_i32_0 = arith.constant 0 : i32
    %c0_i32_1 = arith.constant 0 : i32
    return %c0_i32, %c0_i32_0 : i32, i32
  }
  func.func @transform_6(%arg0: i32) -> (i32, i32) {
    %c0_i32 = arith.constant 0 : i32
    %c0_i32_0 = arith.constant 0 : i32
    %c0_i32_1 = arith.constant 0 : i32
    return %c0_i32, %c0_i32_0 : i32, i32
  }
  func.func @transform_7(%arg0: i32) -> (i32, i32) {
    %c0_i32 = arith.constant 0 : i32
    %c0_i32_0 = arith.constant 0 : i32
    %c0_i32_1 = arith.constant 0 : i32
    return %c0_i32, %c0_i32_0 : i32, i32
  }
  func.func @transform_8(%arg0: i32) -> (i32, i32, i32) {
    %c0_i32 = arith.constant 0 : i32
    %c0_i32_0 = arith.constant 0 : i32
    %c0_i32_1 = arith.constant 0 : i32
    return %arg0, %c0_i32, %c0_i32_0 : i32, i32, i32
  }
}

</mosaic_0001>

<llo_original>
// kernel: tpu_custom_call.1
$region0: #{tpu_custom_call.1}
  #allocation0 [shape = 'u32[]', space=smem, size = 0x4, offset = 0x4, fixed_abs, tag = 'smem constant byte address 0x4 - core index']
  #allocation1 [shape = 'u32[144,128]{1,0:T(1,128)}', space=vmem, size = 0x12000, scoped, tag = 'internal scratch']
  %s0 = inlined_call_operand.hbm [shape: f32[2,8,32], index: 0, kind: input, shape index: {}]
  %s1 = inlined_call_operand.hbm [shape: f32[2,8,32], index: 1, kind: input, shape index: {}]
  %s2 = inlined_call_operand.hbm [shape: f32[32,32], index: 2, kind: input, shape index: {}]
  %s3 = inlined_call_operand.vmem [shape: f32[1,32], index: 3, kind: input, shape index: {}]
  %s4 = inlined_call_operand.hbm [shape: f32[32,64], index: 4, kind: input, shape index: {}]
  %s5 = inlined_call_operand.vmem [shape: f32[1,64], index: 5, kind: input, shape index: {}]
  %s6 = inlined_call_operand.vmem [shape: f32[1,32], index: 6, kind: input, shape index: {}]
  %s7 = inlined_call_operand.vmem [shape: f32[1,32], index: 7, kind: input, shape index: {}]
  %s8 = inlined_call_operand.hbm [shape: f32[2,8,32], index: 8, kind: output, shape index: {}]
  %s9 = sld [smem:[#allocation0]]
  $region58: #{tpu_custom_call.1} parent=0
    _
  %s11 = ssub.s32 1, %s9
  %s12 = scalar_select 0, %s11, %s9
  $region1: #{tpu_custom_call.1} parent=0
    #allocation2 [shape = 'u8[8192]{0}', space=vmem, size = 0x2000, scoped, tag = 'input window, operand 0, single buffered']
    #allocation3 [shape = 's32[1]{0}', space=sflag, size = 0x4, scoped, tag = 'scoped memory for tpu_custom_call.1']
    #allocation4 [shape = 's32[1]{0}', space=sflag, size = 0x4, scoped, tag = 'scoped memory for tpu_custom_call.1']
    #allocation5 [shape = 'u8[8192]{0}', space=vmem, size = 0x2000, scoped, tag = 'input window, operand 1, single buffered']
    #allocation6 [shape = 's32[1]{0}', space=sflag, size = 0x4, scoped, tag = 'scoped memory for tpu_custom_call.1']
    #allocation7 [shape = 'u8[16384]{0}', space=vmem, size = 0x4000, scoped, tag = 'input window, operand 2, single buffered']
    #allocation8 [shape = 'u8[16384]{0}', space=vmem, size = 0x4000, scoped, tag = 'input window, operand 4, single buffered']
    #allocation9 [shape = 's32[1]{0}', space=sflag, size = 0x4, scoped, tag = 'scoped memory for tpu_custom_call.1']
    #allocation10 [shape = 'u8[8192]{0}', space=vmem, size = 0x2000, scoped, tag = 'output window, operand 0, single buffered']
    %13 = vsyncpa [#allocation3], 0
    %14 = vsyncpa [#allocation6], 0
    %15 = vsyncpa [#allocation9], 0
    %16 = vsyncpa [#allocation4], 0
    // Predicated region
    $region2: #{tpu_custom_call.1} parent=1 // pred_check
      _
    $region3: #{tpu_custom_call.1} parent=1 // pred_check_branch
      %18 = sbr.rel (0) target = $region5
    $region4: #{tpu_custom_call.1} parent=1 // pred_region
      %s20 = ssub.s32 256, 256
      %21 = vsyncadd [#allocation3], %s20
      %s22 = sshll.u32 [#allocation2], 4
      %s23 = int_to_ptr.vmem [resolvable:$true] %s22
      %28 = dma.hbm_to_vmem [thread:$0]  %s0, 256, %s23, [#allocation3], 128, 128, 8
    $region5: #{tpu_custom_call.1} parent=1 // pred_fallthru
      _
    // Predicated region
    $region6: #{tpu_custom_call.1} parent=1 // pred_check
      _
    $region7: #{tpu_custom_call.1} parent=1 // pred_check_branch
      %30 = sbr.rel (0) target = $region9
    $region8: #{tpu_custom_call.1} parent=1 // pred_region
      %s32 = ssub.s32 256, 256
      %33 = vsyncadd [#allocation6], %s32
      %s34 = sshll.u32 [#allocation5], 4
      %s35 = int_to_ptr.vmem [resolvable:$true] %s34
      %40 = dma.hbm_to_vmem [thread:$0]  %s1, 256, %s35, [#allocation6], 128, 128, 8
    $region9: #{tpu_custom_call.1} parent=1 // pred_fallthru
      _
    // Predicated region
    $region10: #{tpu_custom_call.1} parent=1 // pred_check
      _
    $region11: #{tpu_custom_call.1} parent=1 // pred_check_branch
      %42 = sbr.rel (0) target = $region13
    $region12: #{tpu_custom_call.1} parent=1 // pred_region
      %s44 = ssub.s32 512, 512
      %45 = vsyncadd [#allocation6], %s44
      %s46 = sshll.u32 [#allocation7], 4
      %s47 = int_to_ptr.vmem [resolvable:$true] %s46
      %52 = dma.hbm_to_vmem [thread:$0]  %s2, 512, %s47, [#allocation6], 128, 128, 8
    $region13: #{tpu_custom_call.1} parent=1 // pred_fallthru
      _
    // Predicated region
    $region14: #{tpu_custom_call.1} parent=1 // pred_check
      _
    $region15: #{tpu_custom_call.1} parent=1 // pred_check_branch
      %54 = sbr.rel (0) target = $region17
    $region16: #{tpu_custom_call.1} parent=1 // pred_region
      _
    $region17: #{tpu_custom_call.1} parent=1 // pred_fallthru
      _
    // Predicated region
    $region18: #{tpu_custom_call.1} parent=1 // pred_check
      _
    $region19: #{tpu_custom_call.1} parent=1 // pred_check_branch
      %56 = sbr.rel (0) target = $region21
    $region20: #{tpu_custom_call.1} parent=1 // pred_region
      %s58 = ssub.s32 512, 512
      %59 = vsyncadd [#allocation9], %s58
      %s60 = sshll.u32 [#allocation8], 4
      %s61 = int_to_ptr.vmem [resolvable:$true] %s60
      %66 = dma.hbm_to_vmem [thread:$0]  %s4, 512, %s61, [#allocation9], 128, 128, 8
    $region21: #{tpu_custom_call.1} parent=1 // pred_fallthru
      _
    // Predicated region
    $region22: #{tpu_custom_call.1} parent=1 // pred_check
      _
    $region23: #{tpu_custom_call.1} parent=1 // pred_check_branch
      %68 = sbr.rel (0) target = $region25
    $region24: #{tpu_custom_call.1} parent=1 // pred_region
      _
    $region25: #{tpu_custom_call.1} parent=1 // pred_fallthru
      _
    // Predicated region
    $region26: #{tpu_custom_call.1} parent=1 // pred_check
      _
    $region27: #{tpu_custom_call.1} parent=1 // pred_check_branch
      %70 = sbr.rel (0) target = $region29
    $region28: #{tpu_custom_call.1} parent=1 // pred_region
      _
    $region29: #{tpu_custom_call.1} parent=1 // pred_fallthru
      _
    // Predicated region
    $region30: #{tpu_custom_call.1} parent=1 // pred_check
      _
    $region31: #{tpu_custom_call.1} parent=1 // pred_check_branch
      %72 = sbr.rel (0) target = $region33
    $region32: #{tpu_custom_call.1} parent=1 // pred_region
      _
    $region33: #{tpu_custom_call.1} parent=1 // pred_fallthru
      _
    // Predicated region
    $region34: #{tpu_custom_call.1} parent=1 // pred_check
      _
    $region35: #{tpu_custom_call.1} parent=1 // pred_check_branch
      %74 = sbr.rel (0) target = $region37
    $region36: #{tpu_custom_call.1} parent=1 // pred_region
      %75 = dma.done [#allocation3], 256
    $region37: #{tpu_custom_call.1} parent=1 // pred_fallthru
      _
    // Predicated region
    $region38: #{tpu_custom_call.1} parent=1 // pred_check
      _
    $region39: #{tpu_custom_call.1} parent=1 // pred_check_branch
      %77 = sbr.rel (0) target = $region41
    $region40: #{tpu_custom_call.1} parent=1 // pred_region
      %78 = dma.done [#allocation6], 256
    $region41: #{tpu_custom_call.1} parent=1 // pred_fallthru
      _
    // Predicated region
    $region42: #{tpu_custom_call.1} parent=1 // pred_check
      _
    $region43: #{tpu_custom_call.1} parent=1 // pred_check_branch
      %80 = sbr.rel (0) target = $region45
    $region44: #{tpu_custom_call.1} parent=1 // pred_region
      %81 = dma.done [#allocation6], 512
    $region45: #{tpu_custom_call.1} parent=1 // pred_fallthru
      _
    // Predicated region
    $region46: #{tpu_custom_call.1} parent=1 // pred_check
      _
    $region47: #{tpu_custom_call.1} parent=1 // pred_check_branch
      %83 = sbr.rel (0) target = $region49
    $region48: #{tpu_custom_call.1} parent=1 // pred_region
      %84 = dma.done [#allocation9], 512
    $region49: #{tpu_custom_call.1} parent=1 // pred_fallthru
      _
    %v85 = vld [vmem:[#allocation2] sm:$0xff]
    %v86 = vld [vmem:[#allocation2 + $0x8] sm:$0xff]
    %v87 = vld [vmem:[#allocation5] sm:$0xff]
    %v88 = vld [vmem:[#allocation5 + $0x8] sm:$0xff]
    %v89 = vld [vmem:[#allocation7] sm:$0xff]
    %v90 = vld [vmem:[#allocation7 + $0x8] sm:$0xff]
    %v91 = vld [vmem:[#allocation7 + $0x10] sm:$0xff]
    %v92 = vld [vmem:[#allocation7 + $0x18] sm:$0xff]
    %v93 = vld [vmem:[%s3] sm:$0x1]
    %v95 = vlaneseq
    %v96 = vshrl.u32 %v95, 7
    %v97 = vsub.s32 0, %v96
    %v98 = vrot.slane %v93, %v97
    %vm100 = vcmask 261120
    %v102 = vsel %vm100, %v85, 0
    %v105 = vsel %vm100, %v86, 0
    %107 = vmatprep.subr.mxu0 0.0
    %108 = vmatpush1.msra.mxu0 %v89
    %109 = vmatprep.subr.mxu0 0.0
    %110 = vmatpush1.msra.mxu0 %v90
    %111 = vmatprep.subr.mxu0 0.0
    %112 = vmatpush1.msra.mxu0 %v91
    %113 = vmatprep.subr.mxu0 0.0
    %114 = vmatpush1.msra.mxu0 %v92
    %115 = vmatprep.subr.mxu0 0.0
    %116 = vmatpush1.msra.mxu0 0.0
    %117 = vmatprep.subr.mxu0 0.0
    %118 = vmatpush1.msra.mxu0 0.0
    %119 = vmatprep.subr.mxu0 0.0
    %120 = vmatpush1.msra.mxu0 0.0
    %121 = vmatprep.subr.mxu0 0.0
    %122 = vmatpush1.msra.mxu0 0.0
    %123 = vmatprep.subr.mxu0 0.0
    %124 = vmatpush1.msra.mxu0 0.0
    %125 = vmatprep.subr.mxu0 0.0
    %126 = vmatpush1.msra.mxu0 0.0
    %127 = vmatprep.subr.mxu0 0.0
    %128 = vmatpush1.msra.mxu0 0.0
    %129 = vmatprep.subr.mxu0 0.0
    %130 = vmatpush1.msra.mxu0 0.0
    %131 = vmatprep.subr.mxu0 0.0
    %132 = vmatpush1.msra.mxu0 0.0
    %133 = vmatprep.subr.mxu0 0.0
    %134 = vmatpush1.msra.mxu0 0.0
    %135 = vmatprep.subr.mxu0 0.0
    %136 = vmatpush1.msra.mxu0 0.0
    %137 = vmatprep.subr.mxu0 0.0
    %138 = vmatpush1.msra.mxu0 0.0
    %139 = vmatprep.subr.mxu0 0.0
    %140 = vmatpush1.msra.mxu0 0.0
    %141 = vmatprep.subr.mxu0 0.0
    %142 = vmatpush1.msra.mxu0 0.0
    %143 = vmatprep.subr.mxu0 0.0
    %144 = vmatpush1.msra.mxu0 0.0
    %145 = vmatprep.subr.mxu0 0.0
    %146 = vmatpush1.msra.mxu0 0.0
    %147 = vmatprep.subr.mxu0 0.0
    %148 = vmatpush1.msra.mxu0 0.0
    %149 = vmatprep.subr.mxu0 0.0
    %150 = vmatpush1.msra.mxu0 0.0
    %151 = vmatprep.subr.mxu0 0.0
    %152 = vmatpush1.msra.mxu0 0.0
    %153 = vmatprep.subr.mxu0 0.0
    %154 = vmatpush1.msra.mxu0 0.0
    %155 = vmatprep.subr.mxu0 0.0
    %156 = vmatpush1.msra.mxu0 0.0
    %157 = vmatprep.subr.mxu0 0.0
    %158 = vmatpush1.msra.mxu0 0.0
    %159 = vmatprep.subr.mxu0 0.0
    %160 = vmatpush1.msra.mxu0 0.0
    %161 = vmatprep.subr.mxu0 0.0
    %162 = vmatpush1.msra.mxu0 0.0
    %163 = vmatprep.subr.mxu0 0.0
    %164 = vmatpush1.msra.mxu0 0.0
    %165 = vmatprep.subr.mxu0 0.0
    %166 = vmatpush1.msra.mxu0 0.0
    %167 = vmatprep.subr.mxu0 0.0
    %168 = vmatpush1.msra.mxu0 0.0
    %169 = vmatprep.subr.mxu0 0.0
    %170 = vmatpush1.msra.mxu0 0.0
    %171 = vmatprep.mubr.f32.mxu0 0.0
    %172 = vmatmul.mubr.f32.gmra.mrb[0].mxu0 %v102
    %v173 = vpop.f32.mrb[0].mxu0
    %v174 = vadd.f32 %v98, %v173
    %v175 = vpop.f32.mrb[0].mxu0
    %176 = vmatprep.mubr.f32.mxu0 0.0
    %177 = vmatmul.mubr.f32.gmra.mrb[0].mxu0 %v105
    %v178 = vpop.f32.mrb[0].mxu0
    %v179 = vadd.f32 %v98, %v178
    %v180 = vpop.f32.mrb[0].mxu0
    %181 = vdwg.mxu0
    %v182 = vld [vmem:[#allocation8] sm:$0xff]
    %v183 = vld [vmem:[#allocation8 + $0x8] sm:$0xff]
    %v184 = vld [vmem:[#allocation8 + $0x10] sm:$0xff]
    %v185 = vld [vmem:[#allocation8 + $0x18] sm:$0xff]
    %v186 = vld [vmem:[%s5] sm:$0x1]
    %v188 = vlaneseq
    %v189 = vshrl.u32 %v188, 7
    %v190 = vsub.s32 0, %v189
    %v191 = vrot.slane %v186, %v190
    %v194 = vsel %vm100, %v87, 0
    %v197 = vsel %vm100, %v88, 0
    %199 = vmatprep.subr.mxu0 0.0
    %200 = vmatpush1.msra.mxu0 %v182
    %201 = vmatprep.subr.mxu0 0.0
    %202 = vmatpush1.msra.mxu0 %v183
    %203 = vmatprep.subr.mxu0 0.0
    %204 = vmatpush1.msra.mxu0 %v184
    %205 = vmatprep.subr.mxu0 0.0
    %206 = vmatpush1.msra.mxu0 %v185
    %207 = vmatprep.subr.mxu0 0.0
    %208 = vmatpush1.msra.mxu0 0.0
    %209 = vmatprep.subr.mxu0 0.0
    %210 = vmatpush1.msra.mxu0 0.0
    %211 = vmatprep.subr.mxu0 0.0
    %212 = vmatpush1.msra.mxu0 0.0
    %213 = vmatprep.subr.mxu0 0.0
    %214 = vmatpush1.msra.mxu0 0.0
    %215 = vmatprep.subr.mxu0 0.0
    %216 = vmatpush1.msra.mxu0 0.0
    %217 = vmatprep.subr.mxu0 0.0
    %218 = vmatpush1.msra.mxu0 0.0
    %219 = vmatprep.subr.mxu0 0.0
    %220 = vmatpush1.msra.mxu0 0.0
    %221 = vmatprep.subr.mxu0 0.0
    %222 = vmatpush1.msra.mxu0 0.0
    %223 = vmatprep.subr.mxu0 0.0
    %224 = vmatpush1.msra.mxu0 0.0
    %225 = vmatprep.subr.mxu0 0.0
    %226 = vmatpush1.msra.mxu0 0.0
    %227 = vmatprep.subr.mxu0 0.0
    %228 = vmatpush1.msra.mxu0 0.0
    %229 = vmatprep.subr.mxu0 0.0
    %230 = vmatpush1.msra.mxu0 0.0
    %231 = vmatprep.subr.mxu0 0.0
    %232 = vmatpush1.msra.mxu0 0.0
    %233 = vmatprep.subr.mxu0 0.0
    %234 = vmatpush1.msra.mxu0 0.0
    %235 = vmatprep.subr.mxu0 0.0
    %236 = vmatpush1.msra.mxu0 0.0
    %237 = vmatprep.subr.mxu0 0.0
    %238 = vmatpush1.msra.mxu0 0.0
    %239 = vmatprep.subr.mxu0 0.0
    %240 = vmatpush1.msra.mxu0 0.0
    %241 = vmatprep.subr.mxu0 0.0
    %242 = vmatpush1.msra.mxu0 0.0
    %243 = vmatprep.subr.mxu0 0.0
    %244 = vmatpush1.msra.mxu0 0.0
    %245 = vmatprep.subr.mxu0 0.0
    %246 = vmatpush1.msra.mxu0 0.0
    %247 = vmatprep.subr.mxu0 0.0
    %248 = vmatpush1.msra.mxu0 0.0
    %249 = vmatprep.subr.mxu0 0.0
    %250 = vmatpush1.msra.mxu0 0.0
    %251 = vmatprep.subr.mxu0 0.0
    %252 = vmatpush1.msra.mxu0 0.0
    %253 = vmatprep.subr.mxu0 0.0
    %254 = vmatpush1.msra.mxu0 0.0
    %255 = vmatprep.subr.mxu0 0.0
    %256 = vmatpush1.msra.mxu0 0.0
    %257 = vmatprep.subr.mxu0 0.0
    %258 = vmatpush1.msra.mxu0 0.0
    %259 = vmatprep.subr.mxu0 0.0
    %260 = vmatpush1.msra.mxu0 0.0
    %261 = vmatprep.subr.mxu0 0.0
    %262 = vmatpush1.msra.mxu0 0.0
    %263 = vmatprep.mubr.f32.mxu0 0.0
    %264 = vmatmul.mubr.f32.gmra.mrb[0].mxu0 %v194
    %v265 = vpop.f32.mrb[0].mxu0
    %v266 = vadd.f32 %v191, %v265
    %v267 = vpop.f32.mrb[0].mxu0
    %268 = vmatprep.mubr.f32.mxu0 0.0
    %269 = vmatmul.mubr.f32.gmra.mrb[0].mxu0 %v197
    %v270 = vpop.f32.mrb[0].mxu0
    %v271 = vadd.f32 %v191, %v270
    %v272 = vpop.f32.mrb[0].mxu0
    %273 = vdwg.mxu0
    %v274 = vmul.f32 %v174, 0.35355338
    %v275 = vmul.f32 %v179, 0.35355338
    %vm276 = vcmask 64512
    %v278 = vsel %vm276, %v274, 0
    %v281 = vsel %vm276, %v266, 0
    %283 = vmatprep.subr.mxu0 0.0
    %284 = vmatpush1.xpose.msra.mxu0 %v281
    %285 = vmatprep.subr.mxu0 0.0
    %286 = vmatpush1.xpose.msra.mxu0 0.0
    %287 = vmatprep.subr.mxu0 0.0
    %288 = vmatpush1.xpose.msra.mxu0 0.0
    %289 = vmatprep.subr.mxu0 0.0
    %290 = vmatpush1.xpose.msra.mxu0 0.0
    %291 = vmatprep.subr.mxu0 0.0
    %292 = vmatpush1.xpose.msra.mxu0 0.0
    %293 = vmatprep.subr.mxu0 0.0
    %294 = vmatpush1.xpose.msra.mxu0 0.0
    %295 = vmatprep.subr.mxu0 0.0
    %296 = vmatpush1.xpose.msra.mxu0 0.0
    %297 = vmatprep.subr.mxu0 0.0
    %298 = vmatpush1.xpose.msra.mxu0 0.0
    %299 = vmatprep.subr.mxu0 0.0
    %300 = vmatpush1.xpose.msra.mxu0 0.0
    %301 = vmatprep.subr.mxu0 0.0
    %302 = vmatpush1.xpose.msra.mxu0 0.0
    %303 = vmatprep.subr.mxu0 0.0
    %304 = vmatpush1.xpose.msra.mxu0 0.0
    %305 = vmatprep.subr.mxu0 0.0
    %306 = vmatpush1.xpose.msra.mxu0 0.0
    %307 = vmatprep.subr.mxu0 0.0
    %308 = vmatpush1.xpose.msra.mxu0 0.0
    %309 = vmatprep.subr.mxu0 0.0
    %310 = vmatpush1.xpose.msra.mxu0 0.0
    %311 = vmatprep.subr.mxu0 0.0
    %312 = vmatpush1.xpose.msra.mxu0 0.0
    %313 = vmatprep.subr.mxu0 0.0
    %314 = vmatpush1.xpose.msra.mxu0 0.0
    %315 = vmatprep.subr.mxu0 0.0
    %316 = vmatpush1.xpose.msra.mxu0 0.0
    %317 = vmatprep.subr.mxu0 0.0
    %318 = vmatpush1.xpose.msra.mxu0 0.0
    %319 = vmatprep.subr.mxu0 0.0
    %320 = vmatpush1.xpose.msra.mxu0 0.0
    %321 = vmatprep.subr.mxu0 0.0
    %322 = vmatpush1.xpose.msra.mxu0 0.0
    %323 = vmatprep.subr.mxu0 0.0
    %324 = vmatpush1.xpose.msra.mxu0 0.0
    %325 = vmatprep.subr.mxu0 0.0
    %326 = vmatpush1.xpose.msra.mxu0 0.0
    %327 = vmatprep.subr.mxu0 0.0
    %328 = vmatpush1.xpose.msra.mxu0 0.0
    %329 = vmatprep.subr.mxu0 0.0
    %330 = vmatpush1.xpose.msra.mxu0 0.0
    %331 = vmatprep.subr.mxu0 0.0
    %332 = vmatpush1.xpose.msra.mxu0 0.0
    %333 = vmatprep.subr.mxu0 0.0
    %334 = vmatpush1.xpose.msra.mxu0 0.0
    %335 = vmatprep.subr.mxu0 0.0
    %336 = vmatpush1.xpose.msra.mxu0 0.0
    %337 = vmatprep.subr.mxu0 0.0
    %338 = vmatpush1.xpose.msra.mxu0 0.0
    %339 = vmatprep.subr.mxu0 0.0
    %340 = vmatpush1.xpose.msra.mxu0 0.0
    %341 = vmatprep.subr.mxu0 0.0
    %342 = vmatpush1.xpose.msra.mxu0 0.0
    %343 = vmatprep.subr.mxu0 0.0
    %344 = vmatpush1.xpose.msra.mxu0 0.0
    %345 = vmatprep.subr.mxu0 0.0
    %346 = vmatpush1.xpose.msra.mxu0 0.0
    %347 = vmatprep.mubr.f32.mxu0 0.0
    %348 = vmatmul.mubr.f32.gmra.mrb[0].mxu0 %v278
    %v349 = vpop.f32.mrb[0].mxu0
    %v350 = vadd.f32 0.0, %v349
    %v351 = vpop.f32.mrb[0].mxu0
    %352 = vdwg.mxu0
    %v354 = vsel %vm276, %v275, 0
    %v357 = vsel %vm276, %v271, 0
    %359 = vmatprep.subr.mxu0 0.0
    %360 = vmatpush1.xpose.msra.mxu0 %v357
    %361 = vmatprep.subr.mxu0 0.0
    %362 = vmatpush1.xpose.msra.mxu0 0.0
    %363 = vmatprep.subr.mxu0 0.0
    %364 = vmatpush1.xpose.msra.mxu0 0.0
    %365 = vmatprep.subr.mxu0 0.0
    %366 = vmatpush1.xpose.msra.mxu0 0.0
    %367 = vmatprep.subr.mxu0 0.0
    %368 = vmatpush1.xpose.msra.mxu0 0.0
    %369 = vmatprep.subr.mxu0 0.0
    %370 = vmatpush1.xpose.msra.mxu0 0.0
    %371 = vmatprep.subr.mxu0 0.0
    %372 = vmatpush1.xpose.msra.mxu0 0.0
    %373 = vmatprep.subr.mxu0 0.0
    %374 = vmatpush1.xpose.msra.mxu0 0.0
    %375 = vmatprep.subr.mxu0 0.0
    %376 = vmatpush1.xpose.msra.mxu0 0.0
    %377 = vmatprep.subr.mxu0 0.0
    %378 = vmatpush1.xpose.msra.mxu0 0.0
    %379 = vmatprep.subr.mxu0 0.0
    %380 = vmatpush1.xpose.msra.mxu0 0.0
    %381 = vmatprep.subr.mxu0 0.0
    %382 = vmatpush1.xpose.msra.mxu0 0.0
    %383 = vmatprep.subr.mxu0 0.0
    %384 = vmatpush1.xpose.msra.mxu0 0.0
    %385 = vmatprep.subr.mxu0 0.0
    %386 = vmatpush1.xpose.msra.mxu0 0.0
    %387 = vmatprep.subr.mxu0 0.0
    %388 = vmatpush1.xpose.msra.mxu0 0.0
    %389 = vmatprep.subr.mxu0 0.0
    %390 = vmatpush1.xpose.msra.mxu0 0.0
    %391 = vmatprep.subr.mxu0 0.0
    %392 = vmatpush1.xpose.msra.mxu0 0.0
    %393 = vmatprep.subr.mxu0 0.0
    %394 = vmatpush1.xpose.msra.mxu0 0.0
    %395 = vmatprep.subr.mxu0 0.0
    %396 = vmatpush1.xpose.msra.mxu0 0.0
    %397 = vmatprep.subr.mxu0 0.0
    %398 = vmatpush1.xpose.msra.mxu0 0.0
    %399 = vmatprep.subr.mxu0 0.0
    %400 = vmatpush1.xpose.msra.mxu0 0.0
    %401 = vmatprep.subr.mxu0 0.0
    %402 = vmatpush1.xpose.msra.mxu0 0.0
    %403 = vmatprep.subr.mxu0 0.0
    %404 = vmatpush1.xpose.msra.mxu0 0.0
    %405 = vmatprep.subr.mxu0 0.0
    %406 = vmatpush1.xpose.msra.mxu0 0.0
    %407 = vmatprep.subr.mxu0 0.0
    %408 = vmatpush1.xpose.msra.mxu0 0.0
    %409 = vmatprep.subr.mxu0 0.0
    %410 = vmatpush1.xpose.msra.mxu0 0.0
    %411 = vmatprep.subr.mxu0 0.0
    %412 = vmatpush1.xpose.msra.mxu0 0.0
    %413 = vmatprep.subr.mxu0 0.0
    %414 = vmatpush1.xpose.msra.mxu0 0.0
    %415 = vmatprep.subr.mxu0 0.0
    %416 = vmatpush1.xpose.msra.mxu0 0.0
    %417 = vmatprep.subr.mxu0 0.0
    %418 = vmatpush1.xpose.msra.mxu0 0.0
    %419 = vmatprep.subr.mxu0 0.0
    %420 = vmatpush1.xpose.msra.mxu0 0.0
    %421 = vmatprep.subr.mxu0 0.0
    %422 = vmatpush1.xpose.msra.mxu0 0.0
    %423 = vmatprep.mubr.f32.mxu0 0.0
    %424 = vmatmul.mubr.f32.gmra.mrb[0].mxu0 %v354
    %v425 = vpop.f32.mrb[0].mxu0
    %v426 = vadd.f32 0.0, %v425
    %v427 = vpop.f32.mrb[0].mxu0
    %428 = vdwg.mxu0
    %v429 = vsel %vm276, %v350, -inf
    %430 = vmax.xlane.f32.xlu0 %v429
    %v431 = vpop.xlane.xlu0 %430
    %v432 = vsel %vm276, %v426, -inf
    %433 = vmax.xlane.f32.xlu0 %v432
    %v434 = vpop.xlane.xlu0 %433
    %v435 = vsub.f32 %v350, %v431
    %v436 = vsub.f32 %v426, %v434
    %v437 = vmul.f32 %v435, 1.442695
    %v438 = vpow.pop %v437
    %v439 = vmul.f32 %v436, 1.442695
    %v440 = vpow.pop %v439
    %v441 = vsel %vm276, %v438, 0.0
    %442 = vadd.xlane.f32.xlu0 %v441
    %v443 = vpop.xlane.xlu0 %442
    %v444 = vsel %vm276, %v440, 0.0
    %445 = vadd.xlane.f32.xlu0 %v444
    %v446 = vpop.xlane.xlu0 %445
    %v447 = vrcp.pop %v443
    %v448 = vmul.f32 %v438, %v447
    %v449 = vrcp.pop %v446
    %v450 = vmul.f32 %v440, %v449
    %451 = vrot.lane.b32.xlu0 %v266, 96
    %v452 = vpop.permute.xlu0 %451
    %v455 = vsel %vm276, %v448, 0
    %457 = vmatprep.subr.mxu0 0.0
    %458 = vmatpush1.msra.mxu0 %v452
    %459 = vmatprep.subr.mxu0 0.0
    %460 = vmatpush1.msra.mxu0 0.0
    %461 = vmatprep.subr.mxu0 0.0
    %462 = vmatpush1.msra.mxu0 0.0
    %463 = vmatprep.subr.mxu0 0.0
    %464 = vmatpush1.msra.mxu0 0.0
    %465 = vmatprep.subr.mxu0 0.0
    %466 = vmatpush1.msra.mxu0 0.0
    %467 = vmatprep.subr.mxu0 0.0
    %468 = vmatpush1.msra.mxu0 0.0
    %469 = vmatprep.subr.mxu0 0.0
    %470 = vmatpush1.msra.mxu0 0.0
    %471 = vmatprep.subr.mxu0 0.0
    %472 = vmatpush1.msra.mxu0 0.0
    %473 = vmatprep.subr.mxu0 0.0
    %474 = vmatpush1.msra.mxu0 0.0
    %475 = vmatprep.subr.mxu0 0.0
    %476 = vmatpush1.msra.mxu0 0.0
    %477 = vmatprep.subr.mxu0 0.0
    %478 = vmatpush1.msra.mxu0 0.0
    %479 = vmatprep.subr.mxu0 0.0
    %480 = vmatpush1.msra.mxu0 0.0
    %481 = vmatprep.subr.mxu0 0.0
    %482 = vmatpush1.msra.mxu0 0.0
    %483 = vmatprep.subr.mxu0 0.0
    %484 = vmatpush1.msra.mxu0 0.0
    %485 = vmatprep.subr.mxu0 0.0
    %486 = vmatpush1.msra.mxu0 0.0
    %487 = vmatprep.subr.mxu0 0.0
    %488 = vmatpush1.msra.mxu0 0.0
    %489 = vmatprep.subr.mxu0 0.0
    %490 = vmatpush1.msra.mxu0 0.0
    %491 = vmatprep.subr.mxu0 0.0
    %492 = vmatpush1.msra.mxu0 0.0
    %493 = vmatprep.subr.mxu0 0.0
    %494 = vmatpush1.msra.mxu0 0.0
    %495 = vmatprep.subr.mxu0 0.0
    %496 = vmatpush1.msra.mxu0 0.0
    %497 = vmatprep.subr.mxu0 0.0
    %498 = vmatpush1.msra.mxu0 0.0
    %499 = vmatprep.subr.mxu0 0.0
    %500 = vmatpush1.msra.mxu0 0.0
    %501 = vmatprep.subr.mxu0 0.0
    %502 = vmatpush1.msra.mxu0 0.0
    %503 = vmatprep.subr.mxu0 0.0
    %504 = vmatpush1.msra.mxu0 0.0
    %505 = vmatprep.subr.mxu0 0.0
    %506 = vmatpush1.msra.mxu0 0.0
    %507 = vmatprep.subr.mxu0 0.0
    %508 = vmatpush1.msra.mxu0 0.0
    %509 = vmatprep.subr.mxu0 0.0
    %510 = vmatpush1.msra.mxu0 0.0
    %511 = vmatprep.subr.mxu0 0.0
    %512 = vmatpush1.msra.mxu0 0.0
    %513 = vmatprep.subr.mxu0 0.0
    %514 = vmatpush1.msra.mxu0 0.0
    %515 = vmatprep.subr.mxu0 0.0
    %516 = vmatpush1.msra.mxu0 0.0
    %517 = vmatprep.subr.mxu0 0.0
    %518 = vmatpush1.msra.mxu0 0.0
    %519 = vmatprep.subr.mxu0 0.0
    %520 = vmatpush1.msra.mxu0 0.0
    %521 = vmatprep.mubr.f32.mxu0 0.0
    %522 = vmatmul.mubr.f32.gmra.mrb[0].mxu0 %v455
    %v523 = vpop.f32.mrb[0].mxu0
    %v524 = vadd.f32 0.0, %v523
    %v525 = vpop.f32.mrb[0].mxu0
    %526 = vdwg.mxu0
    %527 = vrot.lane.b32.xlu0 %v271, 96
    %v528 = vpop.permute.xlu0 %527
    %v531 = vsel %vm276, %v450, 0
    %533 = vmatprep.subr.mxu0 0.0
    %534 = vmatpush1.msra.mxu0 %v528
    %535 = vmatprep.subr.mxu0 0.0
    %536 = vmatpush1.msra.mxu0 0.0
    %537 = vmatprep.subr.mxu0 0.0
    %538 = vmatpush1.msra.mxu0 0.0
    %539 = vmatprep.subr.mxu0 0.0
    %540 = vmatpush1.msra.mxu0 0.0
    %541 = vmatprep.subr.mxu0 0.0
    %542 = vmatpush1.msra.mxu0 0.0
    %543 = vmatprep.subr.mxu0 0.0
    %544 = vmatpush1.msra.mxu0 0.0
    %545 = vmatprep.subr.mxu0 0.0
    %546 = vmatpush1.msra.mxu0 0.0
    %547 = vmatprep.subr.mxu0 0.0
    %548 = vmatpush1.msra.mxu0 0.0
    %549 = vmatprep.subr.mxu0 0.0
    %550 = vmatpush1.msra.mxu0 0.0
    %551 = vmatprep.subr.mxu0 0.0
    %552 = vmatpush1.msra.mxu0 0.0
    %553 = vmatprep.subr.mxu0 0.0
    %554 = vmatpush1.msra.mxu0 0.0
    %555 = vmatprep.subr.mxu0 0.0
    %556 = vmatpush1.msra.mxu0 0.0
    %557 = vmatprep.subr.mxu0 0.0
    %558 = vmatpush1.msra.mxu0 0.0
    %559 = vmatprep.subr.mxu0 0.0
    %560 = vmatpush1.msra.mxu0 0.0
    %561 = vmatprep.subr.mxu0 0.0
    %562 = vmatpush1.msra.mxu0 0.0
    %563 = vmatprep.subr.mxu0 0.0
    %564 = vmatpush1.msra.mxu0 0.0
    %565 = vmatprep.subr.mxu0 0.0
    %566 = vmatpush1.msra.mxu0 0.0
    %567 = vmatprep.subr.mxu0 0.0
    %568 = vmatpush1.msra.mxu0 0.0
    %569 = vmatprep.subr.mxu0 0.0
    %570 = vmatpush1.msra.mxu0 0.0
    %571 = vmatprep.subr.mxu0 0.0
    %572 = vmatpush1.msra.mxu0 0.0
    %573 = vmatprep.subr.mxu0 0.0
    %574 = vmatpush1.msra.mxu0 0.0
    %575 = vmatprep.subr.mxu0 0.0
    %576 = vmatpush1.msra.mxu0 0.0
    %577 = vmatprep.subr.mxu0 0.0
    %578 = vmatpush1.msra.mxu0 0.0
    %579 = vmatprep.subr.mxu0 0.0
    %580 = vmatpush1.msra.mxu0 0.0
    %581 = vmatprep.subr.mxu0 0.0
    %582 = vmatpush1.msra.mxu0 0.0
    %583 = vmatprep.subr.mxu0 0.0
    %584 = vmatpush1.msra.mxu0 0.0
    %585 = vmatprep.subr.mxu0 0.0
    %586 = vmatpush1.msra.mxu0 0.0
    %587 = vmatprep.subr.mxu0 0.0
    %588 = vmatpush1.msra.mxu0 0.0
    %589 = vmatprep.subr.mxu0 0.0
    %590 = vmatpush1.msra.mxu0 0.0
    %591 = vmatprep.subr.mxu0 0.0
    %592 = vmatpush1.msra.mxu0 0.0
    %593 = vmatprep.subr.mxu0 0.0
    %594 = vmatpush1.msra.mxu0 0.0
    %595 = vmatprep.subr.mxu0 0.0
    %596 = vmatpush1.msra.mxu0 0.0
    %597 = vmatprep.mubr.f32.mxu0 0.0
    %598 = vmatmul.mubr.f32.gmra.mrb[0].mxu0 %v531
    %v599 = vpop.f32.mrb[0].mxu0
    %v600 = vadd.f32 0.0, %v599
    %v601 = vpop.f32.mrb[0].mxu0
    %602 = vdwg.mxu0
    %603 = vrot.lane.b32.xlu0 %v274, 120
    %v604 = vpop.permute.xlu0 %603
    %605 = vrot.lane.b32.xlu0 %v266, 120
    %v606 = vpop.permute.xlu0 %605
    %v607 = vsel %vm276, %v604, 0
    %v609 = vsel %vm276, %v606, 0
    %611 = vmatprep.subr.mxu0 0.0
    %612 = vmatpush1.xpose.msra.mxu0 %v609
    %613 = vmatprep.subr.mxu0 0.0
    %614 = vmatpush1.xpose.msra.mxu0 0.0
    %615 = vmatprep.subr.mxu0 0.0
    %616 = vmatpush1.xpose.msra.mxu0 0.0
    %617 = vmatprep.subr.mxu0 0.0
    %618 = vmatpush1.xpose.msra.mxu0 0.0
    %619 = vmatprep.subr.mxu0 0.0
    %620 = vmatpush1.xpose.msra.mxu0 0.0
    %621 = vmatprep.subr.mxu0 0.0
    %622 = vmatpush1.xpose.msra.mxu0 0.0
    %623 = vmatprep.subr.mxu0 0.0
    %624 = vmatpush1.xpose.msra.mxu0 0.0
    %625 = vmatprep.subr.mxu0 0.0
    %626 = vmatpush1.xpose.msra.mxu0 0.0
    %627 = vmatprep.subr.mxu0 0.0
    %628 = vmatpush1.xpose.msra.mxu0 0.0
    %629 = vmatprep.subr.mxu0 0.0
    %630 = vmatpush1.xpose.msra.mxu0 0.0
    %631 = vmatprep.subr.mxu0 0.0
    %632 = vmatpush1.xpose.msra.mxu0 0.0
    %633 = vmatprep.subr.mxu0 0.0
    %634 = vmatpush1.xpose.msra.mxu0 0.0
    %635 = vmatprep.subr.mxu0 0.0
    %636 = vmatpush1.xpose.msra.mxu0 0.0
    %637 = vmatprep.subr.mxu0 0.0
    %638 = vmatpush1.xpose.msra.mxu0 0.0
    %639 = vmatprep.subr.mxu0 0.0
    %640 = vmatpush1.xpose.msra.mxu0 0.0
    %641 = vmatprep.subr.mxu0 0.0
    %642 = vmatpush1.xpose.msra.mxu0 0.0
    %643 = vmatprep.subr.mxu0 0.0
    %644 = vmatpush1.xpose.msra.mxu0 0.0
    %645 = vmatprep.subr.mxu0 0.0
    %646 = vmatpush1.xpose.msra.mxu0 0.0
    %647 = vmatprep.subr.mxu0 0.0
    %648 = vmatpush1.xpose.msra.mxu0 0.0
    %649 = vmatprep.subr.mxu0 0.0
    %650 = vmatpush1.xpose.msra.mxu0 0.0
    %651 = vmatprep.subr.mxu0 0.0
    %652 = vmatpush1.xpose.msra.mxu0 0.0
    %653 = vmatprep.subr.mxu0 0.0
    %654 = vmatpush1.xpose.msra.mxu0 0.0
    %655 = vmatprep.subr.mxu0 0.0
    %656 = vmatpush1.xpose.msra.mxu0 0.0
    %657 = vmatprep.subr.mxu0 0.0
    %658 = vmatpush1.xpose.msra.mxu0 0.0
    %659 = vmatprep.subr.mxu0 0.0
    %660 = vmatpush1.xpose.msra.mxu0 0.0
    %661 = vmatprep.subr.mxu0 0.0
    %662 = vmatpush1.xpose.msra.mxu0 0.0
    %663 = vmatprep.subr.mxu0 0.0
    %664 = vmatpush1.xpose.msra.mxu0 0.0
    %665 = vmatprep.subr.mxu0 0.0
    %666 = vmatpush1.xpose.msra.mxu0 0.0
    %667 = vmatprep.subr.mxu0 0.0
    %668 = vmatpush1.xpose.msra.mxu0 0.0
    %669 = vmatprep.subr.mxu0 0.0
    %670 = vmatpush1.xpose.msra.mxu0 0.0
    %671 = vmatprep.subr.mxu0 0.0
    %672 = vmatpush1.xpose.msra.mxu0 0.0
    %673 = vmatprep.subr.mxu0 0.0
    %674 = vmatpush1.xpose.msra.mxu0 0.0
    %675 = vmatprep.mubr.f32.mxu0 0.0
    %676 = vmatmul.mubr.f32.gmra.mrb[0].mxu0 %v607
    %v677 = vpop.f32.mrb[0].mxu0
    %v678 = vadd.f32 0.0, %v677
    %v679 = vpop.f32.mrb[0].mxu0
    %680 = vdwg.mxu0
    %681 = vrot.lane.b32.xlu0 %v275, 120
    %v682 = vpop.permute.xlu0 %681
    %683 = vrot.lane.b32.xlu0 %v271, 120
    %v684 = vpop.permute.xlu0 %683
    %v685 = vsel %vm276, %v682, 0
    %v687 = vsel %vm276, %v684, 0
    %689 = vmatprep.subr.mxu0 0.0
    %690 = vmatpush1.xpose.msra.mxu0 %v687
    %691 = vmatprep.subr.mxu0 0.0
    %692 = vmatpush1.xpose.msra.mxu0 0.0
    %693 = vmatprep.subr.mxu0 0.0
    %694 = vmatpush1.xpose.msra.mxu0 0.0
    %695 = vmatprep.subr.mxu0 0.0
    %696 = vmatpush1.xpose.msra.mxu0 0.0
    %697 = vmatprep.subr.mxu0 0.0
    %698 = vmatpush1.xpose.msra.mxu0 0.0
    %699 = vmatprep.subr.mxu0 0.0
    %700 = vmatpush1.xpose.msra.mxu0 0.0
    %701 = vmatprep.subr.mxu0 0.0
    %702 = vmatpush1.xpose.msra.mxu0 0.0
    %703 = vmatprep.subr.mxu0 0.0
    %704 = vmatpush1.xpose.msra.mxu0 0.0
    %705 = vmatprep.subr.mxu0 0.0
    %706 = vmatpush1.xpose.msra.mxu0 0.0
    %707 = vmatprep.subr.mxu0 0.0
    %708 = vmatpush1.xpose.msra.mxu0 0.0
    %709 = vmatprep.subr.mxu0 0.0
    %710 = vmatpush1.xpose.msra.mxu0 0.0
    %711 = vmatprep.subr.mxu0 0.0
    %712 = vmatpush1.xpose.msra.mxu0 0.0
    %713 = vmatprep.subr.mxu0 0.0
    %714 = vmatpush1.xpose.msra.mxu0 0.0
    %715 = vmatprep.subr.mxu0 0.0
    %716 = vmatpush1.xpose.msra.mxu0 0.0
    %717 = vmatprep.subr.mxu0 0.0
    %718 = vmatpush1.xpose.msra.mxu0 0.0
    %719 = vmatprep.subr.mxu0 0.0
    %720 = vmatpush1.xpose.msra.mxu0 0.0
    %721 = vmatprep.subr.mxu0 0.0
    %722 = vmatpush1.xpose.msra.mxu0 0.0
    %723 = vmatprep.subr.mxu0 0.0
    %724 = vmatpush1.xpose.msra.mxu0 0.0
    %725 = vmatprep.subr.mxu0 0.0
    %726 = vmatpush1.xpose.msra.mxu0 0.0
    %727 = vmatprep.subr.mxu0 0.0
    %728 = vmatpush1.xpose.msra.mxu0 0.0
    %729 = vmatprep.subr.mxu0 0.0
    %730 = vmatpush1.xpose.msra.mxu0 0.0
    %731 = vmatprep.subr.mxu0 0.0
    %732 = vmatpush1.xpose.msra.mxu0 0.0
    %733 = vmatprep.subr.mxu0 0.0
    %734 = vmatpush1.xpose.msra.mxu0 0.0
    %735 = vmatprep.subr.mxu0 0.0
    %736 = vmatpush1.xpose.msra.mxu0 0.0
    %737 = vmatprep.subr.mxu0 0.0
    %738 = vmatpush1.xpose.msra.mxu0 0.0
    %739 = vmatprep.subr.mxu0 0.0
    %740 = vmatpush1.xpose.msra.mxu0 0.0
    %741 = vmatprep.subr.mxu0 0.0
    %742 = vmatpush1.xpose.msra.mxu0 0.0
    %743 = vmatprep.subr.mxu0 0.0
    %744 = vmatpush1.xpose.msra.mxu0 0.0
    %745 = vmatprep.subr.mxu0 0.0
    %746 = vmatpush1.xpose.msra.mxu0 0.0
    %747 = vmatprep.subr.mxu0 0.0
    %748 = vmatpush1.xpose.msra.mxu0 0.0
    %749 = vmatprep.subr.mxu0 0.0
    %750 = vmatpush1.xpose.msra.mxu0 0.0
    %751 = vmatprep.subr.mxu0 0.0
    %752 = vmatpush1.xpose.msra.mxu0 0.0
    %753 = vmatprep.mubr.f32.mxu0 0.0
    %754 = vmatmul.mubr.f32.gmra.mrb[0].mxu0 %v685
    %v755 = vpop.f32.mrb[0].mxu0
    %v756 = vadd.f32 0.0, %v755
    %v757 = vpop.f32.mrb[0].mxu0
    %758 = vdwg.mxu0
    %v759 = vsel %vm276, %v678, -inf
    %760 = vmax.xlane.f32.xlu0 %v759
    %v761 = vpop.xlane.xlu0 %760
    %v762 = vsel %vm276, %v756, -inf
    %763 = vmax.xlane.f32.xlu0 %v762
    %v764 = vpop.xlane.xlu0 %763
    %v765 = vsub.f32 %v678, %v761
    %v766 = vsub.f32 %v756, %v764
    %v767 = vmul.f32 %v765, 1.442695
    %v768 = vpow.pop %v767
    %v769 = vmul.f32 %v766, 1.442695
    %v770 = vpow.pop %v769
    %v771 = vsel %vm276, %v768, 0.0
    %772 = vadd.xlane.f32.xlu0 %v771
    %v773 = vpop.xlane.xlu0 %772
    %v774 = vsel %vm276, %v770, 0.0
    %775 = vadd.xlane.f32.xlu0 %v774
    %v776 = vpop.xlane.xlu0 %775
    %v777 = vrcp.pop %v773
    %v778 = vmul.f32 %v768, %v777
    %v779 = vrcp.pop %v776
    %v780 = vmul.f32 %v770, %v779
    %781 = vrot.lane.b32.xlu0 %v266, 88
    %v782 = vpop.permute.xlu0 %781
    %v785 = vsel %vm276, %v778, 0
    %787 = vmatprep.subr.mxu0 0.0
    %788 = vmatpush1.msra.mxu0 %v782
    %789 = vmatprep.subr.mxu0 0.0
    %790 = vmatpush1.msra.mxu0 0.0
    %791 = vmatprep.subr.mxu0 0.0
    %792 = vmatpush1.msra.mxu0 0.0
    %793 = vmatprep.subr.mxu0 0.0
    %794 = vmatpush1.msra.mxu0 0.0
    %795 = vmatprep.subr.mxu0 0.0
    %796 = vmatpush1.msra.mxu0 0.0
    %797 = vmatprep.subr.mxu0 0.0
    %798 = vmatpush1.msra.mxu0 0.0
    %799 = vmatprep.subr.mxu0 0.0
    %800 = vmatpush1.msra.mxu0 0.0
    %801 = vmatprep.subr.mxu0 0.0
    %802 = vmatpush1.msra.mxu0 0.0
    %803 = vmatprep.subr.mxu0 0.0
    %804 = vmatpush1.msra.mxu0 0.0
    %805 = vmatprep.subr.mxu0 0.0
    %806 = vmatpush1.msra.mxu0 0.0
    %807 = vmatprep.subr.mxu0 0.0
    %808 = vmatpush1.msra.mxu0 0.0
    %809 = vmatprep.subr.mxu0 0.0
    %810 = vmatpush1.msra.mxu0 0.0
    %811 = vmatprep.subr.mxu0 0.0
    %812 = vmatpush1.msra.mxu0 0.0
    %813 = vmatprep.subr.mxu0 0.0
    %814 = vmatpush1.msra.mxu0 0.0
    %815 = vmatprep.subr.mxu0 0.0
    %816 = vmatpush1.msra.mxu0 0.0
    %817 = vmatprep.subr.mxu0 0.0
    %818 = vmatpush1.msra.mxu0 0.0
    %819 = vmatprep.subr.mxu0 0.0
    %820 = vmatpush1.msra.mxu0 0.0
    %821 = vmatprep.subr.mxu0 0.0
    %822 = vmatpush1.msra.mxu0 0.0
    %823 = vmatprep.subr.mxu0 0.0
    %824 = vmatpush1.msra.mxu0 0.0
    %825 = vmatprep.subr.mxu0 0.0
    %826 = vmatpush1.msra.mxu0 0.0
    %827 = vmatprep.subr.mxu0 0.0
    %828 = vmatpush1.msra.mxu0 0.0
    %829 = vmatprep.subr.mxu0 0.0
    %830 = vmatpush1.msra.mxu0 0.0
    %831 = vmatprep.subr.mxu0 0.0
    %832 = vmatpush1.msra.mxu0 0.0
    %833 = vmatprep.subr.mxu0 0.0
    %834 = vmatpush1.msra.mxu0 0.0
    %835 = vmatprep.subr.mxu0 0.0
    %836 = vmatpush1.msra.mxu0 0.0
    %837 = vmatprep.subr.mxu0 0.0
    %838 = vmatpush1.msra.mxu0 0.0
    %839 = vmatprep.subr.mxu0 0.0
    %840 = vmatpush1.msra.mxu0 0.0
    %841 = vmatprep.subr.mxu0 0.0
    %842 = vmatpush1.msra.mxu0 0.0
    %843 = vmatprep.subr.mxu0 0.0
    %844 = vmatpush1.msra.mxu0 0.0
    %845 = vmatprep.subr.mxu0 0.0
    %846 = vmatpush1.msra.mxu0 0.0
    %847 = vmatprep.subr.mxu0 0.0
    %848 = vmatpush1.msra.mxu0 0.0
    %849 = vmatprep.subr.mxu0 0.0
    %850 = vmatpush1.msra.mxu0 0.0
    %851 = vmatprep.mubr.f32.mxu0 0.0
    %852 = vmatmul.mubr.f32.gmra.mrb[0].mxu0 %v785
    %v853 = vpop.f32.mrb[0].mxu0
    %v854 = vadd.f32 0.0, %v853
    %v855 = vpop.f32.mrb[0].mxu0
    %856 = vdwg.mxu0
    %857 = vrot.lane.b32.xlu0 %v271, 88
    %v858 = vpop.permute.xlu0 %857
    %v861 = vsel %vm276, %v780, 0
    %863 = vmatprep.subr.mxu0 0.0
    %864 = vmatpush1.msra.mxu0 %v858
    %865 = vmatprep.subr.mxu0 0.0
    %866 = vmatpush1.msra.mxu0 0.0
    %867 = vmatprep.subr.mxu0 0.0
    %868 = vmatpush1.msra.mxu0 0.0
    %869 = vmatprep.subr.mxu0 0.0
    %870 = vmatpush1.msra.mxu0 0.0
    %871 = vmatprep.subr.mxu0 0.0
    %872 = vmatpush1.msra.mxu0 0.0
    %873 = vmatprep.subr.mxu0 0.0
    %874 = vmatpush1.msra.mxu0 0.0
    %875 = vmatprep.subr.mxu0 0.0
    %876 = vmatpush1.msra.mxu0 0.0
    %877 = vmatprep.subr.mxu0 0.0
    %878 = vmatpush1.msra.mxu0 0.0
    %879 = vmatprep.subr.mxu0 0.0
    %880 = vmatpush1.msra.mxu0 0.0
    %881 = vmatprep.subr.mxu0 0.0
    %882 = vmatpush1.msra.mxu0 0.0
    %883 = vmatprep.subr.mxu0 0.0
    %884 = vmatpush1.msra.mxu0 0.0
    %885 = vmatprep.subr.mxu0 0.0
    %886 = vmatpush1.msra.mxu0 0.0
    %887 = vmatprep.subr.mxu0 0.0
    %888 = vmatpush1.msra.mxu0 0.0
    %889 = vmatprep.subr.mxu0 0.0
    %890 = vmatpush1.msra.mxu0 0.0
    %891 = vmatprep.subr.mxu0 0.0
    %892 = vmatpush1.msra.mxu0 0.0
    %893 = vmatprep.subr.mxu0 0.0
    %894 = vmatpush1.msra.mxu0 0.0
    %895 = vmatprep.subr.mxu0 0.0
    %896 = vmatpush1.msra.mxu0 0.0
    %897 = vmatprep.subr.mxu0 0.0
    %898 = vmatpush1.msra.mxu0 0.0
    %899 = vmatprep.subr.mxu0 0.0
    %900 = vmatpush1.msra.mxu0 0.0
    %901 = vmatprep.subr.mxu0 0.0
    %902 = vmatpush1.msra.mxu0 0.0
    %903 = vmatprep.subr.mxu0 0.0
    %904 = vmatpush1.msra.mxu0 0.0
    %905 = vmatprep.subr.mxu0 0.0
    %906 = vmatpush1.msra.mxu0 0.0
    %907 = vmatprep.subr.mxu0 0.0
    %908 = vmatpush1.msra.mxu0 0.0
    %909 = vmatprep.subr.mxu0 0.0
    %910 = vmatpush1.msra.mxu0 0.0
    %911 = vmatprep.subr.mxu0 0.0
    %912 = vmatpush1.msra.mxu0 0.0
    %913 = vmatprep.subr.mxu0 0.0
    %914 = vmatpush1.msra.mxu0 0.0
    %915 = vmatprep.subr.mxu0 0.0
    %916 = vmatpush1.msra.mxu0 0.0
    %917 = vmatprep.subr.mxu0 0.0
    %918 = vmatpush1.msra.mxu0 0.0
    %919 = vmatprep.subr.mxu0 0.0
    %920 = vmatpush1.msra.mxu0 0.0
    %921 = vmatprep.subr.mxu0 0.0
    %922 = vmatpush1.msra.mxu0 0.0
    %923 = vmatprep.subr.mxu0 0.0
    %924 = vmatpush1.msra.mxu0 0.0
    %925 = vmatprep.subr.mxu0 0.0
    %926 = vmatpush1.msra.mxu0 0.0
    %927 = vmatprep.mubr.f32.mxu0 0.0
    %928 = vmatmul.mubr.f32.gmra.mrb[0].mxu0 %v861
    %v929 = vpop.f32.mrb[0].mxu0
    %v930 = vadd.f32 0.0, %v929
    %v931 = vpop.f32.mrb[0].mxu0
    %932 = vdwg.mxu0
    %933 = vrot.lane.b32.xlu0 %v274, 112
    %v934 = vpop.permute.xlu0 %933
    %935 = vrot.lane.b32.xlu0 %v266, 112
    %v936 = vpop.permute.xlu0 %935
    %v937 = vsel %vm276, %v934, 0
    %v939 = vsel %vm276, %v936, 0
    %941 = vmatprep.subr.mxu0 0.0
    %942 = vmatpush1.xpose.msra.mxu0 %v939
    %943 = vmatprep.subr.mxu0 0.0
    %944 = vmatpush1.xpose.msra.mxu0 0.0
    %945 = vmatprep.subr.mxu0 0.0
    %946 = vmatpush1.xpose.msra.mxu0 0.0
    %947 = vmatprep.subr.mxu0 0.0
    %948 = vmatpush1.xpose.msra.mxu0 0.0
    %949 = vmatprep.subr.mxu0 0.0
    %950 = vmatpush1.xpose.msra.mxu0 0.0
    %951 = vmatprep.subr.mxu0 0.0
    %952 = vmatpush1.xpose.msra.mxu0 0.0
    %953 = vmatprep.subr.mxu0 0.0
    %954 = vmatpush1.xpose.msra.mxu0 0.0
    %955 = vmatprep.subr.mxu0 0.0
    %956 = vmatpush1.xpose.msra.mxu0 0.0
    %957 = vmatprep.subr.mxu0 0.0
    %958 = vmatpush1.xpose.msra.mxu0 0.0
    %959 = vmatprep.subr.mxu0 0.0
    %960 = vmatpush1.xpose.msra.mxu0 0.0
    %961 = vmatprep.subr.mxu0 0.0
    %962 = vmatpush1.xpose.msra.mxu0 0.0
    %963 = vmatprep.subr.mxu0 0.0
    %964 = vmatpush1.xpose.msra.mxu0 0.0
    %965 = vmatprep.subr.mxu0 0.0
    %966 = vmatpush1.xpose.msra.mxu0 0.0
    %967 = vmatprep.subr.mxu0 0.0
    %968 = vmatpush1.xpose.msra.mxu0 0.0
    %969 = vmatprep.subr.mxu0 0.0
    %970 = vmatpush1.xpose.msra.mxu0 0.0
    %971 = vmatprep.subr.mxu0 0.0
    %972 = vmatpush1.xpose.msra.mxu0 0.0
    %973 = vmatprep.subr.mxu0 0.0
    %974 = vmatpush1.xpose.msra.mxu0 0.0
    %975 = vmatprep.subr.mxu0 0.0
    %976 = vmatpush1.xpose.msra.mxu0 0.0
    %977 = vmatprep.subr.mxu0 0.0
    %978 = vmatpush1.xpose.msra.mxu0 0.0
    %979 = vmatprep.subr.mxu0 0.0
    %980 = vmatpush1.xpose.msra.mxu0 0.0
    %981 = vmatprep.subr.mxu0 0.0
    %982 = vmatpush1.xpose.msra.mxu0 0.0
    %983 = vmatprep.subr.mxu0 0.0
    %984 = vmatpush1.xpose.msra.mxu0 0.0
    %985 = vmatprep.subr.mxu0 0.0
    %986 = vmatpush1.xpose.msra.mxu0 0.0
    %987 = vmatprep.subr.mxu0 0.0
    %988 = vmatpush1.xpose.msra.mxu0 0.0
    %989 = vmatprep.subr.mxu0 0.0
    %990 = vmatpush1.xpose.msra.mxu0 0.0
    %991 = vmatprep.subr.mxu0 0.0
    %992 = vmatpush1.xpose.msra.mxu0 0.0
    %993 = vmatprep.subr.mxu0 0.0
    %994 = vmatpush1.xpose.msra.mxu0 0.0
    %995 = vmatprep.subr.mxu0 0.0
    %996 = vmatpush1.xpose.msra.mxu0 0.0
    %997 = vmatprep.subr.mxu0 0.0
    %998 = vmatpush1.xpose.msra.mxu0 0.0
    %999 = vmatprep.subr.mxu0 0.0
    %1000 = vmatpush1.xpose.msra.mxu0 0.0
    %1001 = vmatprep.subr.mxu0 0.0
    %1002 = vmatpush1.xpose.msra.mxu0 0.0
    %1003 = vmatprep.subr.mxu0 0.0
    %1004 = vmatpush1.xpose.msra.mxu0 0.0
    %1005 = vmatprep.mubr.f32.mxu0 0.0
    %1006 = vmatmul.mubr.f32.gmra.mrb[0].mxu0 %v937
    %v1007 = vpop.f32.mrb[0].mxu0
    %v1008 = vadd.f32 0.0, %v1007
    %v1009 = vpop.f32.mrb[0].mxu0
    %1010 = vdwg.mxu0
    %1011 = vrot.lane.b32.xlu0 %v275, 112
    %v1012 = vpop.permute.xlu0 %1011
    %1013 = vrot.lane.b32.xlu0 %v271, 112
    %v1014 = vpop.permute.xlu0 %1013
    %v1015 = vsel %vm276, %v1012, 0
    %v1017 = vsel %vm276, %v1014, 0
    %1019 = vmatprep.subr.mxu0 0.0
    %1020 = vmatpush1.xpose.msra.mxu0 %v1017
    %1021 = vmatprep.subr.mxu0 0.0
    %1022 = vmatpush1.xpose.msra.mxu0 0.0
    %1023 = vmatprep.subr.mxu0 0.0
    %1024 = vmatpush1.xpose.msra.mxu0 0.0
    %1025 = vmatprep.subr.mxu0 0.0
    %1026 = vmatpush1.xpose.msra.mxu0 0.0
    %1027 = vmatprep.subr.mxu0 0.0
    %1028 = vmatpush1.xpose.msra.mxu0 0.0
    %1029 = vmatprep.subr.mxu0 0.0
    %1030 = vmatpush1.xpose.msra.mxu0 0.0
    %1031 = vmatprep.subr.mxu0 0.0
    %1032 = vmatpush1.xpose.msra.mxu0 0.0
    %1033 = vmatprep.subr.mxu0 0.0
    %1034 = vmatpush1.xpose.msra.mxu0 0.0
    %1035 = vmatprep.subr.mxu0 0.0
    %1036 = vmatpush1.xpose.msra.mxu0 0.0
    %1037 = vmatprep.subr.mxu0 0.0
    %1038 = vmatpush1.xpose.msra.mxu0 0.0
    %1039 = vmatprep.subr.mxu0 0.0
    %1040 = vmatpush1.xpose.msra.mxu0 0.0
    %1041 = vmatprep.subr.mxu0 0.0
    %1042 = vmatpush1.xpose.msra.mxu0 0.0
    %1043 = vmatprep.subr.mxu0 0.0
    %1044 = vmatpush1.xpose.msra.mxu0 0.0
    %1045 = vmatprep.subr.mxu0 0.0
    %1046 = vmatpush1.xpose.msra.mxu0 0.0
    %1047 = vmatprep.subr.mxu0 0.0
    %1048 = vmatpush1.xpose.msra.mxu0 0.0
    %1049 = vmatprep.subr.mxu0 0.0
    %1050 = vmatpush1.xpose.msra.mxu0 0.0
    %1051 = vmatprep.subr.mxu0 0.0
    %1052 = vmatpush1.xpose.msra.mxu0 0.0
    %1053 = vmatprep.subr.mxu0 0.0
    %1054 = vmatpush1.xpose.msra.mxu0 0.0
    %1055 = vmatprep.subr.mxu0 0.0
    %1056 = vmatpush1.xpose.msra.mxu0 0.0
    %1057 = vmatprep.subr.mxu0 0.0
    %1058 = vmatpush1.xpose.msra.mxu0 0.0
    %1059 = vmatprep.subr.mxu0 0.0
    %1060 = vmatpush1.xpose.msra.mxu0 0.0
    %1061 = vmatprep.subr.mxu0 0.0
    %1062 = vmatpush1.xpose.msra.mxu0 0.0
    %1063 = vmatprep.subr.mxu0 0.0
    %1064 = vmatpush1.xpose.msra.mxu0 0.0
    %1065 = vmatprep.subr.mxu0 0.0
    %1066 = vmatpush1.xpose.msra.mxu0 0.0
    %1067 = vmatprep.subr.mxu0 0.0
    %1068 = vmatpush1.xpose.msra.mxu0 0.0
    %1069 = vmatprep.subr.mxu0 0.0
    %1070 = vmatpush1.xpose.msra.mxu0 0.0
    %1071 = vmatprep.subr.mxu0 0.0
    %1072 = vmatpush1.xpose.msra.mxu0 0.0
    %1073 = vmatprep.subr.mxu0 0.0
    %1074 = vmatpush1.xpose.msra.mxu0 0.0
    %1075 = vmatprep.subr.mxu0 0.0
    %1076 = vmatpush1.xpose.msra.mxu0 0.0
    %1077 = vmatprep.subr.mxu0 0.0
    %1078 = vmatpush1.xpose.msra.mxu0 0.0
    %1079 = vmatprep.subr.mxu0 0.0
    %1080 = vmatpush1.xpose.msra.mxu0 0.0
    %1081 = vmatprep.subr.mxu0 0.0
    %1082 = vmatpush1.xpose.msra.mxu0 0.0
    %1083 = vmatprep.mubr.f32.mxu0 0.0
    %1084 = vmatmul.mubr.f32.gmra.mrb[0].mxu0 %v1015
    %v1085 = vpop.f32.mrb[0].mxu0
    %v1086 = vadd.f32 0.0, %v1085
    %v1087 = vpop.f32.mrb[0].mxu0
    %1088 = vdwg.mxu0
    %v1089 = vsel %vm276, %v1008, -inf
    %1090 = vmax.xlane.f32.xlu0 %v1089
    %v1091 = vpop.xlane.xlu0 %1090
    %v1092 = vsel %vm276, %v1086, -inf
    %1093 = vmax.xlane.f32.xlu0 %v1092
    %v1094 = vpop.xlane.xlu0 %1093
    %v1095 = vsub.f32 %v1008, %v1091
    %v1096 = vsub.f32 %v1086, %v1094
    %v1097 = vmul.f32 %v1095, 1.442695
    %v1098 = vpow.pop %v1097
    %v1099 = vmul.f32 %v1096, 1.442695
    %v1100 = vpow.pop %v1099
    %v1101 = vsel %vm276, %v1098, 0.0
    %1102 = vadd.xlane.f32.xlu0 %v1101
    %v1103 = vpop.xlane.xlu0 %1102
    %v1104 = vsel %vm276, %v1100, 0.0
    %1105 = vadd.xlane.f32.xlu0 %v1104
    %v1106 = vpop.xlane.xlu0 %1105
    %v1107 = vrcp.pop %v1103
    %v1108 = vmul.f32 %v1098, %v1107
    %v1109 = vrcp.pop %v1106
    %v1110 = vmul.f32 %v1100, %v1109
    %1111 = vrot.lane.b32.xlu0 %v266, 80
    %v1112 = vpop.permute.xlu0 %1111
    %v1115 = vsel %vm276, %v1108, 0
    %1117 = vmatprep.subr.mxu0 0.0
    %1118 = vmatpush1.msra.mxu0 %v1112
    %1119 = vmatprep.subr.mxu0 0.0
    %1120 = vmatpush1.msra.mxu0 0.0
    %1121 = vmatprep.subr.mxu0 0.0
    %1122 = vmatpush1.msra.mxu0 0.0
    %1123 = vmatprep.subr.mxu0 0.0
    %1124 = vmatpush1.msra.mxu0 0.0
    %1125 = vmatprep.subr.mxu0 0.0
    %1126 = vmatpush1.msra.mxu0 0.0
    %1127 = vmatprep.subr.mxu0 0.0
    %1128 = vmatpush1.msra.mxu0 0.0
    %1129 = vmatprep.subr.mxu0 0.0
    %1130 = vmatpush1.msra.mxu0 0.0
    %1131 = vmatprep.subr.mxu0 0.0
    %1132 = vmatpush1.msra.mxu0 0.0
    %1133 = vmatprep.subr.mxu0 0.0
    %1134 = vmatpush1.msra.mxu0 0.0
    %1135 = vmatprep.subr.mxu0 0.0
    %1136 = vmatpush1.msra.mxu0 0.0
    %1137 = vmatprep.subr.mxu0 0.0
    %1138 = vmatpush1.msra.mxu0 0.0
    %1139 = vmatprep.subr.mxu0 0.0
    %1140 = vmatpush1.msra.mxu0 0.0
    %1141 = vmatprep.subr.mxu0 0.0
    %1142 = vmatpush1.msra.mxu0 0.0
    %1143 = vmatprep.subr.mxu0 0.0
    %1144 = vmatpush1.msra.mxu0 0.0
    %1145 = vmatprep.subr.mxu0 0.0
    %1146 = vmatpush1.msra.mxu0 0.0
    %1147 = vmatprep.subr.mxu0 0.0
    %1148 = vmatpush1.msra.mxu0 0.0
    %1149 = vmatprep.subr.mxu0 0.0
    %1150 = vmatpush1.msra.mxu0 0.0
    %1151 = vmatprep.subr.mxu0 0.0
    %1152 = vmatpush1.msra.mxu0 0.0
    %1153 = vmatprep.subr.mxu0 0.0
    %1154 = vmatpush1.msra.mxu0 0.0
    %1155 = vmatprep.subr.mxu0 0.0
    %1156 = vmatpush1.msra.mxu0 0.0
    %1157 = vmatprep.subr.mxu0 0.0
    %1158 = vmatpush1.msra.mxu0 0.0
    %1159 = vmatprep.subr.mxu0 0.0
    %1160 = vmatpush1.msra.mxu0 0.0
    %1161 = vmatprep.subr.mxu0 0.0
    %1162 = vmatpush1.msra.mxu0 0.0
    %1163 = vmatprep.subr.mxu0 0.0
    %1164 = vmatpush1.msra.mxu0 0.0
    %1165 = vmatprep.subr.mxu0 0.0
    %1166 = vmatpush1.msra.mxu0 0.0
    %1167 = vmatprep.subr.mxu0 0.0
    %1168 = vmatpush1.msra.mxu0 0.0
    %1169 = vmatprep.subr.mxu0 0.0
    %1170 = vmatpush1.msra.mxu0 0.0
    %1171 = vmatprep.subr.mxu0 0.0
    %1172 = vmatpush1.msra.mxu0 0.0
    %1173 = vmatprep.subr.mxu0 0.0
    %1174 = vmatpush1.msra.mxu0 0.0
    %1175 = vmatprep.subr.mxu0 0.0
    %1176 = vmatpush1.msra.mxu0 0.0
    %1177 = vmatprep.subr.mxu0 0.0
    %1178 = vmatpush1.msra.mxu0 0.0
    %1179 = vmatprep.subr.mxu0 0.0
    %1180 = vmatpush1.msra.mxu0 0.0
    %1181 = vmatprep.mubr.f32.mxu0 0.0
    %1182 = vmatmul.mubr.f32.gmra.mrb[0].mxu0 %v1115
    %v1183 = vpop.f32.mrb[0].mxu0
    %v1184 = vadd.f32 0.0, %v1183
    %v1185 = vpop.f32.mrb[0].mxu0
    %1186 = vdwg.mxu0
    %1187 = vrot.lane.b32.xlu0 %v271, 80
    %v1188 = vpop.permute.xlu0 %1187
    %v1191 = vsel %vm276, %v1110, 0
    %1193 = vmatprep.subr.mxu0 0.0
    %1194 = vmatpush1.msra.mxu0 %v1188
    %1195 = vmatprep.subr.mxu0 0.0
    %1196 = vmatpush1.msra.mxu0 0.0
    %1197 = vmatprep.subr.mxu0 0.0
    %1198 = vmatpush1.msra.mxu0 0.0
    %1199 = vmatprep.subr.mxu0 0.0
    %1200 = vmatpush1.msra.mxu0 0.0
    %1201 = vmatprep.subr.mxu0 0.0
    %1202 = vmatpush1.msra.mxu0 0.0
    %1203 = vmatprep.subr.mxu0 0.0
    %1204 = vmatpush1.msra.mxu0 0.0
    %1205 = vmatprep.subr.mxu0 0.0
    %1206 = vmatpush1.msra.mxu0 0.0
    %1207 = vmatprep.subr.mxu0 0.0
    %1208 = vmatpush1.msra.mxu0 0.0
    %1209 = vmatprep.subr.mxu0 0.0
    %1210 = vmatpush1.msra.mxu0 0.0
    %1211 = vmatprep.subr.mxu0 0.0
    %1212 = vmatpush1.msra.mxu0 0.0
    %1213 = vmatprep.subr.mxu0 0.0
    %1214 = vmatpush1.msra.mxu0 0.0
    %1215 = vmatprep.subr.mxu0 0.0
    %1216 = vmatpush1.msra.mxu0 0.0
    %1217 = vmatprep.subr.mxu0 0.0
    %1218 = vmatpush1.msra.mxu0 0.0
    %1219 = vmatprep.subr.mxu0 0.0
    %1220 = vmatpush1.msra.mxu0 0.0
    %1221 = vmatprep.subr.mxu0 0.0
    %1222 = vmatpush1.msra.mxu0 0.0
    %1223 = vmatprep.subr.mxu0 0.0
    %1224 = vmatpush1.msra.mxu0 0.0
    %1225 = vmatprep.subr.mxu0 0.0
    %1226 = vmatpush1.msra.mxu0 0.0
    %1227 = vmatprep.subr.mxu0 0.0
    %1228 = vmatpush1.msra.mxu0 0.0
    %1229 = vmatprep.subr.mxu0 0.0
    %1230 = vmatpush1.msra.mxu0 0.0
    %1231 = vmatprep.subr.mxu0 0.0
    %1232 = vmatpush1.msra.mxu0 0.0
    %1233 = vmatprep.subr.mxu0 0.0
    %1234 = vmatpush1.msra.mxu0 0.0
    %1235 = vmatprep.subr.mxu0 0.0
    %1236 = vmatpush1.msra.mxu0 0.0
    %1237 = vmatprep.subr.mxu0 0.0
    %1238 = vmatpush1.msra.mxu0 0.0
    %1239 = vmatprep.subr.mxu0 0.0
    %1240 = vmatpush1.msra.mxu0 0.0
    %1241 = vmatprep.subr.mxu0 0.0
    %1242 = vmatpush1.msra.mxu0 0.0
    %1243 = vmatprep.subr.mxu0 0.0
    %1244 = vmatpush1.msra.mxu0 0.0
    %1245 = vmatprep.subr.mxu0 0.0
    %1246 = vmatpush1.msra.mxu0 0.0
    %1247 = vmatprep.subr.mxu0 0.0
    %1248 = vmatpush1.msra.mxu0 0.0
    %1249 = vmatprep.subr.mxu0 0.0
    %1250 = vmatpush1.msra.mxu0 0.0
    %1251 = vmatprep.subr.mxu0 0.0
    %1252 = vmatpush1.msra.mxu0 0.0
    %1253 = vmatprep.subr.mxu0 0.0
    %1254 = vmatpush1.msra.mxu0 0.0
    %1255 = vmatprep.subr.mxu0 0.0
    %1256 = vmatpush1.msra.mxu0 0.0
    %1257 = vmatprep.mubr.f32.mxu0 0.0
    %1258 = vmatmul.mubr.f32.gmra.mrb[0].mxu0 %v1191
    %v1259 = vpop.f32.mrb[0].mxu0
    %v1260 = vadd.f32 0.0, %v1259
    %v1261 = vpop.f32.mrb[0].mxu0
    %1262 = vdwg.mxu0
    %1263 = vrot.lane.b32.xlu0 %v274, 104
    %v1264 = vpop.permute.xlu0 %1263
    %1265 = vrot.lane.b32.xlu0 %v266, 104
    %v1266 = vpop.permute.xlu0 %1265
    %v1267 = vsel %vm276, %v1264, 0
    %v1269 = vsel %vm276, %v1266, 0
    %1271 = vmatprep.subr.mxu0 0.0
    %1272 = vmatpush1.xpose.msra.mxu0 %v1269
    %1273 = vmatprep.subr.mxu0 0.0
    %1274 = vmatpush1.xpose.msra.mxu0 0.0
    %1275 = vmatprep.subr.mxu0 0.0
    %1276 = vmatpush1.xpose.msra.mxu0 0.0
    %1277 = vmatprep.subr.mxu0 0.0
    %1278 = vmatpush1.xpose.msra.mxu0 0.0
    %1279 = vmatprep.subr.mxu0 0.0
    %1280 = vmatpush1.xpose.msra.mxu0 0.0
    %1281 = vmatprep.subr.mxu0 0.0
    %1282 = vmatpush1.xpose.msra.mxu0 0.0
    %1283 = vmatprep.subr.mxu0 0.0
    %1284 = vmatpush1.xpose.msra.mxu0 0.0
    %1285 = vmatprep.subr.mxu0 0.0
    %1286 = vmatpush1.xpose.msra.mxu0 0.0
    %1287 = vmatprep.subr.mxu0 0.0
    %1288 = vmatpush1.xpose.msra.mxu0 0.0
    %1289 = vmatprep.subr.mxu0 0.0
    %1290 = vmatpush1.xpose.msra.mxu0 0.0
    %1291 = vmatprep.subr.mxu0 0.0
    %1292 = vmatpush1.xpose.msra.mxu0 0.0
    %1293 = vmatprep.subr.mxu0 0.0
    %1294 = vmatpush1.xpose.msra.mxu0 0.0
    %1295 = vmatprep.subr.mxu0 0.0
    %1296 = vmatpush1.xpose.msra.mxu0 0.0
    %1297 = vmatprep.subr.mxu0 0.0
    %1298 = vmatpush1.xpose.msra.mxu0 0.0
    %1299 = vmatprep.subr.mxu0 0.0
    %1300 = vmatpush1.xpose.msra.mxu0 0.0
    %1301 = vmatprep.subr.mxu0 0.0
    %1302 = vmatpush1.xpose.msra.mxu0 0.0
    %1303 = vmatprep.subr.mxu0 0.0
    %1304 = vmatpush1.xpose.msra.mxu0 0.0
    %1305 = vmatprep.subr.mxu0 0.0
    %1306 = vmatpush1.xpose.msra.mxu0 0.0
    %1307 = vmatprep.subr.mxu0 0.0
    %1308 = vmatpush1.xpose.msra.mxu0 0.0
    %1309 = vmatprep.subr.mxu0 0.0
    %1310 = vmatpush1.xpose.msra.mxu0 0.0
    %1311 = vmatprep.subr.mxu0 0.0
    %1312 = vmatpush1.xpose.msra.mxu0 0.0
    %1313 = vmatprep.subr.mxu0 0.0
    %1314 = vmatpush1.xpose.msra.mxu0 0.0
    %1315 = vmatprep.subr.mxu0 0.0
    %1316 = vmatpush1.xpose.msra.mxu0 0.0
    %1317 = vmatprep.subr.mxu0 0.0
    %1318 = vmatpush1.xpose.msra.mxu0 0.0
    %1319 = vmatprep.subr.mxu0 0.0
    %1320 = vmatpush1.xpose.msra.mxu0 0.0
    %1321 = vmatprep.subr.mxu0 0.0
    %1322 = vmatpush1.xpose.msra.mxu0 0.0
    %1323 = vmatprep.subr.mxu0 0.0
    %1324 = vmatpush1.xpose.msra.mxu0 0.0
    %1325 = vmatprep.subr.mxu0 0.0
    %1326 = vmatpush1.xpose.msra.mxu0 0.0
    %1327 = vmatprep.subr.mxu0 0.0
    %1328 = vmatpush1.xpose.msra.mxu0 0.0
    %1329 = vmatprep.subr.mxu0 0.0
    %1330 = vmatpush1.xpose.msra.mxu0 0.0
    %1331 = vmatprep.subr.mxu0 0.0
    %1332 = vmatpush1.xpose.msra.mxu0 0.0
    %1333 = vmatprep.subr.mxu0 0.0
    %1334 = vmatpush1.xpose.msra.mxu0 0.0
    %1335 = vmatprep.mubr.f32.mxu0 0.0
    %1336 = vmatmul.mubr.f32.gmra.mrb[0].mxu0 %v1267
    %v1337 = vpop.f32.mrb[0].mxu0
    %v1338 = vadd.f32 0.0, %v1337
    %v1339 = vpop.f32.mrb[0].mxu0
    %1340 = vdwg.mxu0
    %1341 = vrot.lane.b32.xlu0 %v275, 104
    %v1342 = vpop.permute.xlu0 %1341
    %1343 = vrot.lane.b32.xlu0 %v271, 104
    %v1344 = vpop.permute.xlu0 %1343
    %v1345 = vsel %vm276, %v1342, 0
    %v1347 = vsel %vm276, %v1344, 0
    %1349 = vmatprep.subr.mxu0 0.0
    %1350 = vmatpush1.xpose.msra.mxu0 %v1347
    %1351 = vmatprep.subr.mxu0 0.0
    %1352 = vmatpush1.xpose.msra.mxu0 0.0
    %1353 = vmatprep.subr.mxu0 0.0
    %1354 = vmatpush1.xpose.msra.mxu0 0.0
    %1355 = vmatprep.subr.mxu0 0.0
    %1356 = vmatpush1.xpose.msra.mxu0 0.0
    %1357 = vmatprep.subr.mxu0 0.0
    %1358 = vmatpush1.xpose.msra.mxu0 0.0
    %1359 = vmatprep.subr.mxu0 0.0
    %1360 = vmatpush1.xpose.msra.mxu0 0.0
    %1361 = vmatprep.subr.mxu0 0.0
    %1362 = vmatpush1.xpose.msra.mxu0 0.0
    %1363 = vmatprep.subr.mxu0 0.0
    %1364 = vmatpush1.xpose.msra.mxu0 0.0
    %1365 = vmatprep.subr.mxu0 0.0
    %1366 = vmatpush1.xpose.msra.mxu0 0.0
    %1367 = vmatprep.subr.mxu0 0.0
    %1368 = vmatpush1.xpose.msra.mxu0 0.0
    %1369 = vmatprep.subr.mxu0 0.0
    %1370 = vmatpush1.xpose.msra.mxu0 0.0
    %1371 = vmatprep.subr.mxu0 0.0
    %1372 = vmatpush1.xpose.msra.mxu0 0.0
    %1373 = vmatprep.subr.mxu0 0.0
    %1374 = vmatpush1.xpose.msra.mxu0 0.0
    %1375 = vmatprep.subr.mxu0 0.0
    %1376 = vmatpush1.xpose.msra.mxu0 0.0
    %1377 = vmatprep.subr.mxu0 0.0
    %1378 = vmatpush1.xpose.msra.mxu0 0.0
    %1379 = vmatprep.subr.mxu0 0.0
    %1380 = vmatpush1.xpose.msra.mxu0 0.0
    %1381 = vmatprep.subr.mxu0 0.0
    %1382 = vmatpush1.xpose.msra.mxu0 0.0
    %1383 = vmatprep.subr.mxu0 0.0
    %1384 = vmatpush1.xpose.msra.mxu0 0.0
    %1385 = vmatprep.subr.mxu0 0.0
    %1386 = vmatpush1.xpose.msra.mxu0 0.0
    %1387 = vmatprep.subr.mxu0 0.0
    %1388 = vmatpush1.xpose.msra.mxu0 0.0
    %1389 = vmatprep.subr.mxu0 0.0
    %1390 = vmatpush1.xpose.msra.mxu0 0.0
    %1391 = vmatprep.subr.mxu0 0.0
    %1392 = vmatpush1.xpose.msra.mxu0 0.0
    %1393 = vmatprep.subr.mxu0 0.0
    %1394 = vmatpush1.xpose.msra.mxu0 0.0
    %1395 = vmatprep.subr.mxu0 0.0
    %1396 = vmatpush1.xpose.msra.mxu0 0.0
    %1397 = vmatprep.subr.mxu0 0.0
    %1398 = vmatpush1.xpose.msra.mxu0 0.0
    %1399 = vmatprep.subr.mxu0 0.0
    %1400 = vmatpush1.xpose.msra.mxu0 0.0
    %1401 = vmatprep.subr.mxu0 0.0
    %1402 = vmatpush1.xpose.msra.mxu0 0.0
    %1403 = vmatprep.subr.mxu0 0.0
    %1404 = vmatpush1.xpose.msra.mxu0 0.0
    %1405 = vmatprep.subr.mxu0 0.0
    %1406 = vmatpush1.xpose.msra.mxu0 0.0
    %1407 = vmatprep.subr.mxu0 0.0
    %1408 = vmatpush1.xpose.msra.mxu0 0.0
    %1409 = vmatprep.subr.mxu0 0.0
    %1410 = vmatpush1.xpose.msra.mxu0 0.0
    %1411 = vmatprep.subr.mxu0 0.0
    %1412 = vmatpush1.xpose.msra.mxu0 0.0
    %1413 = vmatprep.mubr.f32.mxu0 0.0
    %1414 = vmatmul.mubr.f32.gmra.mrb[0].mxu0 %v1345
    %v1415 = vpop.f32.mrb[0].mxu0
    %v1416 = vadd.f32 0.0, %v1415
    %v1417 = vpop.f32.mrb[0].mxu0
    %1418 = vdwg.mxu0
    %v1419 = vsel %vm276, %v1338, -inf
    %1420 = vmax.xlane.f32.xlu0 %v1419
    %v1421 = vpop.xlane.xlu0 %1420
    %v1422 = vsel %vm276, %v1416, -inf
    %1423 = vmax.xlane.f32.xlu0 %v1422
    %v1424 = vpop.xlane.xlu0 %1423
    %v1425 = vsub.f32 %v1338, %v1421
    %v1426 = vsub.f32 %v1416, %v1424
    %v1427 = vmul.f32 %v1425, 1.442695
    %v1428 = vpow.pop %v1427
    %v1429 = vmul.f32 %v1426, 1.442695
    %v1430 = vpow.pop %v1429
    %v1431 = vsel %vm276, %v1428, 0.0
    %1432 = vadd.xlane.f32.xlu0 %v1431
    %v1433 = vpop.xlane.xlu0 %1432
    %v1434 = vsel %vm276, %v1430, 0.0
    %1435 = vadd.xlane.f32.xlu0 %v1434
    %v1436 = vpop.xlane.xlu0 %1435
    %v1437 = vrcp.pop %v1433
    %v1438 = vmul.f32 %v1428, %v1437
    %v1439 = vrcp.pop %v1436
    %v1440 = vmul.f32 %v1430, %v1439
    %1441 = vrot.lane.b32.xlu0 %v266, 72
    %v1442 = vpop.permute.xlu0 %1441
    %v1445 = vsel %vm276, %v1438, 0
    %1447 = vmatprep.subr.mxu0 0.0
    %1448 = vmatpush1.msra.mxu0 %v1442
    %1449 = vmatprep.subr.mxu0 0.0
    %1450 = vmatpush1.msra.mxu0 0.0
    %1451 = vmatprep.subr.mxu0 0.0
    %1452 = vmatpush1.msra.mxu0 0.0
    %1453 = vmatprep.subr.mxu0 0.0
    %1454 = vmatpush1.msra.mxu0 0.0
    %1455 = vmatprep.subr.mxu0 0.0
    %1456 = vmatpush1.msra.mxu0 0.0
    %1457 = vmatprep.subr.mxu0 0.0
    %1458 = vmatpush1.msra.mxu0 0.0
    %1459 = vmatprep.subr.mxu0 0.0
    %1460 = vmatpush1.msra.mxu0 0.0
    %1461 = vmatprep.subr.mxu0 0.0
    %1462 = vmatpush1.msra.mxu0 0.0
    %1463 = vmatprep.subr.mxu0 0.0
    %1464 = vmatpush1.msra.mxu0 0.0
    %1465 = vmatprep.subr.mxu0 0.0
    %1466 = vmatpush1.msra.mxu0 0.0
    %1467 = vmatprep.subr.mxu0 0.0
    %1468 = vmatpush1.msra.mxu0 0.0
    %1469 = vmatprep.subr.mxu0 0.0
    %1470 = vmatpush1.msra.mxu0 0.0
    %1471 = vmatprep.subr.mxu0 0.0
    %1472 = vmatpush1.msra.mxu0 0.0
    %1473 = vmatprep.subr.mxu0 0.0
    %1474 = vmatpush1.msra.mxu0 0.0
    %1475 = vmatprep.subr.mxu0 0.0
    %1476 = vmatpush1.msra.mxu0 0.0
    %1477 = vmatprep.subr.mxu0 0.0
    %1478 = vmatpush1.msra.mxu0 0.0
    %1479 = vmatprep.subr.mxu0 0.0
    %1480 = vmatpush1.msra.mxu0 0.0
    %1481 = vmatprep.subr.mxu0 0.0
    %1482 = vmatpush1.msra.mxu0 0.0
    %1483 = vmatprep.subr.mxu0 0.0
    %1484 = vmatpush1.msra.mxu0 0.0
    %1485 = vmatprep.subr.mxu0 0.0
    %1486 = vmatpush1.msra.mxu0 0.0
    %1487 = vmatprep.subr.mxu0 0.0
    %1488 = vmatpush1.msra.mxu0 0.0
    %1489 = vmatprep.subr.mxu0 0.0
    %1490 = vmatpush1.msra.mxu0 0.0
    %1491 = vmatprep.subr.mxu0 0.0
    %1492 = vmatpush1.msra.mxu0 0.0
    %1493 = vmatprep.subr.mxu0 0.0
    %1494 = vmatpush1.msra.mxu0 0.0
    %1495 = vmatprep.subr.mxu0 0.0
    %1496 = vmatpush1.msra.mxu0 0.0
    %1497 = vmatprep.subr.mxu0 0.0
    %1498 = vmatpush1.msra.mxu0 0.0
    %1499 = vmatprep.subr.mxu0 0.0
    %1500 = vmatpush1.msra.mxu0 0.0
    %1501 = vmatprep.subr.mxu0 0.0
    %1502 = vmatpush1.msra.mxu0 0.0
    %1503 = vmatprep.subr.mxu0 0.0
    %1504 = vmatpush1.msra.mxu0 0.0
    %1505 = vmatprep.subr.mxu0 0.0
    %1506 = vmatpush1.msra.mxu0 0.0
    %1507 = vmatprep.subr.mxu0 0.0
    %1508 = vmatpush1.msra.mxu0 0.0
    %1509 = vmatprep.subr.mxu0 0.0
    %1510 = vmatpush1.msra.mxu0 0.0
    %1511 = vmatprep.mubr.f32.mxu0 0.0
    %1512 = vmatmul.mubr.f32.gmra.mrb[0].mxu0 %v1445
    %v1513 = vpop.f32.mrb[0].mxu0
    %v1514 = vadd.f32 0.0, %v1513
    %v1515 = vpop.f32.mrb[0].mxu0
    %1516 = vdwg.mxu0
    %1517 = vrot.lane.b32.xlu0 %v271, 72
    %v1518 = vpop.permute.xlu0 %1517
    %v1521 = vsel %vm276, %v1440, 0
    %1523 = vmatprep.subr.mxu0 0.0
    %1524 = vmatpush1.msra.mxu0 %v1518
    %1525 = vmatprep.subr.mxu0 0.0
    %1526 = vmatpush1.msra.mxu0 0.0
    %1527 = vmatprep.subr.mxu0 0.0
    %1528 = vmatpush1.msra.mxu0 0.0
    %1529 = vmatprep.subr.mxu0 0.0
    %1530 = vmatpush1.msra.mxu0 0.0
    %1531 = vmatprep.subr.mxu0 0.0
    %1532 = vmatpush1.msra.mxu0 0.0
    %1533 = vmatprep.subr.mxu0 0.0
    %1534 = vmatpush1.msra.mxu0 0.0
    %1535 = vmatprep.subr.mxu0 0.0
    %1536 = vmatpush1.msra.mxu0 0.0
    %1537 = vmatprep.subr.mxu0 0.0
    %1538 = vmatpush1.msra.mxu0 0.0
    %1539 = vmatprep.subr.mxu0 0.0
    %1540 = vmatpush1.msra.mxu0 0.0
    %1541 = vmatprep.subr.mxu0 0.0
    %1542 = vmatpush1.msra.mxu0 0.0
    %1543 = vmatprep.subr.mxu0 0.0
    %1544 = vmatpush1.msra.mxu0 0.0
    %1545 = vmatprep.subr.mxu0 0.0
    %1546 = vmatpush1.msra.mxu0 0.0
    %1547 = vmatprep.subr.mxu0 0.0
    %1548 = vmatpush1.msra.mxu0 0.0
    %1549 = vmatprep.subr.mxu0 0.0
    %1550 = vmatpush1.msra.mxu0 0.0
    %1551 = vmatprep.subr.mxu0 0.0
    %1552 = vmatpush1.msra.mxu0 0.0
    %1553 = vmatprep.subr.mxu0 0.0
    %1554 = vmatpush1.msra.mxu0 0.0
    %1555 = vmatprep.subr.mxu0 0.0
    %1556 = vmatpush1.msra.mxu0 0.0
    %1557 = vmatprep.subr.mxu0 0.0
    %1558 = vmatpush1.msra.mxu0 0.0
    %1559 = vmatprep.subr.mxu0 0.0
    %1560 = vmatpush1.msra.mxu0 0.0
    %1561 = vmatprep.subr.mxu0 0.0
    %1562 = vmatpush1.msra.mxu0 0.0
    %1563 = vmatprep.subr.mxu0 0.0
    %1564 = vmatpush1.msra.mxu0 0.0
    %1565 = vmatprep.subr.mxu0 0.0
    %1566 = vmatpush1.msra.mxu0 0.0
    %1567 = vmatprep.subr.mxu0 0.0
    %1568 = vmatpush1.msra.mxu0 0.0
    %1569 = vmatprep.subr.mxu0 0.0
    %1570 = vmatpush1.msra.mxu0 0.0
    %1571 = vmatprep.subr.mxu0 0.0
    %1572 = vmatpush1.msra.mxu0 0.0
    %1573 = vmatprep.subr.mxu0 0.0
    %1574 = vmatpush1.msra.mxu0 0.0
    %1575 = vmatprep.subr.mxu0 0.0
    %1576 = vmatpush1.msra.mxu0 0.0
    %1577 = vmatprep.subr.mxu0 0.0
    %1578 = vmatpush1.msra.mxu0 0.0
    %1579 = vmatprep.subr.mxu0 0.0
    %1580 = vmatpush1.msra.mxu0 0.0
    %1581 = vmatprep.subr.mxu0 0.0
    %1582 = vmatpush1.msra.mxu0 0.0
    %1583 = vmatprep.subr.mxu0 0.0
    %1584 = vmatpush1.msra.mxu0 0.0
    %1585 = vmatprep.subr.mxu0 0.0
    %1586 = vmatpush1.msra.mxu0 0.0
    %1587 = vmatprep.mubr.f32.mxu0 0.0
    %1588 = vmatmul.mubr.f32.gmra.mrb[0].mxu0 %v1521
    %v1589 = vpop.f32.mrb[0].mxu0
    %v1590 = vadd.f32 0.0, %v1589
    %v1591 = vpop.f32.mrb[0].mxu0
    %1592 = vdwg.mxu0
    %1595 = vrot.lane.b32.xlu0 %v854, 8
    %v1596 = vpop.permute.xlu0 %1595
    %1597 = vrot.lane.b32.xlu0 %v930, 8
    %v1598 = vpop.permute.xlu0 %1597
    %1603 = vrot.lane.b32.xlu0 %v1184, 16
    %v1604 = vpop.permute.xlu0 %1603
    %1605 = vrot.lane.b32.xlu0 %v1260, 16
    %v1606 = vpop.permute.xlu0 %1605
    %1611 = vrot.lane.b32.xlu0 %v1514, 24
    %v1612 = vpop.permute.xlu0 %1611
    %1613 = vrot.lane.b32.xlu0 %v1590, 24
    %v1614 = vpop.permute.xlu0 %1613
    %v1617 = vsel %vm276, %v524, %v1596
    %v1618 = vsel %vm276, %v600, %v1598
    %vm1619 = vcmask 130048
    %v1620 = vsel %vm1619, %v1617, %v1604
    %v1621 = vsel %vm1619, %v1618, %v1606
    %vm1622 = vcmask 195584
    %v1623 = vsel %vm1622, %v1620, %v1612
    %v1624 = vsel %vm1622, %v1621, %v1614
    %v1625 = vadd.f32 %v1623, %v85
    %v1626 = vadd.f32 %v1624, %v86
    %v1627 = vsel %vm100, %v1625, 0.0
    %1628 = vadd.xlane.f32.xlu0 %v1627
    %v1629 = vpop.xlane.xlu0 %1628
    %v1630 = vsel %vm100, %v1626, 0.0
    %1631 = vadd.xlane.f32.xlu0 %v1630
    %v1632 = vpop.xlane.xlu0 %1631
    %v1633 = vrcp.pop 32.0
    %v1634 = vmul.f32 %v1629, %v1633
    %v1635 = vmul.f32 %v1632, %v1633
    %v1636 = vsub.f32 %v1625, %v1634
    %v1637 = vsub.f32 %v1626, %v1635
    %v1638 = vmul.f32 %v1636, %v1636
    %v1639 = vmul.f32 %v1637, %v1637
    %v1640 = vsel %vm100, %v1638, 0.0
    %1641 = vadd.xlane.f32.xlu0 %v1640
    %v1642 = vpop.xlane.xlu0 %1641
    %v1643 = vsel %vm100, %v1639, 0.0
    %1644 = vadd.xlane.f32.xlu0 %v1643
    %v1645 = vpop.xlane.xlu0 %1644
    %v1646 = vmul.f32 %v1642, %v1633
    %v1647 = vmul.f32 %v1645, %v1633
    %v1648 = vadd.f32 %v1646, 1e-05
    %v1649 = vadd.f32 %v1647, 1e-05
    %v1650 = vrsqrt.pop %v1648
    %v1651 = vrsqrt.pop %v1649
    %v1652 = vmul.f32 %v1636, %v1650
    %v1653 = vmul.f32 %v1637, %v1651
    %v1654 = vld [vmem:[%s6] sm:$0x1]
    %v1656 = vlaneseq
    %v1657 = vshrl.u32 %v1656, 7
    %v1658 = vsub.s32 0, %v1657
    %v1659 = vrot.slane %v1654, %v1658
    %v1661 = vmul.f32 %v1652, %v1659
    %v1662 = vmul.f32 %v1653, %v1659
    %v1663 = vld [vmem:[%s7] sm:$0x1]
    %v1665 = vlaneseq
    %v1666 = vshrl.u32 %v1665, 7
    %v1667 = vsub.s32 0, %v1666
    %v1668 = vrot.slane %v1663, %v1667
    %v1670 = vadd.f32 %v1661, %v1668
    %v1671 = vadd.f32 %v1662, %v1668
    %1672 = vst.msk [vmem:[#allocation10] sm:$0xff] %vm100, %v1670
    %1673 = vst.msk [vmem:[#allocation10 + $0x8] sm:$0xff] %vm100, %v1671
    // Predicated region
    $region50: #{tpu_custom_call.1} parent=1 // pred_check
      _
    $region51: #{tpu_custom_call.1} parent=1 // pred_check_branch
      %1675 = sbr.rel (0) target = $region53
    $region52: #{tpu_custom_call.1} parent=1 // pred_region
      %s1677 = ssub.s32 256, 256
      %1678 = vsyncadd [#allocation4], %s1677
      %s1679 = sshll.u32 [#allocation10], 4
      %s1680 = int_to_ptr.vmem [resolvable:$true] %s1679
      %1685 = dma.vmem_to_hbm [thread:$0]  %s1680, 256, %s8, [#allocation4], 128, 128, 8
    $region53: #{tpu_custom_call.1} parent=1 // pred_fallthru
      _
    // Predicated region
    $region54: #{tpu_custom_call.1} parent=1 // pred_check
      _
    $region55: #{tpu_custom_call.1} parent=1 // pred_check_branch
      %1687 = sbr.rel (0) target = $region57
    $region56: #{tpu_custom_call.1} parent=1 // pred_region
      %1688 = dma.done [#allocation4], 256
    $region57: #{tpu_custom_call.1} parent=1 // pred_fallthru
      _
    %1689 = vsyncpa [#allocation3], 1
    %1690 = vsyncpa [#allocation6], 1
    %1691 = vsyncpa [#allocation9], 1
    %1692 = vsyncpa [#allocation4], 1

// kernel: tpu_custom_call.1
$region0: #{tpu_custom_call.1}
  #allocation0 [shape = 'u32[]', space=smem, size = 0x4, offset = 0x4, fixed_abs, tag = 'smem constant byte address 0x4 - core index']
  #allocation1 [shape = 'u32[144,128]{1,0:T(1,128)}', space=vmem, size = 0x12000, scoped, tag = 'internal scratch']
  %s0 = inlined_call_operand.hbm [shape: f32[2,8,32], index: 0, kind: input, shape index: {}]
  %s1 = inlined_call_operand.hbm [shape: f32[2,8,32], index: 1, kind: input, shape index: {}]
  %s2 = inlined_call_operand.hbm [shape: f32[32,32], index: 2, kind: input, shape index: {}]
  %s3 = inlined_call_operand.vmem [shape: f32[1,32], index: 3, kind: input, shape index: {}]
  %s4 = inlined_call_operand.hbm [shape: f32[32,64], index: 4, kind: input, shape index: {}]
  %s5 = inlined_call_operand.vmem [shape: f32[1,64], index: 5, kind: input, shape index: {}]
  %s6 = inlined_call_operand.vmem [shape: f32[1,32], index: 6, kind: input, shape index: {}]
  %s7 = inlined_call_operand.vmem [shape: f32[1,32], index: 7, kind: input, shape index: {}]
  %s8 = inlined_call_operand.hbm [shape: f32[2,8,32], index: 8, kind: output, shape index: {}]
  %s9 = sld [smem:[#allocation0]]
  $region58: #{tpu_custom_call.1} parent=0
    _
  %s11 = ssub.s32 1, %s9
  %s12 = scalar_select 0, %s11, %s9
  $region1: #{tpu_custom_call.1} parent=0
    #allocation2 [shape = 'u8[8192]{0}', space=vmem, size = 0x2000, scoped, tag = 'input window, operand 0, single buffered']
    #allocation3 [shape = 's32[1]{0}', space=sflag, size = 0x4, scoped, tag = 'scoped memory for tpu_custom_call.1']
    #allocation4 [shape = 's32[1]{0}', space=sflag, size = 0x4, scoped, tag = 'scoped memory for tpu_custom_call.1']
    #allocation5 [shape = 'u8[8192]{0}', space=vmem, size = 0x2000, scoped, tag = 'input window, operand 1, single buffered']
    #allocation6 [shape = 's32[1]{0}', space=sflag, size = 0x4, scoped, tag = 'scoped memory for tpu_custom_call.1']
    #allocation7 [shape = 'u8[16384]{0}', space=vmem, size = 0x4000, scoped, tag = 'input window, operand 2, single buffered']
    #allocation8 [shape = 'u8[16384]{0}', space=vmem, size = 0x4000, scoped, tag = 'input window, operand 4, single buffered']
    #allocation9 [shape = 's32[1]{0}', space=sflag, size = 0x4, scoped, tag = 'scoped memory for tpu_custom_call.1']
    #allocation10 [shape = 'u8[8192]{0}', space=vmem, size = 0x2000, scoped, tag = 'output window, operand 0, single buffered']
    %13 = vsyncpa [#allocation3], 0
    %14 = vsyncpa [#allocation6], 0
    %15 = vsyncpa [#allocation9], 0
    %16 = vsyncpa [#allocation4], 0
    // Predicated region
    $region2: #{tpu_custom_call.1} parent=1 // pred_check
      _
    $region3: #{tpu_custom_call.1} parent=1 // pred_check_branch
      %18 = sbr.rel (0) target = $region5
    $region4: #{tpu_custom_call.1} parent=1 // pred_region
      %s20 = ssub.s32 256, 256
      %21 = vsyncadd [#allocation3], %s20
      %s22 = sshll.u32 [#allocation2], 4
      %s23 = int_to_ptr.vmem [resolvable:$true] %s22
      %28 = dma.hbm_to_vmem [thread:$0]  %s0, 256, %s23, [#allocation3], 128, 128, 8
    $region5: #{tpu_custom_call.1} parent=1 // pred_fallthru
      _
    // Predicated region
    $region6: #{tpu_custom_call.1} parent=1 // pred_check
      _
    $region7: #{tpu_custom_call.1} parent=1 // pred_check_branch
      %30 = sbr.rel (0) target = $region9
    $region8: #{tpu_custom_call.1} parent=1 // pred_region
      %s32 = ssub.s32 256, 256
      %33 = vsyncadd [#allocation6], %s32
      %s34 = sshll.u32 [#allocation5], 4
      %s35 = int_to_ptr.vmem [resolvable:$true] %s34
      %40 = dma.hbm_to_vmem [thread:$0]  %s1, 256, %s35, [#allocation6], 128, 128, 8
    $region9: #{tpu_custom_call.1} parent=1 // pred_fallthru
      _
    // Predicated region
    $region10: #{tpu_custom_call.1} parent=1 // pred_check
      _
    $region11: #{tpu_custom_call.1} parent=1 // pred_check_branch
      %42 = sbr.rel (0) target = $region13
    $region12: #{tpu_custom_call.1} parent=1 // pred_region
      %s44 = ssub.s32 512, 512
      %45 = vsyncadd [#allocation6], %s44
      %s46 = sshll.u32 [#allocation7], 4
      %s47 = int_to_ptr.vmem [resolvable:$true] %s46
      %52 = dma.hbm_to_vmem [thread:$0]  %s2, 512, %s47, [#allocation6], 128, 128, 8
    $region13: #{tpu_custom_call.1} parent=1 // pred_fallthru
      _
    // Predicated region
    $region14: #{tpu_custom_call.1} parent=1 // pred_check
      _
    $region15: #{tpu_custom_call.1} parent=1 // pred_check_branch
      %54 = sbr.rel (0) target = $region17
    $region16: #{tpu_custom_call.1} parent=1 // pred_region
      _
    $region17: #{tpu_custom_call.1} parent=1 // pred_fallthru
      _
    // Predicated region
    $region18: #{tpu_custom_call.1} parent=1 // pred_check
      _
    $region19: #{tpu_custom_call.1} parent=1 // pred_check_branch
      %56 = sbr.rel (0) target = $region21
    $region20: #{tpu_custom_call.1} parent=1 // pred_region
      %s58 = ssub.s32 512, 512
      %59 = vsyncadd [#allocation9], %s58
      %s60 = sshll.u32 [#allocation8], 4
      %s61 = int_to_ptr.vmem [resolvable:$true] %s60
      %66 = dma.hbm_to_vmem [thread:$0]  %s4, 512, %s61, [#allocation9], 128, 128, 8
    $region21: #{tpu_custom_call.1} parent=1 // pred_fallthru
      _
    // Predicated region
    $region22: #{tpu_custom_call.1} parent=1 // pred_check
      _
    $region23: #{tpu_custom_call.1} parent=1 // pred_check_branch
      %68 = sbr.rel (0) target = $region25
    $region24: #{tpu_custom_call.1} parent=1 // pred_region
      _
    $region25: #{tpu_custom_call.1} parent=1 // pred_fallthru
      _
    // Predicated region
    $region26: #{tpu_custom_call.1} parent=1 // pred_check
      _
    $region27: #{tpu_custom_call.1} parent=1 // pred_check_branch
      %70 = sbr.rel (0) target = $region29
    $region28: #{tpu_custom_call.1} parent=1 // pred_region
      _
    $region29: #{tpu_custom_call.1} parent=1 // pred_fallthru
      _
    // Predicated region
    $region30: #{tpu_custom_call.1} parent=1 // pred_check
      _
    $region31: #{tpu_custom_call.1} parent=1 // pred_check_branch
      %72 = sbr.rel (0) target = $region33
    $region32: #{tpu_custom_call.1} parent=1 // pred_region
      _
    $region33: #{tpu_custom_call.1} parent=1 // pred_fallthru
      _
    // Predicated region
    $region34: #{tpu_custom_call.1} parent=1 // pred_check
      _
    $region35: #{tpu_custom_call.1} parent=1 // pred_check_branch
      %74 = sbr.rel (0) target = $region37
    $region36: #{tpu_custom_call.1} parent=1 // pred_region
      %75 = dma.done [#allocation3], 256
    $region37: #{tpu_custom_call.1} parent=1 // pred_fallthru
      _
    // Predicated region
    $region38: #{tpu_custom_call.1} parent=1 // pred_check
      _
    $region39: #{tpu_custom_call.1} parent=1 // pred_check_branch
      %77 = sbr.rel (0) target = $region41
    $region40: #{tpu_custom_call.1} parent=1 // pred_region
      %78 = dma.done [#allocation6], 256
    $region41: #{tpu_custom_call.1} parent=1 // pred_fallthru
      _
    // Predicated region
    $region42: #{tpu_custom_call.1} parent=1 // pred_check
      _
    $region43: #{tpu_custom_call.1} parent=1 // pred_check_branch
      %80 = sbr.rel (0) target = $region45
    $region44: #{tpu_custom_call.1} parent=1 // pred_region
      %81 = dma.done [#allocation6], 512
    $region45: #{tpu_custom_call.1} parent=1 // pred_fallthru
      _
    // Predicated region
    $region46: #{tpu_custom_call.1} parent=1 // pred_check
      _
    $region47: #{tpu_custom_call.1} parent=1 // pred_check_branch
      %83 = sbr.rel (0) target = $region49
    $region48: #{tpu_custom_call.1} parent=1 // pred_region
      %84 = dma.done [#allocation9], 512
    $region49: #{tpu_custom_call.1} parent=1 // pred_fallthru
      _
    %v85 = vld [vmem:[#allocation2] sm:$0xff]
    %v86 = vld [vmem:[#allocation2 + $0x8] sm:$0xff]
    %v87 = vld [vmem:[#allocation5] sm:$0xff]
    %v88 = vld [vmem:[#allocation5 + $0x8] sm:$0xff]
    %v89 = vld [vmem:[#allocation7] sm:$0xff]
    %v90 = vld [vmem:[#allocation7 + $0x8] sm:$0xff]
    %v91 = vld [vmem:[#allocation7 + $0x10] sm:$0xff]
    %v92 = vld [vmem:[#allocation7 + $0x18] sm:$0xff]
    %v93 = vld [vmem:[%s3] sm:$0x1]
    %v95 = vlaneseq
    %v96 = vshrl.u32 %v95, 7
    %v97 = vsub.s32 0, %v96
    %v98 = vrot.slane %v93, %v97
    %vm100 = vcmask 261120
    %v102 = vsel %vm100, %v85, 0
    %v105 = vsel %vm100, %v86, 0
    %107 = vmatprep.subr.mxu0 0.0
    %108 = vmatpush1.msra.mxu0 %v89
    %109 = vmatprep.subr.mxu0 0.0
    %110 = vmatpush1.msra.mxu0 %v90
    %111 = vmatprep.subr.mxu0 0.0
    %112 = vmatpush1.msra.mxu0 %v91
    %113 = vmatprep.subr.mxu0 0.0
    %114 = vmatpush1.msra.mxu0 %v92
    %115 = vmatprep.subr.mxu0 0.0
    %116 = vmatpush1.msra.mxu0 0.0
    %117 = vmatprep.subr.mxu0 0.0
    %118 = vmatpush1.msra.mxu0 0.0
    %119 = vmatprep.subr.mxu0 0.0
    %120 = vmatpush1.msra.mxu0 0.0
    %121 = vmatprep.subr.mxu0 0.0
    %122 = vmatpush1.msra.mxu0 0.0
    %123 = vmatprep.subr.mxu0 0.0
    %124 = vmatpush1.msra.mxu0 0.0
    %125 = vmatprep.subr.mxu0 0.0
    %126 = vmatpush1.msra.mxu0 0.0
    %127 = vmatprep.subr.mxu0 0.0
    %128 = vmatpush1.msra.mxu0 0.0
    %129 = vmatprep.subr.mxu0 0.0
    %130 = vmatpush1.msra.mxu0 0.0
    %131 = vmatprep.subr.mxu0 0.0
    %132 = vmatpush1.msra.mxu0 0.0
    %133 = vmatprep.subr.mxu0 0.0
    %134 = vmatpush1.msra.mxu0 0.0
    %135 = vmatprep.subr.mxu0 0.0
    %136 = vmatpush1.msra.mxu0 0.0
    %137 = vmatprep.subr.mxu0 0.0
    %138 = vmatpush1.msra.mxu0 0.0
    %139 = vmatprep.subr.mxu0 0.0
    %140 = vmatpush1.msra.mxu0 0.0
    %141 = vmatprep.subr.mxu0 0.0
    %142 = vmatpush1.msra.mxu0 0.0
    %143 = vmatprep.subr.mxu0 0.0
    %144 = vmatpush1.msra.mxu0 0.0
    %145 = vmatprep.subr.mxu0 0.0
    %146 = vmatpush1.msra.mxu0 0.0
    %147 = vmatprep.subr.mxu0 0.0
    %148 = vmatpush1.msra.mxu0 0.0
    %149 = vmatprep.subr.mxu0 0.0
    %150 = vmatpush1.msra.mxu0 0.0
    %151 = vmatprep.subr.mxu0 0.0
    %152 = vmatpush1.msra.mxu0 0.0
    %153 = vmatprep.subr.mxu0 0.0
    %154 = vmatpush1.msra.mxu0 0.0
    %155 = vmatprep.subr.mxu0 0.0
    %156 = vmatpush1.msra.mxu0 0.0
    %157 = vmatprep.subr.mxu0 0.0
    %158 = vmatpush1.msra.mxu0 0.0
    %159 = vmatprep.subr.mxu0 0.0
    %160 = vmatpush1.msra.mxu0 0.0
    %161 = vmatprep.subr.mxu0 0.0
    %162 = vmatpush1.msra.mxu0 0.0
    %163 = vmatprep.subr.mxu0 0.0
    %164 = vmatpush1.msra.mxu0 0.0
    %165 = vmatprep.subr.mxu0 0.0
    %166 = vmatpush1.msra.mxu0 0.0
    %167 = vmatprep.subr.mxu0 0.0
    %168 = vmatpush1.msra.mxu0 0.0
    %169 = vmatprep.subr.mxu0 0.0
    %170 = vmatpush1.msra.mxu0 0.0
    %171 = vmatprep.mubr.f32.mxu0 0.0
    %172 = vmatmul.mubr.f32.gmra.mrb[0].mxu0 %v102
    %v173 = vpop.f32.mrb[0].mxu0
    %v174 = vadd.f32 %v98, %v173
    %v175 = vpop.f32.mrb[0].mxu0
    %176 = vmatprep.mubr.f32.mxu0 0.0
    %177 = vmatmul.mubr.f32.gmra.mrb[0].mxu0 %v105
    %v178 = vpop.f32.mrb[0].mxu0
    %v179 = vadd.f32 %v98, %v178
    %v180 = vpop.f32.mrb[0].mxu0
    %181 = vdwg.mxu0
    %v182 = vld [vmem:[#allocation8] sm:$0xff]
    %v183 = vld [vmem:[#allocation8 + $0x8] sm:$0xff]
    %v184 = vld [vmem:[#allocation8 + $0x10] sm:$0xff]
    %v185 = vld [vmem:[#allocation8 + $0x18] sm:$0xff]
    %v186 = vld [vmem:[%s5] sm:$0x1]
    %v188 = vlaneseq
    %v189 = vshrl.u32 %v188, 7
    %v190 = vsub.s32 0, %v189
    %v191 = vrot.slane %v186, %v190
    %v194 = vsel %vm100, %v87, 0
    %v197 = vsel %vm100, %v88, 0
    %199 = vmatprep.subr.mxu0 0.0
    %200 = vmatpush1.msra.mxu0 %v182
    %201 = vmatprep.subr.mxu0 0.0
    %202 = vmatpush1.msra.mxu0 %v183
    %203 = vmatprep.subr.mxu0 0.0
    %204 = vmatpush1.msra.mxu0 %v184
    %205 = vmatprep.subr.mxu0 0.0
    %206 = vmatpush1.msra.mxu0 %v185
    %207 = vmatprep.subr.mxu0 0.0
    %208 = vmatpush1.msra.mxu0 0.0
    %209 = vmatprep.subr.mxu0 0.0
    %210 = vmatpush1.msra.mxu0 0.0
    %211 = vmatprep.subr.mxu0 0.0
    %212 = vmatpush1.msra.mxu0 0.0
    %213 = vmatprep.subr.mxu0 0.0
    %214 = vmatpush1.msra.mxu0 0.0
    %215 = vmatprep.subr.mxu0 0.0
    %216 = vmatpush1.msra.mxu0 0.0
    %217 = vmatprep.subr.mxu0 0.0
    %218 = vmatpush1.msra.mxu0 0.0
    %219 = vmatprep.subr.mxu0 0.0
    %220 = vmatpush1.msra.mxu0 0.0
    %221 = vmatprep.subr.mxu0 0.0
    %222 = vmatpush1.msra.mxu0 0.0
    %223 = vmatprep.subr.mxu0 0.0
    %224 = vmatpush1.msra.mxu0 0.0
    %225 = vmatprep.subr.mxu0 0.0
    %226 = vmatpush1.msra.mxu0 0.0
    %227 = vmatprep.subr.mxu0 0.0
    %228 = vmatpush1.msra.mxu0 0.0
    %229 = vmatprep.subr.mxu0 0.0
    %230 = vmatpush1.msra.mxu0 0.0
    %231 = vmatprep.subr.mxu0 0.0
    %232 = vmatpush1.msra.mxu0 0.0
    %233 = vmatprep.subr.mxu0 0.0
    %234 = vmatpush1.msra.mxu0 0.0
    %235 = vmatprep.subr.mxu0 0.0
    %236 = vmatpush1.msra.mxu0 0.0
    %237 = vmatprep.subr.mxu0 0.0
    %238 = vmatpush1.msra.mxu0 0.0
    %239 = vmatprep.subr.mxu0 0.0
    %240 = vmatpush1.msra.mxu0 0.0
    %241 = vmatprep.subr.mxu0 0.0
    %242 = vmatpush1.msra.mxu0 0.0
    %243 = vmatprep.subr.mxu0 0.0
    %244 = vmatpush1.msra.mxu0 0.0
    %245 = vmatprep.subr.mxu0 0.0
    %246 = vmatpush1.msra.mxu0 0.0
    %247 = vmatprep.subr.mxu0 0.0
    %248 = vmatpush1.msra.mxu0 0.0
    %249 = vmatprep.subr.mxu0 0.0
    %250 = vmatpush1.msra.mxu0 0.0
    %251 = vmatprep.subr.mxu0 0.0
    %252 = vmatpush1.msra.mxu0 0.0
    %253 = vmatprep.subr.mxu0 0.0
    %254 = vmatpush1.msra.mxu0 0.0
    %255 = vmatprep.subr.mxu0 0.0
    %256 = vmatpush1.msra.mxu0 0.0
    %257 = vmatprep.subr.mxu0 0.0
    %258 = vmatpush1.msra.mxu0 0.0
    %259 = vmatprep.subr.mxu0 0.0
    %260 = vmatpush1.msra.mxu0 0.0
    %261 = vmatprep.subr.mxu0 0.0
    %262 = vmatpush1.msra.mxu0 0.0
    %263 = vmatprep.mubr.f32.mxu0 0.0
    %264 = vmatmul.mubr.f32.gmra.mrb[0].mxu0 %v194
    %v265 = vpop.f32.mrb[0].mxu0
    %v266 = vadd.f32 %v191, %v265
    %v267 = vpop.f32.mrb[0].mxu0
    %268 = vmatprep.mubr.f32.mxu0 0.0
    %269 = vmatmul.mubr.f32.gmra.mrb[0].mxu0 %v197
    %v270 = vpop.f32.mrb[0].mxu0
    %v271 = vadd.f32 %v191, %v270
    %v272 = vpop.f32.mrb[0].mxu0
    %273 = vdwg.mxu0
    %v274 = vmul.f32 %v174, 0.35355338
    %v275 = vmul.f32 %v179, 0.35355338
    %vm276 = vcmask 64512
    %v278 = vsel %vm276, %v274, 0
    %v281 = vsel %vm276, %v266, 0
    %283 = vmatprep.subr.mxu0 0.0
    %284 = vmatpush1.xpose.msra.mxu0 %v281
    %285 = vmatprep.subr.mxu0 0.0
    %286 = vmatpush1.xpose.msra.mxu0 0.0
    %287 = vmatprep.subr.mxu0 0.0
    %288 = vmatpush1.xpose.msra.mxu0 0.0
    %289 = vmatprep.subr.mxu0 0.0
    %290 = vmatpush1.xpose.msra.mxu0 0.0
    %291 = vmatprep.subr.mxu0 0.0
    %292 = vmatpush1.xpose.msra.mxu0 0.0
    %293 = vmatprep.subr.mxu0 0.0
    %294 = vmatpush1.xpose.msra.mxu0 0.0
    %295 = vmatprep.subr.mxu0 0.0
    %296 = vmatpush1.xpose.msra.mxu0 0.0
    %297 = vmatprep.subr.mxu0 0.0
    %298 = vmatpush1.xpose.msra.mxu0 0.0
    %299 = vmatprep.subr.mxu0 0.0
    %300 = vmatpush1.xpose.msra.mxu0 0.0
    %301 = vmatprep.subr.mxu0 0.0
    %302 = vmatpush1.xpose.msra.mxu0 0.0
    %303 = vmatprep.subr.mxu0 0.0
    %304 = vmatpush1.xpose.msra.mxu0 0.0
    %305 = vmatprep.subr.mxu0 0.0
    %306 = vmatpush1.xpose.msra.mxu0 0.0
    %307 = vmatprep.subr.mxu0 0.0
    %308 = vmatpush1.xpose.msra.mxu0 0.0
    %309 = vmatprep.subr.mxu0 0.0
    %310 = vmatpush1.xpose.msra.mxu0 0.0
    %311 = vmatprep.subr.mxu0 0.0
    %312 = vmatpush1.xpose.msra.mxu0 0.0
    %313 = vmatprep.subr.mxu0 0.0
    %314 = vmatpush1.xpose.msra.mxu0 0.0
    %315 = vmatprep.subr.mxu0 0.0
    %316 = vmatpush1.xpose.msra.mxu0 0.0
    %317 = vmatprep.subr.mxu0 0.0
    %318 = vmatpush1.xpose.msra.mxu0 0.0
    %319 = vmatprep.subr.mxu0 0.0
    %320 = vmatpush1.xpose.msra.mxu0 0.0
    %321 = vmatprep.subr.mxu0 0.0
    %322 = vmatpush1.xpose.msra.mxu0 0.0
    %323 = vmatprep.subr.mxu0 0.0
    %324 = vmatpush1.xpose.msra.mxu0 0.0
    %325 = vmatprep.subr.mxu0 0.0
    %326 = vmatpush1.xpose.msra.mxu0 0.0
    %327 = vmatprep.subr.mxu0 0.0
    %328 = vmatpush1.xpose.msra.mxu0 0.0
    %329 = vmatprep.subr.mxu0 0.0
    %330 = vmatpush1.xpose.msra.mxu0 0.0
    %331 = vmatprep.subr.mxu0 0.0
    %332 = vmatpush1.xpose.msra.mxu0 0.0
    %333 = vmatprep.subr.mxu0 0.0
    %334 = vmatpush1.xpose.msra.mxu0 0.0
    %335 = vmatprep.subr.mxu0 0.0
    %336 = vmatpush1.xpose.msra.mxu0 0.0
    %337 = vmatprep.subr.mxu0 0.0
    %338 = vmatpush1.xpose.msra.mxu0 0.0
    %339 = vmatprep.subr.mxu0 0.0
    %340 = vmatpush1.xpose.msra.mxu0 0.0
    %341 = vmatprep.subr.mxu0 0.0
    %342 = vmatpush1.xpose.msra.mxu0 0.0
    %343 = vmatprep.subr.mxu0 0.0
    %344 = vmatpush1.xpose.msra.mxu0 0.0
    %345 = vmatprep.subr.mxu0 0.0
    %346 = vmatpush1.xpose.msra.mxu0 0.0
    %347 = vmatprep.mubr.f32.mxu0 0.0
    %348 = vmatmul.mubr.f32.gmra.mrb[0].mxu0 %v278
    %v349 = vpop.f32.mrb[0].mxu0
    %v350 = vadd.f32 0.0, %v349
    %v351 = vpop.f32.mrb[0].mxu0
    %352 = vdwg.mxu0
    %v354 = vsel %vm276, %v275, 0
    %v357 = vsel %vm276, %v271, 0
    %359 = vmatprep.subr.mxu0 0.0
    %360 = vmatpush1.xpose.msra.mxu0 %v357
    %361 = vmatprep.subr.mxu0 0.0
    %362 = vmatpush1.xpose.msra.mxu0 0.0
    %363 = vmatprep.subr.mxu0 0.0
    %364 = vmatpush1.xpose.msra.mxu0 0.0
    %365 = vmatprep.subr.mxu0 0.0
    %366 = vmatpush1.xpose.msra.mxu0 0.0
    %367 = vmatprep.subr.mxu0 0.0
    %368 = vmatpush1.xpose.msra.mxu0 0.0
    %369 = vmatprep.subr.mxu0 0.0
    %370 = vmatpush1.xpose.msra.mxu0 0.0
    %371 = vmatprep.subr.mxu0 0.0
    %372 = vmatpush1.xpose.msra.mxu0 0.0
    %373 = vmatprep.subr.mxu0 0.0
    %374 = vmatpush1.xpose.msra.mxu0 0.0
    %375 = vmatprep.subr.mxu0 0.0
    %376 = vmatpush1.xpose.msra.mxu0 0.0
    %377 = vmatprep.subr.mxu0 0.0
    %378 = vmatpush1.xpose.msra.mxu0 0.0
    %379 = vmatprep.subr.mxu0 0.0
    %380 = vmatpush1.xpose.msra.mxu0 0.0
    %381 = vmatprep.subr.mxu0 0.0
    %382 = vmatpush1.xpose.msra.mxu0 0.0
    %383 = vmatprep.subr.mxu0 0.0
    %384 = vmatpush1.xpose.msra.mxu0 0.0
    %385 = vmatprep.subr.mxu0 0.0
    %386 = vmatpush1.xpose.msra.mxu0 0.0
    %387 = vmatprep.subr.mxu0 0.0
    %388 = vmatpush1.xpose.msra.mxu0 0.0
    %389 = vmatprep.subr.mxu0 0.0
    %390 = vmatpush1.xpose.msra.mxu0 0.0
    %391 = vmatprep.subr.mxu0 0.0
    %392 = vmatpush1.xpose.msra.mxu0 0.0
    %393 = vmatprep.subr.mxu0 0.0
    %394 = vmatpush1.xpose.msra.mxu0 0.0
    %395 = vmatprep.subr.mxu0 0.0
    %396 = vmatpush1.xpose.msra.mxu0 0.0
    %397 = vmatprep.subr.mxu0 0.0
    %398 = vmatpush1.xpose.msra.mxu0 0.0
    %399 = vmatprep.subr.mxu0 0.0
    %400 = vmatpush1.xpose.msra.mxu0 0.0
    %401 = vmatprep.subr.mxu0 0.0
    %402 = vmatpush1.xpose.msra.mxu0 0.0
    %403 = vmatprep.subr.mxu0 0.0
    %404 = vmatpush1.xpose.msra.mxu0 0.0
    %405 = vmatprep.subr.mxu0 0.0
    %406 = vmatpush1.xpose.msra.mxu0 0.0
    %407 = vmatprep.subr.mxu0 0.0
    %408 = vmatpush1.xpose.msra.mxu0 0.0
    %409 = vmatprep.subr.mxu0 0.0
    %410 = vmatpush1.xpose.msra.mxu0 0.0
    %411 = vmatprep.subr.mxu0 0.0
    %412 = vmatpush1.xpose.msra.mxu0 0.0
    %413 = vmatprep.subr.mxu0 0.0
    %414 = vmatpush1.xpose.msra.mxu0 0.0
    %415 = vmatprep.subr.mxu0 0.0
    %416 = vmatpush1.xpose.msra.mxu0 0.0
    %417 = vmatprep.subr.mxu0 0.0
    %418 = vmatpush1.xpose.msra.mxu0 0.0
    %419 = vmatprep.subr.mxu0 0.0
    %420 = vmatpush1.xpose.msra.mxu0 0.0
    %421 = vmatprep.subr.mxu0 0.0
    %422 = vmatpush1.xpose.msra.mxu0 0.0
    %423 = vmatprep.mubr.f32.mxu0 0.0
    %424 = vmatmul.mubr.f32.gmra.mrb[0].mxu0 %v354
    %v425 = vpop.f32.mrb[0].mxu0
    %v426 = vadd.f32 0.0, %v425
    %v427 = vpop.f32.mrb[0].mxu0
    %428 = vdwg.mxu0
    %v429 = vsel %vm276, %v350, -inf
    %430 = vmax.xlane.f32.xlu0 %v429
    %v431 = vpop.xlane.xlu0 %430
    %v432 = vsel %vm276, %v426, -inf
    %433 = vmax.xlane.f32.xlu0 %v432
    %v434 = vpop.xlane.xlu0 %433
    %v435 = vsub.f32 %v350, %v431
    %v436 = vsub.f32 %v426, %v434
    %v437 = vmul.f32 %v435, 1.442695
    %v438 = vpow.pop %v437
    %v439 = vmul.f32 %v436, 1.442695
    %v440 = vpow.pop %v439
    %v441 = vsel %vm276, %v438, 0.0
    %442 = vadd.xlane.f32.xlu0 %v441
    %v443 = vpop.xlane.xlu0 %442
    %v444 = vsel %vm276, %v440, 0.0
    %445 = vadd.xlane.f32.xlu0 %v444
    %v446 = vpop.xlane.xlu0 %445
    %v447 = vrcp.pop %v443
    %v448 = vmul.f32 %v438, %v447
    %v449 = vrcp.pop %v446
    %v450 = vmul.f32 %v440, %v449
    %451 = vrot.lane.b32.xlu0 %v266, 96
    %v452 = vpop.permute.xlu0 %451
    %v455 = vsel %vm276, %v448, 0
    %457 = vmatprep.subr.mxu0 0.0
    %458 = vmatpush1.msra.mxu0 %v452
    %459 = vmatprep.subr.mxu0 0.0
    %460 = vmatpush1.msra.mxu0 0.0
    %461 = vmatprep.subr.mxu0 0.0
    %462 = vmatpush1.msra.mxu0 0.0
    %463 = vmatprep.subr.mxu0 0.0
    %464 = vmatpush1.msra.mxu0 0.0
    %465 = vmatprep.subr.mxu0 0.0
    %466 = vmatpush1.msra.mxu0 0.0
    %467 = vmatprep.subr.mxu0 0.0
    %468 = vmatpush1.msra.mxu0 0.0
    %469 = vmatprep.subr.mxu0 0.0
    %470 = vmatpush1.msra.mxu0 0.0
    %471 = vmatprep.subr.mxu0 0.0
    %472 = vmatpush1.msra.mxu0 0.0
    %473 = vmatprep.subr.mxu0 0.0
    %474 = vmatpush1.msra.mxu0 0.0
    %475 = vmatprep.subr.mxu0 0.0
    %476 = vmatpush1.msra.mxu0 0.0
    %477 = vmatprep.subr.mxu0 0.0
    %478 = vmatpush1.msra.mxu0 0.0
    %479 = vmatprep.subr.mxu0 0.0
    %480 = vmatpush1.msra.mxu0 0.0
    %481 = vmatprep.subr.mxu0 0.0
    %482 = vmatpush1.msra.mxu0 0.0
    %483 = vmatprep.subr.mxu0 0.0
    %484 = vmatpush1.msra.mxu0 0.0
    %485 = vmatprep.subr.mxu0 0.0
    %486 = vmatpush1.msra.mxu0 0.0
    %487 = vmatprep.subr.mxu0 0.0
    %488 = vmatpush1.msra.mxu0 0.0
    %489 = vmatprep.subr.mxu0 0.0
    %490 = vmatpush1.msra.mxu0 0.0
    %491 = vmatprep.subr.mxu0 0.0
    %492 = vmatpush1.msra.mxu0 0.0
    %493 = vmatprep.subr.mxu0 0.0
    %494 = vmatpush1.msra.mxu0 0.0
    %495 = vmatprep.subr.mxu0 0.0
    %496 = vmatpush1.msra.mxu0 0.0
    %497 = vmatprep.subr.mxu0 0.0
    %498 = vmatpush1.msra.mxu0 0.0
    %499 = vmatprep.subr.mxu0 0.0
    %500 = vmatpush1.msra.mxu0 0.0
    %501 = vmatprep.subr.mxu0 0.0
    %502 = vmatpush1.msra.mxu0 0.0
    %503 = vmatprep.subr.mxu0 0.0
    %504 = vmatpush1.msra.mxu0 0.0
    %505 = vmatprep.subr.mxu0 0.0
    %506 = vmatpush1.msra.mxu0 0.0
    %507 = vmatprep.subr.mxu0 0.0
    %508 = vmatpush1.msra.mxu0 0.0
    %509 = vmatprep.subr.mxu0 0.0
    %510 = vmatpush1.msra.mxu0 0.0
    %511 = vmatprep.subr.mxu0 0.0
    %512 = vmatpush1.msra.mxu0 0.0
    %513 = vmatprep.subr.mxu0 0.0
    %514 = vmatpush1.msra.mxu0 0.0
    %515 = vmatprep.subr.mxu0 0.0
    %516 = vmatpush1.msra.mxu0 0.0
    %517 = vmatprep.subr.mxu0 0.0
    %518 = vmatpush1.msra.mxu0 0.0
    %519 = vmatprep.subr.mxu0 0.0
    %520 = vmatpush1.msra.mxu0 0.0
    %521 = vmatprep.mubr.f32.mxu0 0.0
    %522 = vmatmul.mubr.f32.gmra.mrb[0].mxu0 %v455
    %v523 = vpop.f32.mrb[0].mxu0
    %v524 = vadd.f32 0.0, %v523
    %v525 = vpop.f32.mrb[0].mxu0
    %526 = vdwg.mxu0
    %527 = vrot.lane.b32.xlu0 %v271, 96
    %v528 = vpop.permute.xlu0 %527
    %v531 = vsel %vm276, %v450, 0
    %533 = vmatprep.subr.mxu0 0.0
    %534 = vmatpush1.msra.mxu0 %v528
    %535 = vmatprep.subr.mxu0 0.0
    %536 = vmatpush1.msra.mxu0 0.0
    %537 = vmatprep.subr.mxu0 0.0
    %538 = vmatpush1.msra.mxu0 0.0
    %539 = vmatprep.subr.mxu0 0.0
    %540 = vmatpush1.msra.mxu0 0.0
    %541 = vmatprep.subr.mxu0 0.0
    %542 = vmatpush1.msra.mxu0 0.0
    %543 = vmatprep.subr.mxu0 0.0
    %544 = vmatpush1.msra.mxu0 0.0
    %545 = vmatprep.subr.mxu0 0.0
    %546 = vmatpush1.msra.mxu0 0.0
    %547 = vmatprep.subr.mxu0 0.0
    %548 = vmatpush1.msra.mxu0 0.0
    %549 = vmatprep.subr.mxu0 0.0
    %550 = vmatpush1.msra.mxu0 0.0
    %551 = vmatprep.subr.mxu0 0.0
    %552 = vmatpush1.msra.mxu0 0.0
    %553 = vmatprep.subr.mxu0 0.0
    %554 = vmatpush1.msra.mxu0 0.0
    %555 = vmatprep.subr.mxu0 0.0
    %556 = vmatpush1.msra.mxu0 0.0
    %557 = vmatprep.subr.mxu0 0.0
    %558 = vmatpush1.msra.mxu0 0.0
    %559 = vmatprep.subr.mxu0 0.0
    %560 = vmatpush1.msra.mxu0 0.0
    %561 = vmatprep.subr.mxu0 0.0
    %562 = vmatpush1.msra.mxu0 0.0
    %563 = vmatprep.subr.mxu0 0.0
    %564 = vmatpush1.msra.mxu0 0.0
    %565 = vmatprep.subr.mxu0 0.0
    %566 = vmatpush1.msra.mxu0 0.0
    %567 = vmatprep.subr.mxu0 0.0
    %568 = vmatpush1.msra.mxu0 0.0
    %569 = vmatprep.subr.mxu0 0.0
    %570 = vmatpush1.msra.mxu0 0.0
    %571 = vmatprep.subr.mxu0 0.0
    %572 = vmatpush1.msra.mxu0 0.0
    %573 = vmatprep.subr.mxu0 0.0
    %574 = vmatpush1.msra.mxu0 0.0
    %575 = vmatprep.subr.mxu0 0.0
    %576 = vmatpush1.msra.mxu0 0.0
    %577 = vmatprep.subr.mxu0 0.0
    %578 = vmatpush1.msra.mxu0 0.0
    %579 = vmatprep.subr.mxu0 0.0
    %580 = vmatpush1.msra.mxu0 0.0
    %581 = vmatprep.subr.mxu0 0.0
    %582 = vmatpush1.msra.mxu0 0.0
    %583 = vmatprep.subr.mxu0 0.0
    %584 = vmatpush1.msra.mxu0 0.0
    %585 = vmatprep.subr.mxu0 0.0
    %586 = vmatpush1.msra.mxu0 0.0
    %587 = vmatprep.subr.mxu0 0.0
    %588 = vmatpush1.msra.mxu0 0.0
    %589 = vmatprep.subr.mxu0 0.0
    %590 = vmatpush1.msra.mxu0 0.0
    %591 = vmatprep.subr.mxu0 0.0
    %592 = vmatpush1.msra.mxu0 0.0
    %593 = vmatprep.subr.mxu0 0.0
    %594 = vmatpush1.msra.mxu0 0.0
    %595 = vmatprep.subr.mxu0 0.0
    %596 = vmatpush1.msra.mxu0 0.0
    %597 = vmatprep.mubr.f32.mxu0 0.0
    %598 = vmatmul.mubr.f32.gmra.mrb[0].mxu0 %v531
    %v599 = vpop.f32.mrb[0].mxu0
    %v600 = vadd.f32 0.0, %v599
    %v601 = vpop.f32.mrb[0].mxu0
    %602 = vdwg.mxu0
    %603 = vrot.lane.b32.xlu0 %v274, 120
    %v604 = vpop.permute.xlu0 %603
    %605 = vrot.lane.b32.xlu0 %v266, 120
    %v606 = vpop.permute.xlu0 %605
    %v607 = vsel %vm276, %v604, 0
    %v609 = vsel %vm276, %v606, 0
    %611 = vmatprep.subr.mxu0 0.0
    %612 = vmatpush1.xpose.msra.mxu0 %v609
    %613 = vmatprep.subr.mxu0 0.0
    %614 = vmatpush1.xpose.msra.mxu0 0.0
    %615 = vmatprep.subr.mxu0 0.0
    %616 = vmatpush1.xpose.msra.mxu0 0.0
    %617 = vmatprep.subr.mxu0 0.0
    %618 = vmatpush1.xpose.msra.mxu0 0.0
    %619 = vmatprep.subr.mxu0 0.0
    %620 = vmatpush1.xpose.msra.mxu0 0.0
    %621 = vmatprep.subr.mxu0 0.0
    %622 = vmatpush1.xpose.msra.mxu0 0.0
    %623 = vmatprep.subr.mxu0 0.0
    %624 = vmatpush1.xpose.msra.mxu0 0.0
    %625 = vmatprep.subr.mxu0 0.0
    %626 = vmatpush1.xpose.msra.mxu0 0.0
    %627 = vmatprep.subr.mxu0 0.0
    %628 = vmatpush1.xpose.msra.mxu0 0.0
    %629 = vmatprep.subr.mxu0 0.0
    %630 = vmatpush1.xpose.msra.mxu0 0.0
    %631 = vmatprep.subr.mxu0 0.0
    %632 = vmatpush1.xpose.msra.mxu0 0.0
    %633 = vmatprep.subr.mxu0 0.0
    %634 = vmatpush1.xpose.msra.mxu0 0.0
    %635 = vmatprep.subr.mxu0 0.0
    %636 = vmatpush1.xpose.msra.mxu0 0.0
    %637 = vmatprep.subr.mxu0 0.0
    %638 = vmatpush1.xpose.msra.mxu0 0.0
    %639 = vmatprep.subr.mxu0 0.0
    %640 = vmatpush1.xpose.msra.mxu0 0.0
    %641 = vmatprep.subr.mxu0 0.0
    %642 = vmatpush1.xpose.msra.mxu0 0.0
    %643 = vmatprep.subr.mxu0 0.0
    %644 = vmatpush1.xpose.msra.mxu0 0.0
    %645 = vmatprep.subr.mxu0 0.0
    %646 = vmatpush1.xpose.msra.mxu0 0.0
    %647 = vmatprep.subr.mxu0 0.0
    %648 = vmatpush1.xpose.msra.mxu0 0.0
    %649 = vmatprep.subr.mxu0 0.0
    %650 = vmatpush1.xpose.msra.mxu0 0.0
    %651 = vmatprep.subr.mxu0 0.0
    %652 = vmatpush1.xpose.msra.mxu0 0.0
    %653 = vmatprep.subr.mxu0 0.0
    %654 = vmatpush1.xpose.msra.mxu0 0.0
    %655 = vmatprep.subr.mxu0 0.0
    %656 = vmatpush1.xpose.msra.mxu0 0.0
    %657 = vmatprep.subr.mxu0 0.0
    %658 = vmatpush1.xpose.msra.mxu0 0.0
    %659 = vmatprep.subr.mxu0 0.0
    %660 = vmatpush1.xpose.msra.mxu0 0.0
    %661 = vmatprep.subr.mxu0 0.0
    %662 = vmatpush1.xpose.msra.mxu0 0.0
    %663 = vmatprep.subr.mxu0 0.0
    %664 = vmatpush1.xpose.msra.mxu0 0.0
    %665 = vmatprep.subr.mxu0 0.0
    %666 = vmatpush1.xpose.msra.mxu0 0.0
    %667 = vmatprep.subr.mxu0 0.0
    %668 = vmatpush1.xpose.msra.mxu0 0.0
    %669 = vmatprep.subr.mxu0 0.0
    %670 = vmatpush1.xpose.msra.mxu0 0.0
    %671 = vmatprep.subr.mxu0 0.0
    %672 = vmatpush1.xpose.msra.mxu0 0.0
    %673 = vmatprep.subr.mxu0 0.0
    %674 = vmatpush1.xpose.msra.mxu0 0.0
    %675 = vmatprep.mubr.f32.mxu0 0.0
    %676 = vmatmul.mubr.f32.gmra.mrb[0].mxu0 %v607
    %v677 = vpop.f32.mrb[0].mxu0
    %v678 = vadd.f32 0.0, %v677
    %v679 = vpop.f32.mrb[0].mxu0
    %680 = vdwg.mxu0
    %681 = vrot.lane.b32.xlu0 %v275, 120
    %v682 = vpop.permute.xlu0 %681
    %683 = vrot.lane.b32.xlu0 %v271, 120
    %v684 = vpop.permute.xlu0 %683
    %v685 = vsel %vm276, %v682, 0
    %v687 = vsel %vm276, %v684, 0
    %689 = vmatprep.subr.mxu0 0.0
    %690 = vmatpush1.xpose.msra.mxu0 %v687
    %691 = vmatprep.subr.mxu0 0.0
    %692 = vmatpush1.xpose.msra.mxu0 0.0
    %693 = vmatprep.subr.mxu0 0.0
    %694 = vmatpush1.xpose.msra.mxu0 0.0
    %695 = vmatprep.subr.mxu0 0.0
    %696 = vmatpush1.xpose.msra.mxu0 0.0
    %697 = vmatprep.subr.mxu0 0.0
    %698 = vmatpush1.xpose.msra.mxu0 0.0
    %699 = vmatprep.subr.mxu0 0.0
    %700 = vmatpush1.xpose.msra.mxu0 0.0
    %701 = vmatprep.subr.mxu0 0.0
    %702 = vmatpush1.xpose.msra.mxu0 0.0
    %703 = vmatprep.subr.mxu0 0.0
    %704 = vmatpush1.xpose.msra.mxu0 0.0
    %705 = vmatprep.subr.mxu0 0.0
    %706 = vmatpush1.xpose.msra.mxu0 0.0
    %707 = vmatprep.subr.mxu0 0.0
    %708 = vmatpush1.xpose.msra.mxu0 0.0
    %709 = vmatprep.subr.mxu0 0.0
    %710 = vmatpush1.xpose.msra.mxu0 0.0
    %711 = vmatprep.subr.mxu0 0.0
    %712 = vmatpush1.xpose.msra.mxu0 0.0
    %713 = vmatprep.subr.mxu0 0.0
    %714 = vmatpush1.xpose.msra.mxu0 0.0
    %715 = vmatprep.subr.mxu0 0.0
    %716 = vmatpush1.xpose.msra.mxu0 0.0
    %717 = vmatprep.subr.mxu0 0.0
    %718 = vmatpush1.xpose.msra.mxu0 0.0
    %719 = vmatprep.subr.mxu0 0.0
    %720 = vmatpush1.xpose.msra.mxu0 0.0
    %721 = vmatprep.subr.mxu0 0.0
    %722 = vmatpush1.xpose.msra.mxu0 0.0
    %723 = vmatprep.subr.mxu0 0.0
    %724 = vmatpush1.xpose.msra.mxu0 0.0
    %725 = vmatprep.subr.mxu0 0.0
    %726 = vmatpush1.xpose.msra.mxu0 0.0
    %727 = vmatprep.subr.mxu0 0.0
    %728 = vmatpush1.xpose.msra.mxu0 0.0
    %729 = vmatprep.subr.mxu0 0.0
    %730 = vmatpush1.xpose.msra.mxu0 0.0
    %731 = vmatprep.subr.mxu0 0.0
    %732 = vmatpush1.xpose.msra.mxu0 0.0
    %733 = vmatprep.subr.mxu0 0.0
    %734 = vmatpush1.xpose.msra.mxu0 0.0
    %735 = vmatprep.subr.mxu0 0.0
    %736 = vmatpush1.xpose.msra.mxu0 0.0
    %737 = vmatprep.subr.mxu0 0.0
    %738 = vmatpush1.xpose.msra.mxu0 0.0
    %739 = vmatprep.subr.mxu0 0.0
    %740 = vmatpush1.xpose.msra.mxu0 0.0
    %741 = vmatprep.subr.mxu0 0.0
    %742 = vmatpush1.xpose.msra.mxu0 0.0
    %743 = vmatprep.subr.mxu0 0.0
    %744 = vmatpush1.xpose.msra.mxu0 0.0
    %745 = vmatprep.subr.mxu0 0.0
    %746 = vmatpush1.xpose.msra.mxu0 0.0
    %747 = vmatprep.subr.mxu0 0.0
    %748 = vmatpush1.xpose.msra.mxu0 0.0
    %749 = vmatprep.subr.mxu0 0.0
    %750 = vmatpush1.xpose.msra.mxu0 0.0
    %751 = vmatprep.subr.mxu0 0.0
    %752 = vmatpush1.xpose.msra.mxu0 0.0
    %753 = vmatprep.mubr.f32.mxu0 0.0
    %754 = vmatmul.mubr.f32.gmra.mrb[0].mxu0 %v685
    %v755 = vpop.f32.mrb[0].mxu0
    %v756 = vadd.f32 0.0, %v755
    %v757 = vpop.f32.mrb[0].mxu0
    %758 = vdwg.mxu0
    %v759 = vsel %vm276, %v678, -inf
    %760 = vmax.xlane.f32.xlu0 %v759
    %v761 = vpop.xlane.xlu0 %760
    %v762 = vsel %vm276, %v756, -inf
    %763 = vmax.xlane.f32.xlu0 %v762
    %v764 = vpop.xlane.xlu0 %763
    %v765 = vsub.f32 %v678, %v761
    %v766 = vsub.f32 %v756, %v764
    %v767 = vmul.f32 %v765, 1.442695
    %v768 = vpow.pop %v767
    %v769 = vmul.f32 %v766, 1.442695
    %v770 = vpow.pop %v769
    %v771 = vsel %vm276, %v768, 0.0
    %772 = vadd.xlane.f32.xlu0 %v771
    %v773 = vpop.xlane.xlu0 %772
    %v774 = vsel %vm276, %v770, 0.0
    %775 = vadd.xlane.f32.xlu0 %v774
    %v776 = vpop.xlane.xlu0 %775
    %v777 = vrcp.pop %v773
    %v778 = vmul.f32 %v768, %v777
    %v779 = vrcp.pop %v776
    %v780 = vmul.f32 %v770, %v779
    %781 = vrot.lane.b32.xlu0 %v266, 88
    %v782 = vpop.permute.xlu0 %781
    %v785 = vsel %vm276, %v778, 0
    %787 = vmatprep.subr.mxu0 0.0
    %788 = vmatpush1.msra.mxu0 %v782
    %789 = vmatprep.subr.mxu0 0.0
    %790 = vmatpush1.msra.mxu0 0.0
    %791 = vmatprep.subr.mxu0 0.0
    %792 = vmatpush1.msra.mxu0 0.0
    %793 = vmatprep.subr.mxu0 0.0
    %794 = vmatpush1.msra.mxu0 0.0
    %795 = vmatprep.subr.mxu0 0.0
    %796 = vmatpush1.msra.mxu0 0.0
    %797 = vmatprep.subr.mxu0 0.0
    %798 = vmatpush1.msra.mxu0 0.0
    %799 = vmatprep.subr.mxu0 0.0
    %800 = vmatpush1.msra.mxu0 0.0
    %801 = vmatprep.subr.mxu0 0.0
    %802 = vmatpush1.msra.mxu0 0.0
    %803 = vmatprep.subr.mxu0 0.0
    %804 = vmatpush1.msra.mxu0 0.0
    %805 = vmatprep.subr.mxu0 0.0
    %806 = vmatpush1.msra.mxu0 0.0
    %807 = vmatprep.subr.mxu0 0.0
    %808 = vmatpush1.msra.mxu0 0.0
    %809 = vmatprep.subr.mxu0 0.0
    %810 = vmatpush1.msra.mxu0 0.0
    %811 = vmatprep.subr.mxu0 0.0
    %812 = vmatpush1.msra.mxu0 0.0
    %813 = vmatprep.subr.mxu0 0.0
    %814 = vmatpush1.msra.mxu0 0.0
    %815 = vmatprep.subr.mxu0 0.0
    %816 = vmatpush1.msra.mxu0 0.0
    %817 = vmatprep.subr.mxu0 0.0
    %818 = vmatpush1.msra.mxu0 0.0
    %819 = vmatprep.subr.mxu0 0.0
    %820 = vmatpush1.msra.mxu0 0.0
    %821 = vmatprep.subr.mxu0 0.0
    %822 = vmatpush1.msra.mxu0 0.0
    %823 = vmatprep.subr.mxu0 0.0
    %824 = vmatpush1.msra.mxu0 0.0
    %825 = vmatprep.subr.mxu0 0.0
    %826 = vmatpush1.msra.mxu0 0.0
    %827 = vmatprep.subr.mxu0 0.0
    %828 = vmatpush1.msra.mxu0 0.0
    %829 = vmatprep.subr.mxu0 0.0
    %830 = vmatpush1.msra.mxu0 0.0
    %831 = vmatprep.subr.mxu0 0.0
    %832 = vmatpush1.msra.mxu0 0.0
    %833 = vmatprep.subr.mxu0 0.0
    %834 = vmatpush1.msra.mxu0 0.0
    %835 = vmatprep.subr.mxu0 0.0
    %836 = vmatpush1.msra.mxu0 0.0
    %837 = vmatprep.subr.mxu0 0.0
    %838 = vmatpush1.msra.mxu0 0.0
    %839 = vmatprep.subr.mxu0 0.0
    %840 = vmatpush1.msra.mxu0 0.0
    %841 = vmatprep.subr.mxu0 0.0
    %842 = vmatpush1.msra.mxu0 0.0
    %843 = vmatprep.subr.mxu0 0.0
    %844 = vmatpush1.msra.mxu0 0.0
    %845 = vmatprep.subr.mxu0 0.0
    %846 = vmatpush1.msra.mxu0 0.0
    %847 = vmatprep.subr.mxu0 0.0
    %848 = vmatpush1.msra.mxu0 0.0
    %849 = vmatprep.subr.mxu0 0.0
    %850 = vmatpush1.msra.mxu0 0.0
    %851 = vmatprep.mubr.f32.mxu0 0.0
    %852 = vmatmul.mubr.f32.gmra.mrb[0].mxu0 %v785
    %v853 = vpop.f32.mrb[0].mxu0
    %v854 = vadd.f32 0.0, %v853
    %v855 = vpop.f32.mrb[0].mxu0
    %856 = vdwg.mxu0
    %857 = vrot.lane.b32.xlu0 %v271, 88
    %v858 = vpop.permute.xlu0 %857
    %v861 = vsel %vm276, %v780, 0
    %863 = vmatprep.subr.mxu0 0.0
    %864 = vmatpush1.msra.mxu0 %v858
    %865 = vmatprep.subr.mxu0 0.0
    %866 = vmatpush1.msra.mxu0 0.0
    %867 = vmatprep.subr.mxu0 0.0
    %868 = vmatpush1.msra.mxu0 0.0
    %869 = vmatprep.subr.mxu0 0.0
    %870 = vmatpush1.msra.mxu0 0.0
    %871 = vmatprep.subr.mxu0 0.0
    %872 = vmatpush1.msra.mxu0 0.0
    %873 = vmatprep.subr.mxu0 0.0
    %874 = vmatpush1.msra.mxu0 0.0
    %875 = vmatprep.subr.mxu0 0.0
    %876 = vmatpush1.msra.mxu0 0.0
    %877 = vmatprep.subr.mxu0 0.0
    %878 = vmatpush1.msra.mxu0 0.0
    %879 = vmatprep.subr.mxu0 0.0
    %880 = vmatpush1.msra.mxu0 0.0
    %881 = vmatprep.subr.mxu0 0.0
    %882 = vmatpush1.msra.mxu0 0.0
    %883 = vmatprep.subr.mxu0 0.0
    %884 = vmatpush1.msra.mxu0 0.0
    %885 = vmatprep.subr.mxu0 0.0
    %886 = vmatpush1.msra.mxu0 0.0
    %887 = vmatprep.subr.mxu0 0.0
    %888 = vmatpush1.msra.mxu0 0.0
    %889 = vmatprep.subr.mxu0 0.0
    %890 = vmatpush1.msra.mxu0 0.0
    %891 = vmatprep.subr.mxu0 0.0
    %892 = vmatpush1.msra.mxu0 0.0
    %893 = vmatprep.subr.mxu0 0.0
    %894 = vmatpush1.msra.mxu0 0.0
    %895 = vmatprep.subr.mxu0 0.0
    %896 = vmatpush1.msra.mxu0 0.0
    %897 = vmatprep.subr.mxu0 0.0
    %898 = vmatpush1.msra.mxu0 0.0
    %899 = vmatprep.subr.mxu0 0.0
    %900 = vmatpush1.msra.mxu0 0.0
    %901 = vmatprep.subr.mxu0 0.0
    %902 = vmatpush1.msra.mxu0 0.0
    %903 = vmatprep.subr.mxu0 0.0
    %904 = vmatpush1.msra.mxu0 0.0
    %905 = vmatprep.subr.mxu0 0.0
    %906 = vmatpush1.msra.mxu0 0.0
    %907 = vmatprep.subr.mxu0 0.0
    %908 = vmatpush1.msra.mxu0 0.0
    %909 = vmatprep.subr.mxu0 0.0
    %910 = vmatpush1.msra.mxu0 0.0
    %911 = vmatprep.subr.mxu0 0.0
    %912 = vmatpush1.msra.mxu0 0.0
    %913 = vmatprep.subr.mxu0 0.0
    %914 = vmatpush1.msra.mxu0 0.0
    %915 = vmatprep.subr.mxu0 0.0
    %916 = vmatpush1.msra.mxu0 0.0
    %917 = vmatprep.subr.mxu0 0.0
    %918 = vmatpush1.msra.mxu0 0.0
    %919 = vmatprep.subr.mxu0 0.0
    %920 = vmatpush1.msra.mxu0 0.0
    %921 = vmatprep.subr.mxu0 0.0
    %922 = vmatpush1.msra.mxu0 0.0
    %923 = vmatprep.subr.mxu0 0.0
    %924 = vmatpush1.msra.mxu0 0.0
    %925 = vmatprep.subr.mxu0 0.0
    %926 = vmatpush1.msra.mxu0 0.0
    %927 = vmatprep.mubr.f32.mxu0 0.0
    %928 = vmatmul.mubr.f32.gmra.mrb[0].mxu0 %v861
    %v929 = vpop.f32.mrb[0].mxu0
    %v930 = vadd.f32 0.0, %v929
    %v931 = vpop.f32.mrb[0].mxu0
    %932 = vdwg.mxu0
    %933 = vrot.lane.b32.xlu0 %v274, 112
    %v934 = vpop.permute.xlu0 %933
    %935 = vrot.lane.b32.xlu0 %v266, 112
    %v936 = vpop.permute.xlu0 %935
    %v937 = vsel %vm276, %v934, 0
    %v939 = vsel %vm276, %v936, 0
    %941 = vmatprep.subr.mxu0 0.0
    %942 = vmatpush1.xpose.msra.mxu0 %v939
    %943 = vmatprep.subr.mxu0 0.0
    %944 = vmatpush1.xpose.msra.mxu0 0.0
    %945 = vmatprep.subr.mxu0 0.0
    %946 = vmatpush1.xpose.msra.mxu0 0.0
    %947 = vmatprep.subr.mxu0 0.0
    %948 = vmatpush1.xpose.msra.mxu0 0.0
    %949 = vmatprep.subr.mxu0 0.0
    %950 = vmatpush1.xpose.msra.mxu0 0.0
    %951 = vmatprep.subr.mxu0 0.0
    %952 = vmatpush1.xpose.msra.mxu0 0.0
    %953 = vmatprep.subr.mxu0 0.0
    %954 = vmatpush1.xpose.msra.mxu0 0.0
    %955 = vmatprep.subr.mxu0 0.0
    %956 = vmatpush1.xpose.msra.mxu0 0.0
    %957 = vmatprep.subr.mxu0 0.0
    %958 = vmatpush1.xpose.msra.mxu0 0.0
    %959 = vmatprep.subr.mxu0 0.0
    %960 = vmatpush1.xpose.msra.mxu0 0.0
    %961 = vmatprep.subr.mxu0 0.0
    %962 = vmatpush1.xpose.msra.mxu0 0.0
    %963 = vmatprep.subr.mxu0 0.0
    %964 = vmatpush1.xpose.msra.mxu0 0.0
    %965 = vmatprep.subr.mxu0 0.0
    %966 = vmatpush1.xpose.msra.mxu0 0.0
    %967 = vmatprep.subr.mxu0 0.0
    %968 = vmatpush1.xpose.msra.mxu0 0.0
    %969 = vmatprep.subr.mxu0 0.0
    %970 = vmatpush1.xpose.msra.mxu0 0.0
    %971 = vmatprep.subr.mxu0 0.0
    %972 = vmatpush1.xpose.msra.mxu0 0.0
    %973 = vmatprep.subr.mxu0 0.0
    %974 = vmatpush1.xpose.msra.mxu0 0.0
    %975 = vmatprep.subr.mxu0 0.0
    %976 = vmatpush1.xpose.msra.mxu0 0.0
    %977 = vmatprep.subr.mxu0 0.0
    %978 = vmatpush1.xpose.msra.mxu0 0.0
    %979 = vmatprep.subr.mxu0 0.0
    %980 = vmatpush1.xpose.msra.mxu0 0.0
    %981 = vmatprep.subr.mxu0 0.0
    %982 = vmatpush1.xpose.msra.mxu0 0.0
    %983 = vmatprep.subr.mxu0 0.0
    %984 = vmatpush1.xpose.msra.mxu0 0.0
    %985 = vmatprep.subr.mxu0 0.0
    %986 = vmatpush1.xpose.msra.mxu0 0.0
    %987 = vmatprep.subr.mxu0 0.0
    %988 = vmatpush1.xpose.msra.mxu0 0.0
    %989 = vmatprep.subr.mxu0 0.0
    %990 = vmatpush1.xpose.msra.mxu0 0.0
    %991 = vmatprep.subr.mxu0 0.0
    %992 = vmatpush1.xpose.msra.mxu0 0.0
    %993 = vmatprep.subr.mxu0 0.0
    %994 = vmatpush1.xpose.msra.mxu0 0.0
    %995 = vmatprep.subr.mxu0 0.0
    %996 = vmatpush1.xpose.msra.mxu0 0.0
    %997 = vmatprep.subr.mxu0 0.0
    %998 = vmatpush1.xpose.msra.mxu0 0.0
    %999 = vmatprep.subr.mxu0 0.0
    %1000 = vmatpush1.xpose.msra.mxu0 0.0
    %1001 = vmatprep.subr.mxu0 0.0
    %1002 = vmatpush1.xpose.msra.mxu0 0.0
    %1003 = vmatprep.subr.mxu0 0.0
    %1004 = vmatpush1.xpose.msra.mxu0 0.0
    %1005 = vmatprep.mubr.f32.mxu0 0.0
    %1006 = vmatmul.mubr.f32.gmra.mrb[0].mxu0 %v937
    %v1007 = vpop.f32.mrb[0].mxu0
    %v1008 = vadd.f32 0.0, %v1007
    %v1009 = vpop.f32.mrb[0].mxu0
    %1010 = vdwg.mxu0
    %1011 = vrot.lane.b32.xlu0 %v275, 112
    %v1012 = vpop.permute.xlu0 %1011
    %1013 = vrot.lane.b32.xlu0 %v271, 112
    %v1014 = vpop.permute.xlu0 %1013
    %v1015 = vsel %vm276, %v1012, 0
    %v1017 = vsel %vm276, %v1014, 0
    %1019 = vmatprep.subr.mxu0 0.0
    %1020 = vmatpush1.xpose.msra.mxu0 %v1017
    %1021 = vmatprep.subr.mxu0 0.0
    %1022 = vmatpush1.xpose.msra.mxu0 0.0
    %1023 = vmatprep.subr.mxu0 0.0
    %1024 = vmatpush1.xpose.msra.mxu0 0.0
    %1025 = vmatprep.subr.mxu0 0.0
    %1026 = vmatpush1.xpose.msra.mxu0 0.0
    %1027 = vmatprep.subr.mxu0 0.0
    %1028 = vmatpush1.xpose.msra.mxu0 0.0
    %1029 = vmatprep.subr.mxu0 0.0
    %1030 = vmatpush1.xpose.msra.mxu0 0.0
    %1031 = vmatprep.subr.mxu0 0.0
    %1032 = vmatpush1.xpose.msra.mxu0 0.0
    %1033 = vmatprep.subr.mxu0 0.0
    %1034 = vmatpush1.xpose.msra.mxu0 0.0
    %1035 = vmatprep.subr.mxu0 0.0
    %1036 = vmatpush1.xpose.msra.mxu0 0.0
    %1037 = vmatprep.subr.mxu0 0.0
    %1038 = vmatpush1.xpose.msra.mxu0 0.0
    %1039 = vmatprep.subr.mxu0 0.0
    %1040 = vmatpush1.xpose.msra.mxu0 0.0
    %1041 = vmatprep.subr.mxu0 0.0
    %1042 = vmatpush1.xpose.msra.mxu0 0.0
    %1043 = vmatprep.subr.mxu0 0.0
    %1044 = vmatpush1.xpose.msra.mxu0 0.0
    %1045 = vmatprep.subr.mxu0 0.0
    %1046 = vmatpush1.xpose.msra.mxu0 0.0
    %1047 = vmatprep.subr.mxu0 0.0
    %1048 = vmatpush1.xpose.msra.mxu0 0.0
    %1049 = vmatprep.subr.mxu0 0.0
    %1050 = vmatpush1.xpose.msra.mxu0 0.0
    %1051 = vmatprep.subr.mxu0 0.0
    %1052 = vmatpush1.xpose.msra.mxu0 0.0
    %1053 = vmatprep.subr.mxu0 0.0
    %1054 = vmatpush1.xpose.msra.mxu0 0.0
    %1055 = vmatprep.subr.mxu0 0.0
    %1056 = vmatpush1.xpose.msra.mxu0 0.0
    %1057 = vmatprep.subr.mxu0 0.0
    %1058 = vmatpush1.xpose.msra.mxu0 0.0
    %1059 = vmatprep.subr.mxu0 0.0
    %1060 = vmatpush1.xpose.msra.mxu0 0.0
    %1061 = vmatprep.subr.mxu0 0.0
    %1062 = vmatpush1.xpose.msra.mxu0 0.0
    %1063 = vmatprep.subr.mxu0 0.0
    %1064 = vmatpush1.xpose.msra.mxu0 0.0
    %1065 = vmatprep.subr.mxu0 0.0
    %1066 = vmatpush1.xpose.msra.mxu0 0.0
    %1067 = vmatprep.subr.mxu0 0.0
    %1068 = vmatpush1.xpose.msra.mxu0 0.0
    %1069 = vmatprep.subr.mxu0 0.0
    %1070 = vmatpush1.xpose.msra.mxu0 0.0
    %1071 = vmatprep.subr.mxu0 0.0
    %1072 = vmatpush1.xpose.msra.mxu0 0.0
    %1073 = vmatprep.subr.mxu0 0.0
    %1074 = vmatpush1.xpose.msra.mxu0 0.0
    %1075 = vmatprep.subr.mxu0 0.0
    %1076 = vmatpush1.xpose.msra.mxu0 0.0
    %1077 = vmatprep.subr.mxu0 0.0
    %1078 = vmatpush1.xpose.msra.mxu0 0.0
    %1079 = vmatprep.subr.mxu0 0.0
    %1080 = vmatpush1.xpose.msra.mxu0 0.0
    %1081 = vmatprep.subr.mxu0 0.0
    %1082 = vmatpush1.xpose.msra.mxu0 0.0
    %1083 = vmatprep.mubr.f32.mxu0 0.0
    %1084 = vmatmul.mubr.f32.gmra.mrb[0].mxu0 %v1015
    %v1085 = vpop.f32.mrb[0].mxu0
    %v1086 = vadd.f32 0.0, %v1085
    %v1087 = vpop.f32.mrb[0].mxu0
    %1088 = vdwg.mxu0
    %v1089 = vsel %vm276, %v1008, -inf
    %1090 = vmax.xlane.f32.xlu0 %v1089
    %v1091 = vpop.xlane.xlu0 %1090
    %v1092 = vsel %vm276, %v1086, -inf
    %1093 = vmax.xlane.f32.xlu0 %v1092
    %v1094 = vpop.xlane.xlu0 %1093
    %v1095 = vsub.f32 %v1008, %v1091
    %v1096 = vsub.f32 %v1086, %v1094
    %v1097 = vmul.f32 %v1095, 1.442695
    %v1098 = vpow.pop %v1097
    %v1099 = vmul.f32 %v1096, 1.442695
    %v1100 = vpow.pop %v1099
    %v1101 = vsel %vm276, %v1098, 0.0
    %1102 = vadd.xlane.f32.xlu0 %v1101
    %v1103 = vpop.xlane.xlu0 %1102
    %v1104 = vsel %vm276, %v1100, 0.0
    %1105 = vadd.xlane.f32.xlu0 %v1104
    %v1106 = vpop.xlane.xlu0 %1105
    %v1107 = vrcp.pop %v1103
    %v1108 = vmul.f32 %v1098, %v1107
    %v1109 = vrcp.pop %v1106
    %v1110 = vmul.f32 %v1100, %v1109
    %1111 = vrot.lane.b32.xlu0 %v266, 80
    %v1112 = vpop.permute.xlu0 %1111
    %v1115 = vsel %vm276, %v1108, 0
    %1117 = vmatprep.subr.mxu0 0.0
    %1118 = vmatpush1.msra.mxu0 %v1112
    %1119 = vmatprep.subr.mxu0 0.0
    %1120 = vmatpush1.msra.mxu0 0.0
    %1121 = vmatprep.subr.mxu0 0.0
    %1122 = vmatpush1.msra.mxu0 0.0
    %1123 = vmatprep.subr.mxu0 0.0
    %1124 = vmatpush1.msra.mxu0 0.0
    %1125 = vmatprep.subr.mxu0 0.0
    %1126 = vmatpush1.msra.mxu0 0.0
    %1127 = vmatprep.subr.mxu0 0.0
    %1128 = vmatpush1.msra.mxu0 0.0
    %1129 = vmatprep.subr.mxu0 0.0
    %1130 = vmatpush1.msra.mxu0 0.0
    %1131 = vmatprep.subr.mxu0 0.0
    %1132 = vmatpush1.msra.mxu0 0.0
    %1133 = vmatprep.subr.mxu0 0.0
    %1134 = vmatpush1.msra.mxu0 0.0
    %1135 = vmatprep.subr.mxu0 0.0
    %1136 = vmatpush1.msra.mxu0 0.0
    %1137 = vmatprep.subr.mxu0 0.0
    %1138 = vmatpush1.msra.mxu0 0.0
    %1139 = vmatprep.subr.mxu0 0.0
    %1140 = vmatpush1.msra.mxu0 0.0
    %1141 = vmatprep.subr.mxu0 0.0
    %1142 = vmatpush1.msra.mxu0 0.0
    %1143 = vmatprep.subr.mxu0 0.0
    %1144 = vmatpush1.msra.mxu0 0.0
    %1145 = vmatprep.subr.mxu0 0.0
    %1146 = vmatpush1.msra.mxu0 0.0
    %1147 = vmatprep.subr.mxu0 0.0
    %1148 = vmatpush1.msra.mxu0 0.0
    %1149 = vmatprep.subr.mxu0 0.0
    %1150 = vmatpush1.msra.mxu0 0.0
    %1151 = vmatprep.subr.mxu0 0.0
    %1152 = vmatpush1.msra.mxu0 0.0
    %1153 = vmatprep.subr.mxu0 0.0
    %1154 = vmatpush1.msra.mxu0 0.0
    %1155 = vmatprep.subr.mxu0 0.0
    %1156 = vmatpush1.msra.mxu0 0.0
    %1157 = vmatprep.subr.mxu0 0.0
    %1158 = vmatpush1.msra.mxu0 0.0
    %1159 = vmatprep.subr.mxu0 0.0
    %1160 = vmatpush1.msra.mxu0 0.0
    %1161 = vmatprep.subr.mxu0 0.0
    %1162 = vmatpush1.msra.mxu0 0.0
    %1163 = vmatprep.subr.mxu0 0.0
    %1164 = vmatpush1.msra.mxu0 0.0
    %1165 = vmatprep.subr.mxu0 0.0
    %1166 = vmatpush1.msra.mxu0 0.0
    %1167 = vmatprep.subr.mxu0 0.0
    %1168 = vmatpush1.msra.mxu0 0.0
    %1169 = vmatprep.subr.mxu0 0.0
    %1170 = vmatpush1.msra.mxu0 0.0
    %1171 = vmatprep.subr.mxu0 0.0
    %1172 = vmatpush1.msra.mxu0 0.0
    %1173 = vmatprep.subr.mxu0 0.0
    %1174 = vmatpush1.msra.mxu0 0.0
    %1175 = vmatprep.subr.mxu0 0.0
    %1176 = vmatpush1.msra.mxu0 0.0
    %1177 = vmatprep.subr.mxu0 0.0
    %1178 = vmatpush1.msra.mxu0 0.0
    %1179 = vmatprep.subr.mxu0 0.0
    %1180 = vmatpush1.msra.mxu0 0.0
    %1181 = vmatprep.mubr.f32.mxu0 0.0
    %1182 = vmatmul.mubr.f32.gmra.mrb[0].mxu0 %v1115
    %v1183 = vpop.f32.mrb[0].mxu0
    %v1184 = vadd.f32 0.0, %v1183
    %v1185 = vpop.f32.mrb[0].mxu0
    %1186 = vdwg.mxu0
    %1187 = vrot.lane.b32.xlu0 %v271, 80
    %v1188 = vpop.permute.xlu0 %1187
    %v1191 = vsel %vm276, %v1110, 0
    %1193 = vmatprep.subr.mxu0 0.0
    %1194 = vmatpush1.msra.mxu0 %v1188
    %1195 = vmatprep.subr.mxu0 0.0
    %1196 = vmatpush1.msra.mxu0 0.0
    %1197 = vmatprep.subr.mxu0 0.0
    %1198 = vmatpush1.msra.mxu0 0.0
    %1199 = vmatprep.subr.mxu0 0.0
    %1200 = vmatpush1.msra.mxu0 0.0
    %1201 = vmatprep.subr.mxu0 0.0
    %1202 = vmatpush1.msra.mxu0 0.0
    %1203 = vmatprep.subr.mxu0 0.0
    %1204 = vmatpush1.msra.mxu0 0.0
    %1205 = vmatprep.subr.mxu0 0.0
    %1206 = vmatpush1.msra.mxu0 0.0
    %1207 = vmatprep.subr.mxu0 0.0
    %1208 = vmatpush1.msra.mxu0 0.0
    %1209 = vmatprep.subr.mxu0 0.0
    %1210 = vmatpush1.msra.mxu0 0.0
    %1211 = vmatprep.subr.mxu0 0.0
    %1212 = vmatpush1.msra.mxu0 0.0
    %1213 = vmatprep.subr.mxu0 0.0
    %1214 = vmatpush1.msra.mxu0 0.0
    %1215 = vmatprep.subr.mxu0 0.0
    %1216 = vmatpush1.msra.mxu0 0.0
    %1217 = vmatprep.subr.mxu0 0.0
    %1218 = vmatpush1.msra.mxu0 0.0
    %1219 = vmatprep.subr.mxu0 0.0
    %1220 = vmatpush1.msra.mxu0 0.0
    %1221 = vmatprep.subr.mxu0 0.0
    %1222 = vmatpush1.msra.mxu0 0.0
    %1223 = vmatprep.subr.mxu0 0.0
    %1224 = vmatpush1.msra.mxu0 0.0
    %1225 = vmatprep.subr.mxu0 0.0
    %1226 = vmatpush1.msra.mxu0 0.0
    %1227 = vmatprep.subr.mxu0 0.0
    %1228 = vmatpush1.msra.mxu0 0.0
    %1229 = vmatprep.subr.mxu0 0.0
    %1230 = vmatpush1.msra.mxu0 0.0
    %1231 = vmatprep.subr.mxu0 0.0
    %1232 = vmatpush1.msra.mxu0 0.0
    %1233 = vmatprep.subr.mxu0 0.0
    %1234 = vmatpush1.msra.mxu0 0.0
    %1235 = vmatprep.subr.mxu0 0.0
    %1236 = vmatpush1.msra.mxu0 0.0
    %1237 = vmatprep.subr.mxu0 0.0
    %1238 = vmatpush1.msra.mxu0 0.0
    %1239 = vmatprep.subr.mxu0 0.0
    %1240 = vmatpush1.msra.mxu0 0.0
    %1241 = vmatprep.subr.mxu0 0.0
    %1242 = vmatpush1.msra.mxu0 0.0
    %1243 = vmatprep.subr.mxu0 0.0
    %1244 = vmatpush1.msra.mxu0 0.0
    %1245 = vmatprep.subr.mxu0 0.0
    %1246 = vmatpush1.msra.mxu0 0.0
    %1247 = vmatprep.subr.mxu0 0.0
    %1248 = vmatpush1.msra.mxu0 0.0
    %1249 = vmatprep.subr.mxu0 0.0
    %1250 = vmatpush1.msra.mxu0 0.0
    %1251 = vmatprep.subr.mxu0 0.0
    %1252 = vmatpush1.msra.mxu0 0.0
    %1253 = vmatprep.subr.mxu0 0.0
    %1254 = vmatpush1.msra.mxu0 0.0
    %1255 = vmatprep.subr.mxu0 0.0
    %1256 = vmatpush1.msra.mxu0 0.0
    %1257 = vmatprep.mubr.f32.mxu0 0.0
    %1258 = vmatmul.mubr.f32.gmra.mrb[0].mxu0 %v1191
    %v1259 = vpop.f32.mrb[0].mxu0
    %v1260 = vadd.f32 0.0, %v1259
    %v1261 = vpop.f32.mrb[0].mxu0
    %1262 = vdwg.mxu0
    %1263 = vrot.lane.b32.xlu0 %v274, 104
    %v1264 = vpop.permute.xlu0 %1263
    %1265 = vrot.lane.b32.xlu0 %v266, 104
    %v1266 = vpop.permute.xlu0 %1265
    %v1267 = vsel %vm276, %v1264, 0
    %v1269 = vsel %vm276, %v1266, 0
    %1271 = vmatprep.subr.mxu0 0.0
    %1272 = vmatpush1.xpose.msra.mxu0 %v1269
    %1273 = vmatprep.subr.mxu0 0.0
    %1274 = vmatpush1.xpose.msra.mxu0 0.0
    %1275 = vmatprep.subr.mxu0 0.0
    %1276 = vmatpush1.xpose.msra.mxu0 0.0
    %1277 = vmatprep.subr.mxu0 0.0
    %1278 = vmatpush1.xpose.msra.mxu0 0.0
    %1279 = vmatprep.subr.mxu0 0.0
    %1280 = vmatpush1.xpose.msra.mxu0 0.0
    %1281 = vmatprep.subr.mxu0 0.0
    %1282 = vmatpush1.xpose.msra.mxu0 0.0
    %1283 = vmatprep.subr.mxu0 0.0
    %1284 = vmatpush1.xpose.msra.mxu0 0.0
    %1285 = vmatprep.subr.mxu0 0.0
    %1286 = vmatpush1.xpose.msra.mxu0 0.0
    %1287 = vmatprep.subr.mxu0 0.0
    %1288 = vmatpush1.xpose.msra.mxu0 0.0
    %1289 = vmatprep.subr.mxu0 0.0
    %1290 = vmatpush1.xpose.msra.mxu0 0.0
    %1291 = vmatprep.subr.mxu0 0.0
    %1292 = vmatpush1.xpose.msra.mxu0 0.0
    %1293 = vmatprep.subr.mxu0 0.0
    %1294 = vmatpush1.xpose.msra.mxu0 0.0
    %1295 = vmatprep.subr.mxu0 0.0
    %1296 = vmatpush1.xpose.msra.mxu0 0.0
    %1297 = vmatprep.subr.mxu0 0.0
    %1298 = vmatpush1.xpose.msra.mxu0 0.0
    %1299 = vmatprep.subr.mxu0 0.0
    %1300 = vmatpush1.xpose.msra.mxu0 0.0
    %1301 = vmatprep.subr.mxu0 0.0
    %1302 = vmatpush1.xpose.msra.mxu0 0.0
    %1303 = vmatprep.subr.mxu0 0.0
    %1304 = vmatpush1.xpose.msra.mxu0 0.0
    %1305 = vmatprep.subr.mxu0 0.0
    %1306 = vmatpush1.xpose.msra.mxu0 0.0
    %1307 = vmatprep.subr.mxu0 0.0
    %1308 = vmatpush1.xpose.msra.mxu0 0.0
    %1309 = vmatprep.subr.mxu0 0.0
    %1310 = vmatpush1.xpose.msra.mxu0 0.0
    %1311 = vmatprep.subr.mxu0 0.0
    %1312 = vmatpush1.xpose.msra.mxu0 0.0
    %1313 = vmatprep.subr.mxu0 0.0
    %1314 = vmatpush1.xpose.msra.mxu0 0.0
    %1315 = vmatprep.subr.mxu0 0.0
    %1316 = vmatpush1.xpose.msra.mxu0 0.0
    %1317 = vmatprep.subr.mxu0 0.0
    %1318 = vmatpush1.xpose.msra.mxu0 0.0
    %1319 = vmatprep.subr.mxu0 0.0
    %1320 = vmatpush1.xpose.msra.mxu0 0.0
    %1321 = vmatprep.subr.mxu0 0.0
    %1322 = vmatpush1.xpose.msra.mxu0 0.0
    %1323 = vmatprep.subr.mxu0 0.0
    %1324 = vmatpush1.xpose.msra.mxu0 0.0
    %1325 = vmatprep.subr.mxu0 0.0
    %1326 = vmatpush1.xpose.msra.mxu0 0.0
    %1327 = vmatprep.subr.mxu0 0.0
    %1328 = vmatpush1.xpose.msra.mxu0 0.0
    %1329 = vmatprep.subr.mxu0 0.0
    %1330 = vmatpush1.xpose.msra.mxu0 0.0
    %1331 = vmatprep.subr.mxu0 0.0
    %1332 = vmatpush1.xpose.msra.mxu0 0.0
    %1333 = vmatprep.subr.mxu0 0.0
    %1334 = vmatpush1.xpose.msra.mxu0 0.0
    %1335 = vmatprep.mubr.f32.mxu0 0.0
    %1336 = vmatmul.mubr.f32.gmra.mrb[0].mxu0 %v1267
    %v1337 = vpop.f32.mrb[0].mxu0
    %v1338 = vadd.f32 0.0, %v1337
    %v1339 = vpop.f32.mrb[0].mxu0
    %1340 = vdwg.mxu0
    %1341 = vrot.lane.b32.xlu0 %v275, 104
    %v1342 = vpop.permute.xlu0 %1341
    %1343 = vrot.lane.b32.xlu0 %v271, 104
    %v1344 = vpop.permute.xlu0 %1343
    %v1345 = vsel %vm276, %v1342, 0
    %v1347 = vsel %vm276, %v1344, 0
    %1349 = vmatprep.subr.mxu0 0.0
    %1350 = vmatpush1.xpose.msra.mxu0 %v1347
    %1351 = vmatprep.subr.mxu0 0.0
    %1352 = vmatpush1.xpose.msra.mxu0 0.0
    %1353 = vmatprep.subr.mxu0 0.0
    %1354 = vmatpush1.xpose.msra.mxu0 0.0
    %1355 = vmatprep.subr.mxu0 0.0
    %1356 = vmatpush1.xpose.msra.mxu0 0.0
    %1357 = vmatprep.subr.mxu0 0.0
    %1358 = vmatpush1.xpose.msra.mxu0 0.0
    %1359 = vmatprep.subr.mxu0 0.0
    %1360 = vmatpush1.xpose.msra.mxu0 0.0
    %1361 = vmatprep.subr.mxu0 0.0
    %1362 = vmatpush1.xpose.msra.mxu0 0.0
    %1363 = vmatprep.subr.mxu0 0.0
    %1364 = vmatpush1.xpose.msra.mxu0 0.0
    %1365 = vmatprep.subr.mxu0 0.0
    %1366 = vmatpush1.xpose.msra.mxu0 0.0
    %1367 = vmatprep.subr.mxu0 0.0
    %1368 = vmatpush1.xpose.msra.mxu0 0.0
    %1369 = vmatprep.subr.mxu0 0.0
    %1370 = vmatpush1.xpose.msra.mxu0 0.0
    %1371 = vmatprep.subr.mxu0 0.0
    %1372 = vmatpush1.xpose.msra.mxu0 0.0
    %1373 = vmatprep.subr.mxu0 0.0
    %1374 = vmatpush1.xpose.msra.mxu0 0.0
    %1375 = vmatprep.subr.mxu0 0.0
    %1376 = vmatpush1.xpose.msra.mxu0 0.0
    %1377 = vmatprep.subr.mxu0 0.0
    %1378 = vmatpush1.xpose.msra.mxu0 0.0
    %1379 = vmatprep.subr.mxu0 0.0
    %1380 = vmatpush1.xpose.msra.mxu0 0.0
    %1381 = vmatprep.subr.mxu0 0.0
    %1382 = vmatpush1.xpose.msra.mxu0 0.0
    %1383 = vmatprep.subr.mxu0 0.0
    %1384 = vmatpush1.xpose.msra.mxu0 0.0
    %1385 = vmatprep.subr.mxu0 0.0
    %1386 = vmatpush1.xpose.msra.mxu0 0.0
    %1387 = vmatprep.subr.mxu0 0.0
    %1388 = vmatpush1.xpose.msra.mxu0 0.0
    %1389 = vmatprep.subr.mxu0 0.0
    %1390 = vmatpush1.xpose.msra.mxu0 0.0
    %1391 = vmatprep.subr.mxu0 0.0
    %1392 = vmatpush1.xpose.msra.mxu0 0.0
    %1393 = vmatprep.subr.mxu0 0.0
    %1394 = vmatpush1.xpose.msra.mxu0 0.0
    %1395 = vmatprep.subr.mxu0 0.0
    %1396 = vmatpush1.xpose.msra.mxu0 0.0
    %1397 = vmatprep.subr.mxu0 0.0
    %1398 = vmatpush1.xpose.msra.mxu0 0.0
    %1399 = vmatprep.subr.mxu0 0.0
    %1400 = vmatpush1.xpose.msra.mxu0 0.0
    %1401 = vmatprep.subr.mxu0 0.0
    %1402 = vmatpush1.xpose.msra.mxu0 0.0
    %1403 = vmatprep.subr.mxu0 0.0
    %1404 = vmatpush1.xpose.msra.mxu0 0.0
    %1405 = vmatprep.subr.mxu0 0.0
    %1406 = vmatpush1.xpose.msra.mxu0 0.0
    %1407 = vmatprep.subr.mxu0 0.0
    %1408 = vmatpush1.xpose.msra.mxu0 0.0
    %1409 = vmatprep.subr.mxu0 0.0
    %1410 = vmatpush1.xpose.msra.mxu0 0.0
    %1411 = vmatprep.subr.mxu0 0.0
    %1412 = vmatpush1.xpose.msra.mxu0 0.0
    %1413 = vmatprep.mubr.f32.mxu0 0.0
    %1414 = vmatmul.mubr.f32.gmra.mrb[0].mxu0 %v1345
    %v1415 = vpop.f32.mrb[0].mxu0
    %v1416 = vadd.f32 0.0, %v1415
    %v1417 = vpop.f32.mrb[0].mxu0
    %1418 = vdwg.mxu0
    %v1419 = vsel %vm276, %v1338, -inf
    %1420 = vmax.xlane.f32.xlu0 %v1419
    %v1421 = vpop.xlane.xlu0 %1420
    %v1422 = vsel %vm276, %v1416, -inf
    %1423 = vmax.xlane.f32.xlu0 %v1422
    %v1424 = vpop.xlane.xlu0 %1423
    %v1425 = vsub.f32 %v1338, %v1421
    %v1426 = vsub.f32 %v1416, %v1424
    %v1427 = vmul.f32 %v1425, 1.442695
    %v1428 = vpow.pop %v1427
    %v1429 = vmul.f32 %v1426, 1.442695
    %v1430 = vpow.pop %v1429
    %v1431 = vsel %vm276, %v1428, 0.0
    %1432 = vadd.xlane.f32.xlu0 %v1431
    %v1433 = vpop.xlane.xlu0 %1432
    %v1434 = vsel %vm276, %v1430, 0.0
    %1435 = vadd.xlane.f32.xlu0 %v1434
    %v1436 = vpop.xlane.xlu0 %1435
    %v1437 = vrcp.pop %v1433
    %v1438 = vmul.f32 %v1428, %v1437
    %v1439 = vrcp.pop %v1436
    %v1440 = vmul.f32 %v1430, %v1439
    %1441 = vrot.lane.b32.xlu0 %v266, 72
    %v1442 = vpop.permute.xlu0 %1441
    %v1445 = vsel %vm276, %v1438, 0
    %1447 = vmatprep.subr.mxu0 0.0
    %1448 = vmatpush1.msra.mxu0 %v1442
    %1449 = vmatprep.subr.mxu0 0.0
    %1450 = vmatpush1.msra.mxu0 0.0
    %1451 = vmatprep.subr.mxu0 0.0
    %1452 = vmatpush1.msra.mxu0 0.0
    %1453 = vmatprep.subr.mxu0 0.0
    %1454 = vmatpush1.msra.mxu0 0.0
    %1455 = vmatprep.subr.mxu0 0.0
    %1456 = vmatpush1.msra.mxu0 0.0
    %1457 = vmatprep.subr.mxu0 0.0
    %1458 = vmatpush1.msra.mxu0 0.0
    %1459 = vmatprep.subr.mxu0 0.0
    %1460 = vmatpush1.msra.mxu0 0.0
    %1461 = vmatprep.subr.mxu0 0.0
    %1462 = vmatpush1.msra.mxu0 0.0
    %1463 = vmatprep.subr.mxu0 0.0
    %1464 = vmatpush1.msra.mxu0 0.0
    %1465 = vmatprep.subr.mxu0 0.0
    %1466 = vmatpush1.msra.mxu0 0.0
    %1467 = vmatprep.subr.mxu0 0.0
    %1468 = vmatpush1.msra.mxu0 0.0
    %1469 = vmatprep.subr.mxu0 0.0
    %1470 = vmatpush1.msra.mxu0 0.0
    %1471 = vmatprep.subr.mxu0 0.0
    %1472 = vmatpush1.msra.mxu0 0.0
    %1473 = vmatprep.subr.mxu0 0.0
    %1474 = vmatpush1.msra.mxu0 0.0
    %1475 = vmatprep.subr.mxu0 0.0
    %1476 = vmatpush1.msra.mxu0 0.0
    %1477 = vmatprep.subr.mxu0 0.0
    %1478 = vmatpush1.msra.mxu0 0.0
    %1479 = vmatprep.subr.mxu0 0.0
    %1480 = vmatpush1.msra.mxu0 0.0
    %1481 = vmatprep.subr.mxu0 0.0
    %1482 = vmatpush1.msra.mxu0 0.0
    %1483 = vmatprep.subr.mxu0 0.0
    %1484 = vmatpush1.msra.mxu0 0.0
    %1485 = vmatprep.subr.mxu0 0.0
    %1486 = vmatpush1.msra.mxu0 0.0
    %1487 = vmatprep.subr.mxu0 0.0
    %1488 = vmatpush1.msra.mxu0 0.0
    %1489 = vmatprep.subr.mxu0 0.0
    %1490 = vmatpush1.msra.mxu0 0.0
    %1491 = vmatprep.subr.mxu0 0.0
    %1492 = vmatpush1.msra.mxu0 0.0
    %1493 = vmatprep.subr.mxu0 0.0
    %1494 = vmatpush1.msra.mxu0 0.0
    %1495 = vmatprep.subr.mxu0 0.0
    %1496 = vmatpush1.msra.mxu0 0.0
    %1497 = vmatprep.subr.mxu0 0.0
    %1498 = vmatpush1.msra.mxu0 0.0
    %1499 = vmatprep.subr.mxu0 0.0
    %1500 = vmatpush1.msra.mxu0 0.0
    %1501 = vmatprep.subr.mxu0 0.0
    %1502 = vmatpush1.msra.mxu0 0.0
    %1503 = vmatprep.subr.mxu0 0.0
    %1504 = vmatpush1.msra.mxu0 0.0
    %1505 = vmatprep.subr.mxu0 0.0
    %1506 = vmatpush1.msra.mxu0 0.0
    %1507 = vmatprep.subr.mxu0 0.0
    %1508 = vmatpush1.msra.mxu0 0.0
    %1509 = vmatprep.subr.mxu0 0.0
    %1510 = vmatpush1.msra.mxu0 0.0
    %1511 = vmatprep.mubr.f32.mxu0 0.0
    %1512 = vmatmul.mubr.f32.gmra.mrb[0].mxu0 %v1445
    %v1513 = vpop.f32.mrb[0].mxu0
    %v1514 = vadd.f32 0.0, %v1513
    %v1515 = vpop.f32.mrb[0].mxu0
    %1516 = vdwg.mxu0
    %1517 = vrot.lane.b32.xlu0 %v271, 72
    %v1518 = vpop.permute.xlu0 %1517
    %v1521 = vsel %vm276, %v1440, 0
    %1523 = vmatprep.subr.mxu0 0.0
    %1524 = vmatpush1.msra.mxu0 %v1518
    %1525 = vmatprep.subr.mxu0 0.0
    %1526 = vmatpush1.msra.mxu0 0.0
    %1527 = vmatprep.subr.mxu0 0.0
    %1528 = vmatpush1.msra.mxu0 0.0
    %1529 = vmatprep.subr.mxu0 0.0
    %1530 = vmatpush1.msra.mxu0 0.0
    %1531 = vmatprep.subr.mxu0 0.0
    %1532 = vmatpush1.msra.mxu0 0.0
    %1533 = vmatprep.subr.mxu0 0.0
    %1534 = vmatpush1.msra.mxu0 0.0
    %1535 = vmatprep.subr.mxu0 0.0
    %1536 = vmatpush1.msra.mxu0 0.0
    %1537 = vmatprep.subr.mxu0 0.0
    %1538 = vmatpush1.msra.mxu0 0.0
    %1539 = vmatprep.subr.mxu0 0.0
    %1540 = vmatpush1.msra.mxu0 0.0
    %1541 = vmatprep.subr.mxu0 0.0
    %1542 = vmatpush1.msra.mxu0 0.0
    %1543 = vmatprep.subr.mxu0 0.0
    %1544 = vmatpush1.msra.mxu0 0.0
    %1545 = vmatprep.subr.mxu0 0.0
    %1546 = vmatpush1.msra.mxu0 0.0
    %1547 = vmatprep.subr.mxu0 0.0
    %1548 = vmatpush1.msra.mxu0 0.0
    %1549 = vmatprep.subr.mxu0 0.0
    %1550 = vmatpush1.msra.mxu0 0.0
    %1551 = vmatprep.subr.mxu0 0.0
    %1552 = vmatpush1.msra.mxu0 0.0
    %1553 = vmatprep.subr.mxu0 0.0
    %1554 = vmatpush1.msra.mxu0 0.0
    %1555 = vmatprep.subr.mxu0 0.0
    %1556 = vmatpush1.msra.mxu0 0.0
    %1557 = vmatprep.subr.mxu0 0.0
    %1558 = vmatpush1.msra.mxu0 0.0
    %1559 = vmatprep.subr.mxu0 0.0
    %1560 = vmatpush1.msra.mxu0 0.0
    %1561 = vmatprep.subr.mxu0 0.0
    %1562 = vmatpush1.msra.mxu0 0.0
    %1563 = vmatprep.subr.mxu0 0.0
    %1564 = vmatpush1.msra.mxu0 0.0
    %1565 = vmatprep.subr.mxu0 0.0
    %1566 = vmatpush1.msra.mxu0 0.0
    %1567 = vmatprep.subr.mxu0 0.0
    %1568 = vmatpush1.msra.mxu0 0.0
    %1569 = vmatprep.subr.mxu0 0.0
    %1570 = vmatpush1.msra.mxu0 0.0
    %1571 = vmatprep.subr.mxu0 0.0
    %1572 = vmatpush1.msra.mxu0 0.0
    %1573 = vmatprep.subr.mxu0 0.0
    %1574 = vmatpush1.msra.mxu0 0.0
    %1575 = vmatprep.subr.mxu0 0.0
    %1576 = vmatpush1.msra.mxu0 0.0
    %1577 = vmatprep.subr.mxu0 0.0
    %1578 = vmatpush1.msra.mxu0 0.0
    %1579 = vmatprep.subr.mxu0 0.0
    %1580 = vmatpush1.msra.mxu0 0.0
    %1581 = vmatprep.subr.mxu0 0.0
    %1582 = vmatpush1.msra.mxu0 0.0
    %1583 = vmatprep.subr.mxu0 0.0
    %1584 = vmatpush1.msra.mxu0 0.0
    %1585 = vmatprep.subr.mxu0 0.0
    %1586 = vmatpush1.msra.mxu0 0.0
    %1587 = vmatprep.mubr.f32.mxu0 0.0
    %1588 = vmatmul.mubr.f32.gmra.mrb[0].mxu0 %v1521
    %v1589 = vpop.f32.mrb[0].mxu0
    %v1590 = vadd.f32 0.0, %v1589
    %v1591 = vpop.f32.mrb[0].mxu0
    %1592 = vdwg.mxu0
    %1595 = vrot.lane.b32.xlu0 %v854, 8
    %v1596 = vpop.permute.xlu0 %1595
    %1597 = vrot.lane.b32.xlu0 %v930, 8
    %v1598 = vpop.permute.xlu0 %1597
    %1603 = vrot.lane.b32.xlu0 %v1184, 16
    %v1604 = vpop.permute.xlu0 %1603
    %1605 = vrot.lane.b32.xlu0 %v1260, 16
    %v1606 = vpop.permute.xlu0 %1605
    %1611 = vrot.lane.b32.xlu0 %v1514, 24
    %v1612 = vpop.permute.xlu0 %1611
    %1613 = vrot.lane.b32.xlu0 %v1590, 24
    %v1614 = vpop.permute.xlu0 %1613
    %v1617 = vsel %vm276, %v524, %v1596
    %v1618 = vsel %vm276, %v600, %v1598
    %vm1619 = vcmask 130048
    %v1620 = vsel %vm1619, %v1617, %v1604
    %v1621 = vsel %vm1619, %v1618, %v1606
    %vm1622 = vcmask 195584
    %v1623 = vsel %vm1622, %v1620, %v1612
    %v1624 = vsel %vm1622, %v1621, %v1614
    %v1625 = vadd.f32 %v1623, %v85
    %v1626 = vadd.f32 %v1624, %v86
    %v1627 = vsel %vm100, %v1625, 0.0
    %1628 = vadd.xlane.f32.xlu0 %v1627
    %v1629 = vpop.xlane.xlu0 %1628
    %v1630 = vsel %vm100, %v1626, 0.0
    %1631 = vadd.xlane.f32.xlu0 %v1630
    %v1632 = vpop.xlane.xlu0 %1631
    %v1633 = vrcp.pop 32.0
    %v1634 = vmul.f32 %v1629, %v1633
    %v1635 = vmul.f32 %v1632, %v1633
    %v1636 = vsub.f32 %v1625, %v1634
    %v1637 = vsub.f32 %v1626, %v1635
    %v1638 = vmul.f32 %v1636, %v1636
    %v1639 = vmul.f32 %v1637, %v1637
    %v1640 = vsel %vm100, %v1638, 0.0
    %1641 = vadd.xlane.f32.xlu0 %v1640
    %v1642 = vpop.xlane.xlu0 %1641
    %v1643 = vsel %vm100, %v1639, 0.0
    %1644 = vadd.xlane.f32.xlu0 %v1643
    %v1645 = vpop.xlane.xlu0 %1644
    %v1646 = vmul.f32 %v1642, %v1633
    %v1647 = vmul.f32 %v1645, %v1633
    %v1648 = vadd.f32 %v1646, 1e-05
    %v1649 = vadd.f32 %v1647, 1e-05
    %v1650 = vrsqrt.pop %v1648
    %v1651 = vrsqrt.pop %v1649
    %v1652 = vmul.f32 %v1636, %v1650
    %v1653 = vmul.f32 %v1637, %v1651
    %v1654 = vld [vmem:[%s6] sm:$0x1]
    %v1656 = vlaneseq
    %v1657 = vshrl.u32 %v1656, 7
    %v1658 = vsub.s32 0, %v1657
    %v1659 = vrot.slane %v1654, %v1658
    %v1661 = vmul.f32 %v1652, %v1659
    %v1662 = vmul.f32 %v1653, %v1659
    %v1663 = vld [vmem:[%s7] sm:$0x1]
    %v1665 = vlaneseq
    %v1666 = vshrl.u32 %v1665, 7
    %v1667 = vsub.s32 0, %v1666
    %v1668 = vrot.slane %v1663, %v1667
    %v1670 = vadd.f32 %v1661, %v1668
    %v1671 = vadd.f32 %v1662, %v1668
    %1672 = vst.msk [vmem:[#allocation10] sm:$0xff] %vm100, %v1670
    %1673 = vst.msk [vmem:[#allocation10 + $0x8] sm:$0xff] %vm100, %v1671
    // Predicated region
    $region50: #{tpu_custom_call.1} parent=1 // pred_check
      _
    $region51: #{tpu_custom_call.1} parent=1 // pred_check_branch
      %1675 = sbr.rel (0) target = $region53
    $region52: #{tpu_custom_call.1} parent=1 // pred_region
      %s1677 = ssub.s32 256, 256
      %1678 = vsyncadd [#allocation4], %s1677
      %s1679 = sshll.u32 [#allocation10], 4
      %s1680 = int_to_ptr.vmem [resolvable:$true] %s1679
      %1685 = dma.vmem_to_hbm [thread:$0]  %s1680, 256, %s8, [#allocation4], 128, 128, 8
    $region53: #{tpu_custom_call.1} parent=1 // pred_fallthru
      _
    // Predicated region
    $region54: #{tpu_custom_call.1} parent=1 // pred_check
      _
    $region55: #{tpu_custom_call.1} parent=1 // pred_check_branch
      %1687 = sbr.rel (0) target = $region57
    $region56: #{tpu_custom_call.1} parent=1 // pred_region
      %1688 = dma.done [#allocation4], 256
    $region57: #{tpu_custom_call.1} parent=1 // pred_fallthru
      _
    %1689 = vsyncpa [#allocation3], 1
    %1690 = vsyncpa [#allocation6], 1
    %1691 = vsyncpa [#allocation9], 1
    %1692 = vsyncpa [#allocation4], 1

</llo_original>
